<compile_context>
chip_gen: v7x
topology: tpu7x:2x2x1
jax: 0.10.0
libtpu: 0.0.40
codegen_flags: <defaults>
</compile_context>

<pallas_src>
import numpy as np
import jax
import jax.numpy as jnp
from jax.experimental import pallas as pl
from jax.experimental.pallas import tpu as pltpu


# ----------------------------------------------------------------------------- kernel

def fused_cnn_kernel(p1_ref, mask_ref, w1_ref, b1_ref, w2_ref, b2_ref,
                     wf1_ref, bf1_ref, wf2_ref, bf2_ref, o_ref):
    """Whole forward pass for ONE image (grid iterates/shards over the batch).

    p1_ref : (1, 784, 9) bf16  conv1 im2col patches; rows ordered
             ((p,q) pool sub-pos, (py,px) parity of pooled coords, a, c)
             i.e. row = (p*2+q)*196 + (py*2+px)*49 + a*7 + c,  a,c in [0,7)
    mask_ref: (3, 3, 49, 32) f32  0/1 boundary masks for conv2's in-VMEM im2col
    w1_ref : (9, 32) bf16,  b1_ref : (1, 32)  f32
    w2_ref : (288, 64) bf16, b2_ref : (1, 64) f32
    wf1_ref: (3136, 128) bf16 (rows pre-permuted to (h,w,c) flatten order)
    wf2_ref: (128, NC) bf16
    o_ref  : (1, 1, NC) f32
    """
    f32 = jnp.float32
    bf16 = jnp.bfloat16

    # ---- conv1 (3x3, 1->32, SAME) + bias + ReLU + 2x2 maxpool ---------------
    # One MXU call covers all four pool sub-positions; pool = max over the
    # four 196-row blocks (relu-then-max == torch's relu -> maxpool).
    y1 = jnp.dot(p1_ref[0], w1_ref[...], preferred_element_type=f32) + b1_ref[...]
    y1 = jnp.maximum(y1, 0.0)                                      # (784, 32)
    h1 = jnp.maximum(jnp.maximum(y1[0:196], y1[196:392]),
                     jnp.maximum(y1[392:588], y1[588:784]))        # (196, 32)
    # h1 row = k*49 + a*7 + c, k = (row parity)*2 + (col parity) of the pooled
    # 14x14 output coordinate (2a+py, 2c+px).

    # ---- in-VMEM im2col for conv2 (no HBM round trip) -----------------------
    # conv2 output pixel (2a+p+0.., ...) needs h1[2a+p+ky-1, 2c+q+kx-1] or 0.
    # With ty = p+ky, tx = q+kx the source lives in parity block
    # k = ((ty+1)%2)*2 + (tx+1)%2 at row offset da*7 + dc (da=(ty-1)//2, ...):
    # a static 49-row slice of zero-extended h1, times a 0/1 boundary mask.
    zeros8 = jnp.zeros((8, 32), f32)
    h1p = jnp.concatenate([zeros8, h1, zeros8], axis=0)            # (212, 32)
    taps = {}
    for ty in range(4):
        py, da = (ty + 1) % 2, (ty - 1) // 2
        for tx in range(4):
            px, dc = (tx + 1) % 2, (tx - 1) // 2
            base = 8 + (py * 2 + px) * 49 + da * 7 + dc
            taps[(ty, tx)] = (h1p[base:base + 49, :]
                              * mask_ref[da + 1, dc + 1])          # (49, 32)
    slabs = []
    for pp in range(2):                 # conv2 pool-row sub-position
        for qq in range(2):             # conv2 pool-col sub-position
            cols = [taps[(pp + ky, qq + kx)]
                    for ky in range(3) for kx in range(3)]
            slabs.append(jnp.concatenate(cols, axis=1))            # (49, 288)
    slab2 = jnp.concatenate(slabs, axis=0).astype(bf16)            # (196, 288)

    # ---- conv2 (3x3, 32->64) + bias + ReLU + 2x2 maxpool --------------------
    y2 = jnp.dot(slab2, w2_ref[...], preferred_element_type=f32) + b2_ref[...]
    y2 = jnp.maximum(y2, 0.0)                                      # (196, 64)
    h2 = jnp.maximum(jnp.maximum(y2[0:49], y2[49:98]),
                     jnp.maximum(y2[98:147], y2[147:196]))         # (49, 64)

    # ---- flatten + fc1 + ReLU + dropout(identity at eval) + fc2 -------------
    # Flatten (h,w,c) into the lane dim via row-slices + lane-concat; the
    # torch (c,h,w) flatten order is already baked into wf1's row permutation.
    flat = jnp.concatenate([h2[r:r + 1, :] for r in range(49)], axis=1)  # (1,3136)
    h3 = jnp.dot(flat.astype(bf16), wf1_ref[...],
                 preferred_element_type=f32) + bf1_ref[...]
    h3 = jnp.maximum(h3, 0.0)
    # TODO(synk): training-mode dropout (p=0.3 random mask + 1/(1-p) scale) not implemented.
    out = jnp.dot(h3.astype(bf16), wf2_ref[...],
                  preferred_element_type=f32) + bf2_ref[...]
    o_ref[0] = out.astype(o_ref.dtype)


# ----------------------------------------------------------------------------- wrappers

def prepare_params(params):
    """Host-side, one-time weight preparation (bf16 cast, flatten-permutation,
    im2col boundary-mask table).  Pure data movement, outside the hot path."""
    bf16, f32 = jnp.bfloat16, jnp.float32

    # 0/1 masks for conv2's in-kernel im2col: masks[da+1, dc+1][a*7+c] = 1 iff
    # (a+da, c+dc) is a valid 7x7 coordinate (otherwise the tap reads padding).
    ar = np.arange(7)
    valid = {d: ((ar + d >= 0) & (ar + d <= 6)).astype(np.float32)
             for d in (-1, 0, 1)}
    masks = np.zeros((3, 3, 49, 32), np.float32)
    for da in (-1, 0, 1):
        for dc in (-1, 0, 1):
            m = np.outer(valid[da], valid[dc]).reshape(49, 1)
            masks[da + 1, dc + 1] = np.broadcast_to(m, (49, 32))

    # fc1 rows permuted from torch's (c,h,w) flatten order to our (h,w,c) order.
    wf1p = (params["wf1"].reshape(64, 7, 7, 128)
            .transpose(1, 2, 0, 3).reshape(64 * 49, 128))

    return {
        "masks": jnp.asarray(masks),
        "w1": params["w1"].reshape(9, 32).astype(bf16),          # (ky,kx,ci=1) rows
        "b1": params["b1"].reshape(1, 32).astype(f32),
        "w2": params["w2"].reshape(9 * 32, 64).astype(bf16),     # (ky,kx,ci) rows
        "b2": params["b2"].reshape(1, 64).astype(f32),
        "wf1": wf1p.astype(bf16),
        "bf1": params["bf1"].reshape(1, 128).astype(f32),
        "wf2": params["wf2"].astype(bf16),
        "bf2": params["bf2"].reshape(1, -1).astype(f32),
    }


@jax.jit
def handwritten_math_cnn_forward(x_nchw, kp):
    """Pallas forward pass.  x_nchw: (B, 1, 28, 28) f32;  kp: prepare_params()."""
    B = x_nchw.shape[0]
    NC = kp["wf2"].shape[-1]

    # conv1 im2col (tiny, Cin=1): 9 unit-stride shifted copies of the padded
    # image, rows reordered to ((p,q),(py,px),a,c) so the kernel's pool-max and
    # conv2 feed need only contiguous row slices.
    x2d = x_nchw[:, 0, :, :]                                      # (B, 28, 28)
    xp = jnp.pad(x2d, ((0, 0), (1, 1), (1, 1)))                   # (B, 30, 30)
    pat = jnp.stack([xp[:, ky:ky + 28, kx:kx + 28]
                     for ky in range(3) for kx in range(3)], axis=-1)  # (B,28,28,9)
    pat = pat.reshape(B, 7, 2, 2, 7, 2, 2, 9)      # oy -> (a, py, p), ox -> (c, px, q)
    pat = pat.transpose(0, 3, 6, 2, 5, 1, 4, 7)    # (B, p, q, py, px, a, c, 9)
    p1 = pat.reshape(B, 784, 9).astype(jnp.bfloat16)

    out = pl.pallas_call(
        fused_cnn_kernel,
        out_shape=jax.ShapeDtypeStruct((B, 1, NC), jnp.float32),
        grid=(B,),
        in_specs=[
            pl.BlockSpec((1, 784, 9), lambda b: (b, 0, 0)),       # per-image patches
            pl.BlockSpec((3, 3, 49, 32), lambda b: (0, 0, 0, 0)), # masks (shared)
            pl.BlockSpec((9, 32), lambda b: (0, 0)),
            pl.BlockSpec((1, 32), lambda b: (0, 0)),
            pl.BlockSpec((288, 64), lambda b: (0, 0)),
            pl.BlockSpec((1, 64), lambda b: (0, 0)),
            pl.BlockSpec((3136, 128), lambda b: (0, 0)),
            pl.BlockSpec((1, 128), lambda b: (0, 0)),
            pl.BlockSpec((128, NC), lambda b: (0, 0)),
            pl.BlockSpec((1, NC), lambda b: (0, 0)),
        ],
        out_specs=pl.BlockSpec((1, 1, NC), lambda b: (b, 0, 0)),
        compiler_params=pltpu.CompilerParams(
            dimension_semantics=("parallel",)),                   # 2 TCs on v7x
    )(p1, kp["masks"], kp["w1"], kp["b1"], kp["w2"], kp["b2"],
      kp["wf1"], kp["bf1"], kp["wf2"], kp["bf2"])
    return out.reshape(B, NC)


# ----------------------------------------------------------------------------- reference

def reference_forward(x_nchw, params):
    """Pure-JAX reference (eval-mode forward) for verification."""
    x = jnp.transpose(x_nchw, (0, 2, 3, 1))

    def conv(x, w, b):
        y = jax.lax.conv_general_dilated(
            x, w, window_strides=(1, 1), padding="SAME",
            dimension_numbers=("NHWC", "HWIO", "NHWC"))
        return jax.nn.relu(y + b)

    def pool(x):
        return jax.lax.reduce_window(x, -jnp.inf, jax.lax.max,
                                     (1, 2, 2, 1), (1, 2, 2, 1), "VALID")

    h = pool(conv(x, params["w1"], params["b1"]))
    h = pool(conv(h, params["w2"], params["b2"]))
    h = jnp.transpose(h, (0, 3, 1, 2)).reshape(x.shape[0], -1)    # torch (C,H,W) flatten
    h = jax.nn.relu(h @ params["wf1"] + params["bf1"])
    return h @ params["wf2"] + params["bf2"]


# ----------------------------------------------------------------------------- main

def init_params(key, num_classes):
    ks = jax.random.split(key, 8)
    s = 0.05
    # Conv weights stored HWIO (3,3,Cin,Cout); equivalent to torch's (Cout,Cin,3,3)
    # via transpose — weights are synthetic, so layout is ours to choose.
    return {
        "w1": jax.random.normal(ks[0], (3, 3, 1, 32), jnp.float32) * s,
        "b1": jax.random.normal(ks[1], (32,), jnp.float32) * s,
        "w2": jax.random.normal(ks[2], (3, 3, 32, 64), jnp.float32) * s,
        "b2": jax.random.normal(ks[3], (64,), jnp.float32) * s,
        # fc1 rows index the torch (c, h, w) flatten order, matching x.view().
        "wf1": jax.random.normal(ks[4], (64 * 7 * 7, 128), jnp.float32) * s,
        "bf1": jax.random.normal(ks[5], (128,), jnp.float32) * s,
        "wf2": jax.random.normal(ks[6], (128, num_classes), jnp.float32) * s,
        "bf2": jax.random.normal(ks[7], (num_classes,), jnp.float32) * s,
    }


if __name__ == "__main__":
    num_classes = 16
    batch = 2  # spatial size must be 28x28 (fc1 expects 64*7*7 features)

    key = jax.random.PRNGKey(0)
    k_x, k_p = jax.random.split(key)
    x = jax.random.normal(k_x, (batch, 1, 28, 28), jnp.float32)
    params = init_params(k_p, num_classes)
    kparams = prepare_params(params)          # one-time host-side weight prep

    out = handwritten_math_cnn_forward(x, kparams)
    out = jax.block_until_ready(out)
    assert out.shape == (batch, num_classes), out.shape

    ref = jax.block_until_ready(reference_forward(x, params))
    assert jnp.allclose(out, ref, rtol=2e-2, atol=2e-2), (
        f"max abs diff {jnp.max(jnp.abs(out - ref))}")

    print("KERNEL_OK")
</pallas_src>

<mosaic_0001>
module attributes {stable_mosaic.version = 11 : i64} {
  func.func @fused_cnn_kernel(%arg0: i32, %arg1: memref<1x784x9xbf16, #tpu.memory_space<vmem>>, %arg2: memref<3x3x49x32xf32, #tpu.memory_space<vmem>>, %arg3: memref<9x32xbf16, #tpu.memory_space<vmem>>, %arg4: memref<1x32xf32, #tpu.memory_space<vmem>>, %arg5: memref<288x64xbf16, #tpu.memory_space<vmem>>, %arg6: memref<1x64xf32, #tpu.memory_space<vmem>>, %arg7: memref<3136x128xbf16, #tpu.memory_space<vmem>>, %arg8: memref<1x128xf32, #tpu.memory_space<vmem>>, %arg9: memref<128x16xbf16, #tpu.memory_space<vmem>>, %arg10: memref<1x16xf32, #tpu.memory_space<vmem>>, %arg11: memref<1x1x16xf32, #tpu.memory_space<vmem>>) attributes {dimension_semantics = [#tpu.dimension_semantics<parallel>], iteration_bounds = array<i64: 2>, scalar_prefetch = 0 : i64, scratch_operands = 0 : i64, tpu.core_type = #tpu.core_type<tc>, window_params = [{transform_indices = @transform_0, window_bounds = array<i64: 1, 784, 9>}, {pipeline_mode = #tpu.pipeline_mode<synchronous>, transform_indices = @transform_1, window_bounds = array<i64: 3, 3, 49, 32>}, {pipeline_mode = #tpu.pipeline_mode<synchronous>, transform_indices = @transform_2, window_bounds = array<i64: 9, 32>}, {pipeline_mode = #tpu.pipeline_mode<synchronous>, transform_indices = @transform_3, window_bounds = array<i64: 1, 32>}, {pipeline_mode = #tpu.pipeline_mode<synchronous>, transform_indices = @transform_4, window_bounds = array<i64: 288, 64>}, {pipeline_mode = #tpu.pipeline_mode<synchronous>, transform_indices = @transform_5, window_bounds = array<i64: 1, 64>}, {pipeline_mode = #tpu.pipeline_mode<synchronous>, transform_indices = @transform_6, window_bounds = array<i64: 3136, 128>}, {pipeline_mode = #tpu.pipeline_mode<synchronous>, transform_indices = @transform_7, window_bounds = array<i64: 1, 128>}, {pipeline_mode = #tpu.pipeline_mode<synchronous>, transform_indices = @transform_8, window_bounds = array<i64: 128, 16>}, {pipeline_mode = #tpu.pipeline_mode<synchronous>, transform_indices = @transform_9, window_bounds = array<i64: 1, 16>}, {transform_indices = @transform_10, window_bounds = array<i64: 1, 1, 16>}]} {
    %c0 = arith.constant 0 : index
    %c0_0 = arith.constant 0 : index
    %c0_1 = arith.constant 0 : index
    %0 = vector.load %arg1[%c0, %c0_0, %c0_1] : memref<1x784x9xbf16, #tpu.memory_space<vmem>>, vector<1x784x9xbf16>
    %1 = vector.shape_cast %0 : vector<1x784x9xbf16> to vector<784x9xbf16>
    %c0_2 = arith.constant 0 : index
    %c0_3 = arith.constant 0 : index
    %2 = vector.load %arg3[%c0_2, %c0_3] : memref<9x32xbf16, #tpu.memory_space<vmem>>, vector<9x32xbf16>
    %cst = arith.constant dense<0.000000e+00> : vector<784x32xf32>
    %3 = tpu.matmul %1, %2, %cst {dimension_numbers = #tpu.dot_dimension_numbers<[1], [0], [0], [1], [0, 0, 1, 1], [], []>} : vector<784x9xbf16>, vector<9x32xbf16>, vector<784x32xf32> -> vector<784x32xf32>
    %c0_4 = arith.constant 0 : index
    %c0_5 = arith.constant 0 : index
    %4 = vector.load %arg4[%c0_4, %c0_5] : memref<1x32xf32, #tpu.memory_space<vmem>>, vector<1x32xf32>
    %5 = vector.broadcast %4 : vector<1x32xf32> to vector<784x32xf32>
    %6 = arith.addf %3, %5 : vector<784x32xf32>
    %cst_6 = arith.constant 0.000000e+00 : f32
    %7 = vector.broadcast %cst_6 : f32 to vector<784x32xf32>
    %8 = arith.maximumf %6, %7 : vector<784x32xf32>
    %9 = vector.extract_strided_slice %8 {offsets = [0, 0], sizes = [196, 32], strides = [1, 1]} : vector<784x32xf32> to vector<196x32xf32>
    %10 = vector.extract_strided_slice %8 {offsets = [196, 0], sizes = [196, 32], strides = [1, 1]} : vector<784x32xf32> to vector<196x32xf32>
    %11 = arith.maximumf %9, %10 : vector<196x32xf32>
    %12 = vector.extract_strided_slice %8 {offsets = [392, 0], sizes = [196, 32], strides = [1, 1]} : vector<784x32xf32> to vector<196x32xf32>
    %13 = vector.extract_strided_slice %8 {offsets = [588, 0], sizes = [196, 32], strides = [1, 1]} : vector<784x32xf32> to vector<196x32xf32>
    %14 = arith.maximumf %12, %13 : vector<196x32xf32>
    %15 = arith.maximumf %11, %14 : vector<196x32xf32>
    %cst_7 = arith.constant 0.000000e+00 : f32
    %16 = vector.broadcast %cst_7 : f32 to vector<8x32xf32>
    %17 = tpu.concatenate %16, %15, %16 in 0 : vector<8x32xf32>, vector<196x32xf32>, vector<8x32xf32> -> vector<212x32xf32>
    %18 = vector.extract_strided_slice %17 {offsets = [147, 0], sizes = [49, 32], strides = [1, 1]} : vector<212x32xf32> to vector<49x32xf32>
    %c0_8 = arith.constant 0 : index
    %c0_9 = arith.constant 0 : index
    %c0_10 = arith.constant 0 : index
    %c0_11 = arith.constant 0 : index
    %19 = vector.load %arg2[%c0_8, %c0_9, %c0_10, %c0_11] : memref<3x3x49x32xf32, #tpu.memory_space<vmem>>, vector<1x1x49x32xf32>
    %20 = vector.shape_cast %19 : vector<1x1x49x32xf32> to vector<49x32xf32>
    %21 = arith.mulf %18, %20 : vector<49x32xf32>
    %22 = vector.extract_strided_slice %17 {offsets = [99, 0], sizes = [49, 32], strides = [1, 1]} : vector<212x32xf32> to vector<49x32xf32>
    %c0_12 = arith.constant 0 : index
    %c1 = arith.constant 1 : index
    %c0_13 = arith.constant 0 : index
    %c0_14 = arith.constant 0 : index
    %23 = vector.load %arg2[%c0_12, %c1, %c0_13, %c0_14] : memref<3x3x49x32xf32, #tpu.memory_space<vmem>>, vector<1x1x49x32xf32>
    %24 = vector.shape_cast %23 : vector<1x1x49x32xf32> to vector<49x32xf32>
    %25 = arith.mulf %22, %24 : vector<49x32xf32>
    %26 = vector.extract_strided_slice %17 {offsets = [148, 0], sizes = [49, 32], strides = [1, 1]} : vector<212x32xf32> to vector<49x32xf32>
    %c0_15 = arith.constant 0 : index
    %c1_16 = arith.constant 1 : index
    %c0_17 = arith.constant 0 : index
    %c0_18 = arith.constant 0 : index
    %27 = vector.load %arg2[%c0_15, %c1_16, %c0_17, %c0_18] : memref<3x3x49x32xf32, #tpu.memory_space<vmem>>, vector<1x1x49x32xf32>
    %28 = vector.shape_cast %27 : vector<1x1x49x32xf32> to vector<49x32xf32>
    %29 = arith.mulf %26, %28 : vector<49x32xf32>
    %30 = vector.extract_strided_slice %17 {offsets = [100, 0], sizes = [49, 32], strides = [1, 1]} : vector<212x32xf32> to vector<49x32xf32>
    %c0_19 = arith.constant 0 : index
    %c2 = arith.constant 2 : index
    %c0_20 = arith.constant 0 : index
    %c0_21 = arith.constant 0 : index
    %31 = vector.load %arg2[%c0_19, %c2, %c0_20, %c0_21] : memref<3x3x49x32xf32, #tpu.memory_space<vmem>>, vector<1x1x49x32xf32>
    %32 = vector.shape_cast %31 : vector<1x1x49x32xf32> to vector<49x32xf32>
    %33 = arith.mulf %30, %32 : vector<49x32xf32>
    %34 = vector.extract_strided_slice %17 {offsets = [56, 0], sizes = [49, 32], strides = [1, 1]} : vector<212x32xf32> to vector<49x32xf32>
    %c1_22 = arith.constant 1 : index
    %c0_23 = arith.constant 0 : index
    %c0_24 = arith.constant 0 : index
    %c0_25 = arith.constant 0 : index
    %35 = vector.load %arg2[%c1_22, %c0_23, %c0_24, %c0_25] : memref<3x3x49x32xf32, #tpu.memory_space<vmem>>, vector<1x1x49x32xf32>
    %36 = vector.shape_cast %35 : vector<1x1x49x32xf32> to vector<49x32xf32>
    %37 = arith.mulf %34, %36 : vector<49x32xf32>
    %38 = vector.extract_strided_slice %17 {offsets = [8, 0], sizes = [49, 32], strides = [1, 1]} : vector<212x32xf32> to vector<49x32xf32>
    %c1_26 = arith.constant 1 : index
    %c1_27 = arith.constant 1 : index
    %c0_28 = arith.constant 0 : index
    %c0_29 = arith.constant 0 : index
    %39 = vector.load %arg2[%c1_26, %c1_27, %c0_28, %c0_29] : memref<3x3x49x32xf32, #tpu.memory_space<vmem>>, vector<1x1x49x32xf32>
    %40 = vector.shape_cast %39 : vector<1x1x49x32xf32> to vector<49x32xf32>
    %41 = arith.mulf %38, %40 : vector<49x32xf32>
    %42 = vector.extract_strided_slice %17 {offsets = [57, 0], sizes = [49, 32], strides = [1, 1]} : vector<212x32xf32> to vector<49x32xf32>
    %c1_30 = arith.constant 1 : index
    %c1_31 = arith.constant 1 : index
    %c0_32 = arith.constant 0 : index
    %c0_33 = arith.constant 0 : index
    %43 = vector.load %arg2[%c1_30, %c1_31, %c0_32, %c0_33] : memref<3x3x49x32xf32, #tpu.memory_space<vmem>>, vector<1x1x49x32xf32>
    %44 = vector.shape_cast %43 : vector<1x1x49x32xf32> to vector<49x32xf32>
    %45 = arith.mulf %42, %44 : vector<49x32xf32>
    %46 = vector.extract_strided_slice %17 {offsets = [9, 0], sizes = [49, 32], strides = [1, 1]} : vector<212x32xf32> to vector<49x32xf32>
    %c1_34 = arith.constant 1 : index
    %c2_35 = arith.constant 2 : index
    %c0_36 = arith.constant 0 : index
    %c0_37 = arith.constant 0 : index
    %47 = vector.load %arg2[%c1_34, %c2_35, %c0_36, %c0_37] : memref<3x3x49x32xf32, #tpu.memory_space<vmem>>, vector<1x1x49x32xf32>
    %48 = vector.shape_cast %47 : vector<1x1x49x32xf32> to vector<49x32xf32>
    %49 = arith.mulf %46, %48 : vector<49x32xf32>
    %50 = vector.extract_strided_slice %17 {offsets = [154, 0], sizes = [49, 32], strides = [1, 1]} : vector<212x32xf32> to vector<49x32xf32>
    %c1_38 = arith.constant 1 : index
    %c0_39 = arith.constant 0 : index
    %c0_40 = arith.constant 0 : index
    %c0_41 = arith.constant 0 : index
    %51 = vector.load %arg2[%c1_38, %c0_39, %c0_40, %c0_41] : memref<3x3x49x32xf32, #tpu.memory_space<vmem>>, vector<1x1x49x32xf32>
    %52 = vector.shape_cast %51 : vector<1x1x49x32xf32> to vector<49x32xf32>
    %53 = arith.mulf %50, %52 : vector<49x32xf32>
    %54 = vector.extract_strided_slice %17 {offsets = [106, 0], sizes = [49, 32], strides = [1, 1]} : vector<212x32xf32> to vector<49x32xf32>
    %c1_42 = arith.constant 1 : index
    %c1_43 = arith.constant 1 : index
    %c0_44 = arith.constant 0 : index
    %c0_45 = arith.constant 0 : index
    %55 = vector.load %arg2[%c1_42, %c1_43, %c0_44, %c0_45] : memref<3x3x49x32xf32, #tpu.memory_space<vmem>>, vector<1x1x49x32xf32>
    %56 = vector.shape_cast %55 : vector<1x1x49x32xf32> to vector<49x32xf32>
    %57 = arith.mulf %54, %56 : vector<49x32xf32>
    %58 = vector.extract_strided_slice %17 {offsets = [155, 0], sizes = [49, 32], strides = [1, 1]} : vector<212x32xf32> to vector<49x32xf32>
    %c1_46 = arith.constant 1 : index
    %c1_47 = arith.constant 1 : index
    %c0_48 = arith.constant 0 : index
    %c0_49 = arith.constant 0 : index
    %59 = vector.load %arg2[%c1_46, %c1_47, %c0_48, %c0_49] : memref<3x3x49x32xf32, #tpu.memory_space<vmem>>, vector<1x1x49x32xf32>
    %60 = vector.shape_cast %59 : vector<1x1x49x32xf32> to vector<49x32xf32>
    %61 = arith.mulf %58, %60 : vector<49x32xf32>
    %62 = vector.extract_strided_slice %17 {offsets = [107, 0], sizes = [49, 32], strides = [1, 1]} : vector<212x32xf32> to vector<49x32xf32>
    %c1_50 = arith.constant 1 : index
    %c2_51 = arith.constant 2 : index
    %c0_52 = arith.constant 0 : index
    %c0_53 = arith.constant 0 : index
    %63 = vector.load %arg2[%c1_50, %c2_51, %c0_52, %c0_53] : memref<3x3x49x32xf32, #tpu.memory_space<vmem>>, vector<1x1x49x32xf32>
    %64 = vector.shape_cast %63 : vector<1x1x49x32xf32> to vector<49x32xf32>
    %65 = arith.mulf %62, %64 : vector<49x32xf32>
    %66 = vector.extract_strided_slice %17 {offsets = [63, 0], sizes = [49, 32], strides = [1, 1]} : vector<212x32xf32> to vector<49x32xf32>
    %c2_54 = arith.constant 2 : index
    %c0_55 = arith.constant 0 : index
    %c0_56 = arith.constant 0 : index
    %c0_57 = arith.constant 0 : index
    %67 = vector.load %arg2[%c2_54, %c0_55, %c0_56, %c0_57] : memref<3x3x49x32xf32, #tpu.memory_space<vmem>>, vector<1x1x49x32xf32>
    %68 = vector.shape_cast %67 : vector<1x1x49x32xf32> to vector<49x32xf32>
    %69 = arith.mulf %66, %68 : vector<49x32xf32>
    %70 = vector.extract_strided_slice %17 {offsets = [15, 0], sizes = [49, 32], strides = [1, 1]} : vector<212x32xf32> to vector<49x32xf32>
    %c2_58 = arith.constant 2 : index
    %c1_59 = arith.constant 1 : index
    %c0_60 = arith.constant 0 : index
    %c0_61 = arith.constant 0 : index
    %71 = vector.load %arg2[%c2_58, %c1_59, %c0_60, %c0_61] : memref<3x3x49x32xf32, #tpu.memory_space<vmem>>, vector<1x1x49x32xf32>
    %72 = vector.shape_cast %71 : vector<1x1x49x32xf32> to vector<49x32xf32>
    %73 = arith.mulf %70, %72 : vector<49x32xf32>
    %74 = vector.extract_strided_slice %17 {offsets = [64, 0], sizes = [49, 32], strides = [1, 1]} : vector<212x32xf32> to vector<49x32xf32>
    %c2_62 = arith.constant 2 : index
    %c1_63 = arith.constant 1 : index
    %c0_64 = arith.constant 0 : index
    %c0_65 = arith.constant 0 : index
    %75 = vector.load %arg2[%c2_62, %c1_63, %c0_64, %c0_65] : memref<3x3x49x32xf32, #tpu.memory_space<vmem>>, vector<1x1x49x32xf32>
    %76 = vector.shape_cast %75 : vector<1x1x49x32xf32> to vector<49x32xf32>
    %77 = arith.mulf %74, %76 : vector<49x32xf32>
    %78 = vector.extract_strided_slice %17 {offsets = [16, 0], sizes = [49, 32], strides = [1, 1]} : vector<212x32xf32> to vector<49x32xf32>
    %c2_66 = arith.constant 2 : index
    %c2_67 = arith.constant 2 : index
    %c0_68 = arith.constant 0 : index
    %c0_69 = arith.constant 0 : index
    %79 = vector.load %arg2[%c2_66, %c2_67, %c0_68, %c0_69] : memref<3x3x49x32xf32, #tpu.memory_space<vmem>>, vector<1x1x49x32xf32>
    %80 = vector.shape_cast %79 : vector<1x1x49x32xf32> to vector<49x32xf32>
    %81 = arith.mulf %78, %80 : vector<49x32xf32>
    %82 = tpu.concatenate %21, %25, %29, %37, %41, %45, %53, %57, %61 in 1 : vector<49x32xf32>, vector<49x32xf32>, vector<49x32xf32>, vector<49x32xf32>, vector<49x32xf32>, vector<49x32xf32>, vector<49x32xf32>, vector<49x32xf32>, vector<49x32xf32> -> vector<49x288xf32>
    %83 = tpu.concatenate %25, %29, %33, %41, %45, %49, %57, %61, %65 in 1 : vector<49x32xf32>, vector<49x32xf32>, vector<49x32xf32>, vector<49x32xf32>, vector<49x32xf32>, vector<49x32xf32>, vector<49x32xf32>, vector<49x32xf32>, vector<49x32xf32> -> vector<49x288xf32>
    %84 = tpu.concatenate %37, %41, %45, %53, %57, %61, %69, %73, %77 in 1 : vector<49x32xf32>, vector<49x32xf32>, vector<49x32xf32>, vector<49x32xf32>, vector<49x32xf32>, vector<49x32xf32>, vector<49x32xf32>, vector<49x32xf32>, vector<49x32xf32> -> vector<49x288xf32>
    %85 = tpu.concatenate %41, %45, %49, %57, %61, %65, %73, %77, %81 in 1 : vector<49x32xf32>, vector<49x32xf32>, vector<49x32xf32>, vector<49x32xf32>, vector<49x32xf32>, vector<49x32xf32>, vector<49x32xf32>, vector<49x32xf32>, vector<49x32xf32> -> vector<49x288xf32>
    %86 = tpu.concatenate %82, %83, %84, %85 in 0 : vector<49x288xf32>, vector<49x288xf32>, vector<49x288xf32>, vector<49x288xf32> -> vector<196x288xf32>
    %87 = arith.truncf %86 : vector<196x288xf32> to vector<196x288xbf16>
    %c0_70 = arith.constant 0 : index
    %c0_71 = arith.constant 0 : index
    %88 = vector.load %arg5[%c0_70, %c0_71] : memref<288x64xbf16, #tpu.memory_space<vmem>>, vector<288x64xbf16>
    %cst_72 = arith.constant dense<0.000000e+00> : vector<196x64xf32>
    %89 = tpu.matmul %87, %88, %cst_72 {dimension_numbers = #tpu.dot_dimension_numbers<[1], [0], [0], [1], [0, 0, 1, 1], [], []>} : vector<196x288xbf16>, vector<288x64xbf16>, vector<196x64xf32> -> vector<196x64xf32>
    %c0_73 = arith.constant 0 : index
    %c0_74 = arith.constant 0 : index
    %90 = vector.load %arg6[%c0_73, %c0_74] : memref<1x64xf32, #tpu.memory_space<vmem>>, vector<1x64xf32>
    %91 = vector.broadcast %90 : vector<1x64xf32> to vector<196x64xf32>
    %92 = arith.addf %89, %91 : vector<196x64xf32>
    %cst_75 = arith.constant 0.000000e+00 : f32
    %93 = vector.broadcast %cst_75 : f32 to vector<196x64xf32>
    %94 = arith.maximumf %92, %93 : vector<196x64xf32>
    %95 = vector.extract_strided_slice %94 {offsets = [0, 0], sizes = [49, 64], strides = [1, 1]} : vector<196x64xf32> to vector<49x64xf32>
    %96 = vector.extract_strided_slice %94 {offsets = [49, 0], sizes = [49, 64], strides = [1, 1]} : vector<196x64xf32> to vector<49x64xf32>
    %97 = arith.maximumf %95, %96 : vector<49x64xf32>
    %98 = vector.extract_strided_slice %94 {offsets = [98, 0], sizes = [49, 64], strides = [1, 1]} : vector<196x64xf32> to vector<49x64xf32>
    %99 = vector.extract_strided_slice %94 {offsets = [147, 0], sizes = [49, 64], strides = [1, 1]} : vector<196x64xf32> to vector<49x64xf32>
    %100 = arith.maximumf %98, %99 : vector<49x64xf32>
    %101 = arith.maximumf %97, %100 : vector<49x64xf32>
    %102 = vector.extract_strided_slice %101 {offsets = [0, 0], sizes = [1, 64], strides = [1, 1]} : vector<49x64xf32> to vector<1x64xf32>
    %103 = vector.extract_strided_slice %101 {offsets = [1, 0], sizes = [1, 64], strides = [1, 1]} : vector<49x64xf32> to vector<1x64xf32>
    %104 = vector.extract_strided_slice %101 {offsets = [2, 0], sizes = [1, 64], strides = [1, 1]} : vector<49x64xf32> to vector<1x64xf32>
    %105 = vector.extract_strided_slice %101 {offsets = [3, 0], sizes = [1, 64], strides = [1, 1]} : vector<49x64xf32> to vector<1x64xf32>
    %106 = vector.extract_strided_slice %101 {offsets = [4, 0], sizes = [1, 64], strides = [1, 1]} : vector<49x64xf32> to vector<1x64xf32>
    %107 = vector.extract_strided_slice %101 {offsets = [5, 0], sizes = [1, 64], strides = [1, 1]} : vector<49x64xf32> to vector<1x64xf32>
    %108 = vector.extract_strided_slice %101 {offsets = [6, 0], sizes = [1, 64], strides = [1, 1]} : vector<49x64xf32> to vector<1x64xf32>
    %109 = vector.extract_strided_slice %101 {offsets = [7, 0], sizes = [1, 64], strides = [1, 1]} : vector<49x64xf32> to vector<1x64xf32>
    %110 = vector.extract_strided_slice %101 {offsets = [8, 0], sizes = [1, 64], strides = [1, 1]} : vector<49x64xf32> to vector<1x64xf32>
    %111 = vector.extract_strided_slice %101 {offsets = [9, 0], sizes = [1, 64], strides = [1, 1]} : vector<49x64xf32> to vector<1x64xf32>
    %112 = vector.extract_strided_slice %101 {offsets = [10, 0], sizes = [1, 64], strides = [1, 1]} : vector<49x64xf32> to vector<1x64xf32>
    %113 = vector.extract_strided_slice %101 {offsets = [11, 0], sizes = [1, 64], strides = [1, 1]} : vector<49x64xf32> to vector<1x64xf32>
    %114 = vector.extract_strided_slice %101 {offsets = [12, 0], sizes = [1, 64], strides = [1, 1]} : vector<49x64xf32> to vector<1x64xf32>
    %115 = vector.extract_strided_slice %101 {offsets = [13, 0], sizes = [1, 64], strides = [1, 1]} : vector<49x64xf32> to vector<1x64xf32>
    %116 = vector.extract_strided_slice %101 {offsets = [14, 0], sizes = [1, 64], strides = [1, 1]} : vector<49x64xf32> to vector<1x64xf32>
    %117 = vector.extract_strided_slice %101 {offsets = [15, 0], sizes = [1, 64], strides = [1, 1]} : vector<49x64xf32> to vector<1x64xf32>
    %118 = vector.extract_strided_slice %101 {offsets = [16, 0], sizes = [1, 64], strides = [1, 1]} : vector<49x64xf32> to vector<1x64xf32>
    %119 = vector.extract_strided_slice %101 {offsets = [17, 0], sizes = [1, 64], strides = [1, 1]} : vector<49x64xf32> to vector<1x64xf32>
    %120 = vector.extract_strided_slice %101 {offsets = [18, 0], sizes = [1, 64], strides = [1, 1]} : vector<49x64xf32> to vector<1x64xf32>
    %121 = vector.extract_strided_slice %101 {offsets = [19, 0], sizes = [1, 64], strides = [1, 1]} : vector<49x64xf32> to vector<1x64xf32>
    %122 = vector.extract_strided_slice %101 {offsets = [20, 0], sizes = [1, 64], strides = [1, 1]} : vector<49x64xf32> to vector<1x64xf32>
    %123 = vector.extract_strided_slice %101 {offsets = [21, 0], sizes = [1, 64], strides = [1, 1]} : vector<49x64xf32> to vector<1x64xf32>
    %124 = vector.extract_strided_slice %101 {offsets = [22, 0], sizes = [1, 64], strides = [1, 1]} : vector<49x64xf32> to vector<1x64xf32>
    %125 = vector.extract_strided_slice %101 {offsets = [23, 0], sizes = [1, 64], strides = [1, 1]} : vector<49x64xf32> to vector<1x64xf32>
    %126 = vector.extract_strided_slice %101 {offsets = [24, 0], sizes = [1, 64], strides = [1, 1]} : vector<49x64xf32> to vector<1x64xf32>
    %127 = vector.extract_strided_slice %101 {offsets = [25, 0], sizes = [1, 64], strides = [1, 1]} : vector<49x64xf32> to vector<1x64xf32>
    %128 = vector.extract_strided_slice %101 {offsets = [26, 0], sizes = [1, 64], strides = [1, 1]} : vector<49x64xf32> to vector<1x64xf32>
    %129 = vector.extract_strided_slice %101 {offsets = [27, 0], sizes = [1, 64], strides = [1, 1]} : vector<49x64xf32> to vector<1x64xf32>
    %130 = vector.extract_strided_slice %101 {offsets = [28, 0], sizes = [1, 64], strides = [1, 1]} : vector<49x64xf32> to vector<1x64xf32>
    %131 = vector.extract_strided_slice %101 {offsets = [29, 0], sizes = [1, 64], strides = [1, 1]} : vector<49x64xf32> to vector<1x64xf32>
    %132 = vector.extract_strided_slice %101 {offsets = [30, 0], sizes = [1, 64], strides = [1, 1]} : vector<49x64xf32> to vector<1x64xf32>
    %133 = vector.extract_strided_slice %101 {offsets = [31, 0], sizes = [1, 64], strides = [1, 1]} : vector<49x64xf32> to vector<1x64xf32>
    %134 = vector.extract_strided_slice %101 {offsets = [32, 0], sizes = [1, 64], strides = [1, 1]} : vector<49x64xf32> to vector<1x64xf32>
    %135 = vector.extract_strided_slice %101 {offsets = [33, 0], sizes = [1, 64], strides = [1, 1]} : vector<49x64xf32> to vector<1x64xf32>
    %136 = vector.extract_strided_slice %101 {offsets = [34, 0], sizes = [1, 64], strides = [1, 1]} : vector<49x64xf32> to vector<1x64xf32>
    %137 = vector.extract_strided_slice %101 {offsets = [35, 0], sizes = [1, 64], strides = [1, 1]} : vector<49x64xf32> to vector<1x64xf32>
    %138 = vector.extract_strided_slice %101 {offsets = [36, 0], sizes = [1, 64], strides = [1, 1]} : vector<49x64xf32> to vector<1x64xf32>
    %139 = vector.extract_strided_slice %101 {offsets = [37, 0], sizes = [1, 64], strides = [1, 1]} : vector<49x64xf32> to vector<1x64xf32>
    %140 = vector.extract_strided_slice %101 {offsets = [38, 0], sizes = [1, 64], strides = [1, 1]} : vector<49x64xf32> to vector<1x64xf32>
    %141 = vector.extract_strided_slice %101 {offsets = [39, 0], sizes = [1, 64], strides = [1, 1]} : vector<49x64xf32> to vector<1x64xf32>
    %142 = vector.extract_strided_slice %101 {offsets = [40, 0], sizes = [1, 64], strides = [1, 1]} : vector<49x64xf32> to vector<1x64xf32>
    %143 = vector.extract_strided_slice %101 {offsets = [41, 0], sizes = [1, 64], strides = [1, 1]} : vector<49x64xf32> to vector<1x64xf32>
    %144 = vector.extract_strided_slice %101 {offsets = [42, 0], sizes = [1, 64], strides = [1, 1]} : vector<49x64xf32> to vector<1x64xf32>
    %145 = vector.extract_strided_slice %101 {offsets = [43, 0], sizes = [1, 64], strides = [1, 1]} : vector<49x64xf32> to vector<1x64xf32>
    %146 = vector.extract_strided_slice %101 {offsets = [44, 0], sizes = [1, 64], strides = [1, 1]} : vector<49x64xf32> to vector<1x64xf32>
    %147 = vector.extract_strided_slice %101 {offsets = [45, 0], sizes = [1, 64], strides = [1, 1]} : vector<49x64xf32> to vector<1x64xf32>
    %148 = vector.extract_strided_slice %101 {offsets = [46, 0], sizes = [1, 64], strides = [1, 1]} : vector<49x64xf32> to vector<1x64xf32>
    %149 = vector.extract_strided_slice %101 {offsets = [47, 0], sizes = [1, 64], strides = [1, 1]} : vector<49x64xf32> to vector<1x64xf32>
    %150 = vector.extract_strided_slice %101 {offsets = [48, 0], sizes = [1, 64], strides = [1, 1]} : vector<49x64xf32> to vector<1x64xf32>
    %151 = tpu.concatenate %102, %103, %104, %105, %106, %107, %108, %109, %110, %111, %112, %113, %114, %115, %116, %117 in 1 : vector<1x64xf32>, vector<1x64xf32>, vector<1x64xf32>, vector<1x64xf32>, vector<1x64xf32>, vector<1x64xf32>, vector<1x64xf32>, vector<1x64xf32>, vector<1x64xf32>, vector<1x64xf32>, vector<1x64xf32>, vector<1x64xf32>, vector<1x64xf32>, vector<1x64xf32>, vector<1x64xf32>, vector<1x64xf32> -> vector<1x1024xf32>
    %152 = tpu.concatenate %118, %119, %120, %121, %122, %123, %124, %125, %126, %127, %128, %129, %130, %131, %132, %133 in 1 : vector<1x64xf32>, vector<1x64xf32>, vector<1x64xf32>, vector<1x64xf32>, vector<1x64xf32>, vector<1x64xf32>, vector<1x64xf32>, vector<1x64xf32>, vector<1x64xf32>, vector<1x64xf32>, vector<1x64xf32>, vector<1x64xf32>, vector<1x64xf32>, vector<1x64xf32>, vector<1x64xf32>, vector<1x64xf32> -> vector<1x1024xf32>
    %153 = tpu.concatenate %134, %135, %136, %137, %138, %139, %140, %141, %142, %143, %144, %145, %146, %147, %148, %149 in 1 : vector<1x64xf32>, vector<1x64xf32>, vector<1x64xf32>, vector<1x64xf32>, vector<1x64xf32>, vector<1x64xf32>, vector<1x64xf32>, vector<1x64xf32>, vector<1x64xf32>, vector<1x64xf32>, vector<1x64xf32>, vector<1x64xf32>, vector<1x64xf32>, vector<1x64xf32>, vector<1x64xf32>, vector<1x64xf32> -> vector<1x1024xf32>
    %154 = tpu.concatenate %151, %152, %153, %150 in 1 : vector<1x1024xf32>, vector<1x1024xf32>, vector<1x1024xf32>, vector<1x64xf32> -> vector<1x3136xf32>
    %155 = arith.truncf %154 : vector<1x3136xf32> to vector<1x3136xbf16>
    %c0_76 = arith.constant 0 : index
    %c0_77 = arith.constant 0 : index
    %156 = vector.load %arg7[%c0_76, %c0_77] : memref<3136x128xbf16, #tpu.memory_space<vmem>>, vector<3136x128xbf16>
    %cst_78 = arith.constant dense<0.000000e+00> : vector<1x128xf32>
    %157 = tpu.matmul %155, %156, %cst_78 {dimension_numbers = #tpu.dot_dimension_numbers<[1], [0], [0], [1], [0, 0, 1, 1], [], []>} : vector<1x3136xbf16>, vector<3136x128xbf16>, vector<1x128xf32> -> vector<1x128xf32>
    %c0_79 = arith.constant 0 : index
    %c0_80 = arith.constant 0 : index
    %158 = vector.load %arg8[%c0_79, %c0_80] : memref<1x128xf32, #tpu.memory_space<vmem>>, vector<1x128xf32>
    %159 = arith.addf %157, %158 : vector<1x128xf32>
    %cst_81 = arith.constant 0.000000e+00 : f32
    %160 = vector.broadcast %cst_81 : f32 to vector<1x128xf32>
    %161 = arith.maximumf %159, %160 : vector<1x128xf32>
    %162 = arith.truncf %161 : vector<1x128xf32> to vector<1x128xbf16>
    %c0_82 = arith.constant 0 : index
    %c0_83 = arith.constant 0 : index
    %163 = vector.load %arg9[%c0_82, %c0_83] : memref<128x16xbf16, #tpu.memory_space<vmem>>, vector<128x16xbf16>
    %cst_84 = arith.constant dense<0.000000e+00> : vector<1x16xf32>
    %164 = tpu.matmul %162, %163, %cst_84 {dimension_numbers = #tpu.dot_dimension_numbers<[1], [0], [0], [1], [0, 0, 1, 1], [], []>} : vector<1x128xbf16>, vector<128x16xbf16>, vector<1x16xf32> -> vector<1x16xf32>
    %c0_85 = arith.constant 0 : index
    %c0_86 = arith.constant 0 : index
    %165 = vector.load %arg10[%c0_85, %c0_86] : memref<1x16xf32, #tpu.memory_space<vmem>>, vector<1x16xf32>
    %166 = arith.addf %164, %165 : vector<1x16xf32>
    %c0_87 = arith.constant 0 : index
    %c0_88 = arith.constant 0 : index
    %c0_89 = arith.constant 0 : index
    %167 = vector.load %arg11[%c0_87, %c0_88, %c0_89] : memref<1x1x16xf32, #tpu.memory_space<vmem>>, vector<1x1x16xf32>
    %168 = vector.shape_cast %167 : vector<1x1x16xf32> to vector<1x16xf32>
    %169 = vector.shape_cast %166 : vector<1x16xf32> to vector<1x1x16xf32>
    tpu.vector_store %arg11[%c0_87, %c0_88, %c0_89], %169 {strides = array<i32>} : memref<1x1x16xf32, #tpu.memory_space<vmem>>, vector<1x1x16xf32>,
    return
  }
  func.func @transform_0(%arg0: i32) -> (i32, i32, i32) {
    %c0_i32 = arith.constant 0 : i32
    %c0_i32_0 = arith.constant 0 : i32
    %c0_i32_1 = arith.constant 0 : i32
    return %arg0, %c0_i32, %c0_i32_0 : i32, i32, i32
  }
  func.func @transform_1(%arg0: i32) -> (i32, i32, i32, i32) {
    %c0_i32 = arith.constant 0 : i32
    %c0_i32_0 = arith.constant 0 : i32
    %c0_i32_1 = arith.constant 0 : i32
    %c0_i32_2 = arith.constant 0 : i32
    %c0_i32_3 = arith.constant 0 : i32
    return %c0_i32, %c0_i32_0, %c0_i32_1, %c0_i32_2 : i32, i32, i32, i32
  }
  func.func @transform_2(%arg0: i32) -> (i32, i32) {
    %c0_i32 = arith.constant 0 : i32
    %c0_i32_0 = arith.constant 0 : i32
    %c0_i32_1 = arith.constant 0 : i32
    return %c0_i32, %c0_i32_0 : i32, i32
  }
  func.func @transform_3(%arg0: i32) -> (i32, i32) {
    %c0_i32 = arith.constant 0 : i32
    %c0_i32_0 = arith.constant 0 : i32
    %c0_i32_1 = arith.constant 0 : i32
    return %c0_i32, %c0_i32_0 : i32, i32
  }
  func.func @transform_4(%arg0: i32) -> (i32, i32) {
    %c0_i32 = arith.constant 0 : i32
    %c0_i32_0 = arith.constant 0 : i32
    %c0_i32_1 = arith.constant 0 : i32
    return %c0_i32, %c0_i32_0 : i32, i32
  }
  func.func @transform_5(%arg0: i32) -> (i32, i32) {
    %c0_i32 = arith.constant 0 : i32
    %c0_i32_0 = arith.constant 0 : i32
    %c0_i32_1 = arith.constant 0 : i32
    return %c0_i32, %c0_i32_0 : i32, i32
  }
  func.func @transform_6(%arg0: i32) -> (i32, i32) {
    %c0_i32 = arith.constant 0 : i32
    %c0_i32_0 = arith.constant 0 : i32
    %c0_i32_1 = arith.constant 0 : i32
    return %c0_i32, %c0_i32_0 : i32, i32
  }
  func.func @transform_7(%arg0: i32) -> (i32, i32) {
    %c0_i32 = arith.constant 0 : i32
    %c0_i32_0 = arith.constant 0 : i32
    %c0_i32_1 = arith.constant 0 : i32
    return %c0_i32, %c0_i32_0 : i32, i32
  }
  func.func @transform_8(%arg0: i32) -> (i32, i32) {
    %c0_i32 = arith.constant 0 : i32
    %c0_i32_0 = arith.constant 0 : i32
    %c0_i32_1 = arith.constant 0 : i32
    return %c0_i32, %c0_i32_0 : i32, i32
  }
  func.func @transform_9(%arg0: i32) -> (i32, i32) {
    %c0_i32 = arith.constant 0 : i32
    %c0_i32_0 = arith.constant 0 : i32
    %c0_i32_1 = arith.constant 0 : i32
    return %c0_i32, %c0_i32_0 : i32, i32
  }
  func.func @transform_10(%arg0: i32) -> (i32, i32, i32) {
    %c0_i32 = arith.constant 0 : i32
    %c0_i32_0 = arith.constant 0 : i32
    %c0_i32_1 = arith.constant 0 : i32
    return %arg0, %c0_i32, %c0_i32_0 : i32, i32, i32
  }
}

</mosaic_0001>

<llo_original>
// kernel: handwritten_math_cnn_forward.1
$region0: #{handwritten_math_cnn_forward.1}
  #allocation0 [shape = 'u32[]', space=smem, size = 0x4, offset = 0x4, fixed_abs, tag = 'smem constant byte address 0x4 - core index']
  #allocation1 [shape = 'u32[144,128]{1,0:T(1,128)}', space=vmem, size = 0x12000, scoped, tag = 'internal scratch']
  %s0 = inlined_call_operand.vmem [shape: bf16[2,784,9], index: 0, kind: input, shape index: {}]
  %s1 = inlined_call_operand.vmem [shape: f32[3,3,49,32], index: 1, kind: input, shape index: {}]
  %s2 = inlined_call_operand.vmem [shape: bf16[9,32], index: 2, kind: input, shape index: {}]
  %s3 = inlined_call_operand.vmem [shape: f32[1,32], index: 3, kind: input, shape index: {}]
  %s4 = inlined_call_operand.vmem [shape: bf16[288,64], index: 4, kind: input, shape index: {}]
  %s5 = inlined_call_operand.vmem [shape: f32[1,64], index: 5, kind: input, shape index: {}]
  %s6 = inlined_call_operand.vmem [shape: bf16[3136,128], index: 6, kind: input, shape index: {}]
  %s7 = inlined_call_operand.vmem [shape: f32[1,128], index: 7, kind: input, shape index: {}]
  %s8 = inlined_call_operand.vmem [shape: bf16[128,16], index: 8, kind: input, shape index: {}]
  %s9 = inlined_call_operand.vmem [shape: f32[1,16], index: 9, kind: input, shape index: {}]
  %s10 = inlined_call_operand.hbm [shape: f32[2,1,16], index: 10, kind: output, shape index: {}]
  %s11 = sld [smem:[#allocation0]]
  $region73: #{handwritten_math_cnn_forward.1} parent=0
    _
  %s13 = ssub.s32 1, %s11
  %s14 = scalar_select 0, %s13, %s11
  $region1: #{handwritten_math_cnn_forward.1} parent=0
    #allocation2 [shape = 'u8[1024]{0}', space=vmem, size = 0x400, scoped, tag = 'output window, operand 0']
    #allocation3 [shape = 's32[2]{0}', space=sflag, size = 0x8, scoped, tag = 'scoped memory for handwritten_math_cnn_forward.1']
    %15 = vsyncpa [#allocation3], 0
    %s16 = scalar_lea.sflag [#allocation3], 1
    %17 = vsyncpa %s16, 0
    loop: start=0, step=1, limit=4
    $region2: #{handwritten_math_cnn_forward.1} parent=1 // loop_pre_header
      _
    $region3: #{handwritten_math_cnn_forward.1} parent=1 // loop_header
      %s19 = sphi 0, %s23
      %p20 = scmp.ge.s32.totalorder %s19, 4
      %s29 = sphi 0, %s31
      %s32 = sphi 0, %s29
      %s33 = sphi 0, %s32
      %s49 = sphi 0, %s33
      %s53 = sphi 0, %s53
      %s55 = sphi 0, %s53
      %s56 = sphi 0, %s55
      %s70 = sphi 0, %s56
      %s74 = sphi 0, %s74
      %s76 = sphi 0, %s74
      %s77 = sphi 0, %s76
      %s91 = sphi 0, %s77
      %s95 = sphi 0, %s95
      %s97 = sphi 0, %s95
      %s98 = sphi 0, %s97
      %s112 = sphi 0, %s98
      %s116 = sphi 0, %s116
      %s118 = sphi 0, %s116
      %s119 = sphi 0, %s118
      %s133 = sphi 0, %s119
      %s137 = sphi 0, %s137
      %s139 = sphi 0, %s137
      %s140 = sphi 0, %s139
      %s154 = sphi 0, %s140
      %s158 = sphi 0, %s158
      %s160 = sphi 0, %s158
      %s161 = sphi 0, %s160
      %s175 = sphi 0, %s161
      %s179 = sphi 0, %s179
      %s181 = sphi 0, %s179
      %s182 = sphi 0, %s181
      %s196 = sphi 0, %s182
      %s200 = sphi 0, %s200
      %s202 = sphi 0, %s200
      %s203 = sphi 0, %s202
      %s217 = sphi 0, %s203
      %s221 = sphi 0, %s221
      %s223 = sphi 0, %s221
      %s224 = sphi 0, %s223
      %s238 = sphi 0, %s224
      %s244 = sphi 0, %s246
      %s247 = sphi 0, %s244
      %s248 = sphi 0, %s247
      %s264 = sphi 0, %s248
    $region4: #{handwritten_math_cnn_forward.1} parent=1 // loop_header_branch
      %22 = sbr.rel (%p20) target = $region8
    $region5: #{handwritten_math_cnn_forward.1} parent=1 // loop_body
      %s24 = ssub.s32 %s19, 1
      %s25 = ssub.s32 %s19, 2
      %s26 = sadd.s32 %s19, 1
      %s27 = ssub.s32 %s19, %s26
      %p28 = scmp.eq.s32.totalorder %s27, 0
      %s30 = sadd.s32 %s29, 1
      %s31 = scalar_select %p28, %s29, %s30
      %p34 = pneg %p28
      %p35 = scmp.eq.s32.totalorder %s19, 1
      %p36 = por %p34, %p35
      %p37 = scmp.ne.s32.totalorder %s29, %s32
      %p38 = scmp.eq.s32.totalorder %s19, 0
      %p39 = por %p37, %p38
      %p40 = scmp.ne.s32.totalorder %s29, %s32
      %p41 = scmp.eq.s32.totalorder %s24, 1
      %p42 = por %p40, %p41
      %p43 = scmp.ne.s32.totalorder %s32, %s33
      %p44 = scmp.eq.s32.totalorder %s24, 0
      %p45 = por %p43, %p44
      %p46 = scmp.ne.s32.totalorder %s32, %s33
      %p47 = scmp.eq.s32.totalorder %s25, 1
      %p48 = por %p46, %p47
      %p50 = scmp.ne.s32.totalorder %s33, %s49
      %p51 = scmp.eq.s32.totalorder %s25, 0
      %p52 = por %p50, %p51
      %s54 = sadd.s32 %s53, 1
      %p57 = scmp.eq.s32.totalorder %s19, 1
      %p58 = scmp.ne.s32.totalorder %s53, %s55
      %p59 = scmp.eq.s32.totalorder %s19, 0
      %p60 = por %p58, %p59
      %p61 = scmp.ne.s32.totalorder %s53, %s55
      %p62 = scmp.eq.s32.totalorder %s24, 1
      %p63 = por %p61, %p62
      %p64 = scmp.ne.s32.totalorder %s55, %s56
      %p65 = scmp.eq.s32.totalorder %s24, 0
      %p66 = por %p64, %p65
      %p67 = scmp.ne.s32.totalorder %s55, %s56
      %p68 = scmp.eq.s32.totalorder %s25, 1
      %p69 = por %p67, %p68
      %p71 = scmp.ne.s32.totalorder %s56, %s70
      %p72 = scmp.eq.s32.totalorder %s25, 0
      %p73 = por %p71, %p72
      %s75 = sadd.s32 %s74, 1
      %p78 = scmp.eq.s32.totalorder %s19, 1
      %p79 = scmp.ne.s32.totalorder %s74, %s76
      %p80 = scmp.eq.s32.totalorder %s19, 0
      %p81 = por %p79, %p80
      %p82 = scmp.ne.s32.totalorder %s74, %s76
      %p83 = scmp.eq.s32.totalorder %s24, 1
      %p84 = por %p82, %p83
      %p85 = scmp.ne.s32.totalorder %s76, %s77
      %p86 = scmp.eq.s32.totalorder %s24, 0
      %p87 = por %p85, %p86
      %p88 = scmp.ne.s32.totalorder %s76, %s77
      %p89 = scmp.eq.s32.totalorder %s25, 1
      %p90 = por %p88, %p89
      %p92 = scmp.ne.s32.totalorder %s77, %s91
      %p93 = scmp.eq.s32.totalorder %s25, 0
      %p94 = por %p92, %p93
      %s96 = sadd.s32 %s95, 1
      %p99 = scmp.eq.s32.totalorder %s19, 1
      %p100 = scmp.ne.s32.totalorder %s95, %s97
      %p101 = scmp.eq.s32.totalorder %s19, 0
      %p102 = por %p100, %p101
      %p103 = scmp.ne.s32.totalorder %s95, %s97
      %p104 = scmp.eq.s32.totalorder %s24, 1
      %p105 = por %p103, %p104
      %p106 = scmp.ne.s32.totalorder %s97, %s98
      %p107 = scmp.eq.s32.totalorder %s24, 0
      %p108 = por %p106, %p107
      %p109 = scmp.ne.s32.totalorder %s97, %s98
      %p110 = scmp.eq.s32.totalorder %s25, 1
      %p111 = por %p109, %p110
      %p113 = scmp.ne.s32.totalorder %s98, %s112
      %p114 = scmp.eq.s32.totalorder %s25, 0
      %p115 = por %p113, %p114
      %s117 = sadd.s32 %s116, 1
      %p120 = scmp.eq.s32.totalorder %s19, 1
      %p121 = scmp.ne.s32.totalorder %s116, %s118
      %p122 = scmp.eq.s32.totalorder %s19, 0
      %p123 = por %p121, %p122
      %p124 = scmp.ne.s32.totalorder %s116, %s118
      %p125 = scmp.eq.s32.totalorder %s24, 1
      %p126 = por %p124, %p125
      %p127 = scmp.ne.s32.totalorder %s118, %s119
      %p128 = scmp.eq.s32.totalorder %s24, 0
      %p129 = por %p127, %p128
      %p130 = scmp.ne.s32.totalorder %s118, %s119
      %p131 = scmp.eq.s32.totalorder %s25, 1
      %p132 = por %p130, %p131
      %p134 = scmp.ne.s32.totalorder %s119, %s133
      %p135 = scmp.eq.s32.totalorder %s25, 0
      %p136 = por %p134, %p135
      %s138 = sadd.s32 %s137, 1
      %p141 = scmp.eq.s32.totalorder %s19, 1
      %p142 = scmp.ne.s32.totalorder %s137, %s139
      %p143 = scmp.eq.s32.totalorder %s19, 0
      %p144 = por %p142, %p143
      %p145 = scmp.ne.s32.totalorder %s137, %s139
      %p146 = scmp.eq.s32.totalorder %s24, 1
      %p147 = por %p145, %p146
      %p148 = scmp.ne.s32.totalorder %s139, %s140
      %p149 = scmp.eq.s32.totalorder %s24, 0
      %p150 = por %p148, %p149
      %p151 = scmp.ne.s32.totalorder %s139, %s140
      %p152 = scmp.eq.s32.totalorder %s25, 1
      %p153 = por %p151, %p152
      %p155 = scmp.ne.s32.totalorder %s140, %s154
      %p156 = scmp.eq.s32.totalorder %s25, 0
      %p157 = por %p155, %p156
      %s159 = sadd.s32 %s158, 1
      %p162 = scmp.eq.s32.totalorder %s19, 1
      %p163 = scmp.ne.s32.totalorder %s158, %s160
      %p164 = scmp.eq.s32.totalorder %s19, 0
      %p165 = por %p163, %p164
      %p166 = scmp.ne.s32.totalorder %s158, %s160
      %p167 = scmp.eq.s32.totalorder %s24, 1
      %p168 = por %p166, %p167
      %p169 = scmp.ne.s32.totalorder %s160, %s161
      %p170 = scmp.eq.s32.totalorder %s24, 0
      %p171 = por %p169, %p170
      %p172 = scmp.ne.s32.totalorder %s160, %s161
      %p173 = scmp.eq.s32.totalorder %s25, 1
      %p174 = por %p172, %p173
      %p176 = scmp.ne.s32.totalorder %s161, %s175
      %p177 = scmp.eq.s32.totalorder %s25, 0
      %p178 = por %p176, %p177
      %s180 = sadd.s32 %s179, 1
      %p183 = scmp.eq.s32.totalorder %s19, 1
      %p184 = scmp.ne.s32.totalorder %s179, %s181
      %p185 = scmp.eq.s32.totalorder %s19, 0
      %p186 = por %p184, %p185
      %p187 = scmp.ne.s32.totalorder %s179, %s181
      %p188 = scmp.eq.s32.totalorder %s24, 1
      %p189 = por %p187, %p188
      %p190 = scmp.ne.s32.totalorder %s181, %s182
      %p191 = scmp.eq.s32.totalorder %s24, 0
      %p192 = por %p190, %p191
      %p193 = scmp.ne.s32.totalorder %s181, %s182
      %p194 = scmp.eq.s32.totalorder %s25, 1
      %p195 = por %p193, %p194
      %p197 = scmp.ne.s32.totalorder %s182, %s196
      %p198 = scmp.eq.s32.totalorder %s25, 0
      %p199 = por %p197, %p198
      %s201 = sadd.s32 %s200, 1
      %p204 = scmp.eq.s32.totalorder %s19, 1
      %p205 = scmp.ne.s32.totalorder %s200, %s202
      %p206 = scmp.eq.s32.totalorder %s19, 0
      %p207 = por %p205, %p206
      %p208 = scmp.ne.s32.totalorder %s200, %s202
      %p209 = scmp.eq.s32.totalorder %s24, 1
      %p210 = por %p208, %p209
      %p211 = scmp.ne.s32.totalorder %s202, %s203
      %p212 = scmp.eq.s32.totalorder %s24, 0
      %p213 = por %p211, %p212
      %p214 = scmp.ne.s32.totalorder %s202, %s203
      %p215 = scmp.eq.s32.totalorder %s25, 1
      %p216 = por %p214, %p215
      %p218 = scmp.ne.s32.totalorder %s203, %s217
      %p219 = scmp.eq.s32.totalorder %s25, 0
      %p220 = por %p218, %p219
      %s222 = sadd.s32 %s221, 1
      %p225 = scmp.eq.s32.totalorder %s19, 1
      %p226 = scmp.ne.s32.totalorder %s221, %s223
      %p227 = scmp.eq.s32.totalorder %s19, 0
      %p228 = por %p226, %p227
      %p229 = scmp.ne.s32.totalorder %s221, %s223
      %p230 = scmp.eq.s32.totalorder %s24, 1
      %p231 = por %p229, %p230
      %p232 = scmp.ne.s32.totalorder %s223, %s224
      %p233 = scmp.eq.s32.totalorder %s24, 0
      %p234 = por %p232, %p233
      %p235 = scmp.ne.s32.totalorder %s223, %s224
      %p236 = scmp.eq.s32.totalorder %s25, 1
      %p237 = por %p235, %p236
      %p239 = scmp.ne.s32.totalorder %s224, %s238
      %p240 = scmp.eq.s32.totalorder %s25, 0
      %p241 = por %p239, %p240
      %s242 = ssub.s32 %s19, %s26
      %p243 = scmp.eq.s32.totalorder %s242, 0
      %s245 = sadd.s32 %s244, 1
      %s246 = scalar_select %p243, %s244, %s245
      %p249 = pneg %p243
      %p250 = scmp.eq.s32.totalorder %s19, 1
      %p251 = por %p249, %p250
      %p252 = scmp.ne.s32.totalorder %s244, %s247
      %p253 = scmp.eq.s32.totalorder %s19, 0
      %p254 = por %p252, %p253
      %p255 = scmp.ne.s32.totalorder %s244, %s247
      %p256 = scmp.eq.s32.totalorder %s24, 1
      %p257 = por %p255, %p256
      %p258 = scmp.ne.s32.totalorder %s247, %s248
      %p259 = scmp.eq.s32.totalorder %s24, 0
      %p260 = por %p258, %p259
      %p261 = scmp.ne.s32.totalorder %s247, %s248
      %p262 = scmp.eq.s32.totalorder %s25, 1
      %p263 = por %p261, %p262
      %p265 = scmp.ne.s32.totalorder %s248, %s264
      %p266 = scmp.eq.s32.totalorder %s25, 0
      %p267 = por %p265, %p266
      %p268 = scmp.le.s32.totalorder 1, %s19
      %p269 = scmp.lt.s32.totalorder %s19, 3
      %p270 = pnand %p268, %p269
      %p271 = pneg %p270
      // Predicated region
      $region9: #{handwritten_math_cnn_forward.1} parent=5 // pred_check
        _
      $region10: #{handwritten_math_cnn_forward.1} parent=5 // pred_check_branch
        %273 = sbr.rel (%p270) target = $region12
      $region11: #{handwritten_math_cnn_forward.1} parent=5 // pred_region
        %s274 = ssub.s32 %s19, 1
        // Predicated region
        $region13: #{handwritten_math_cnn_forward.1} parent=11 // pred_check
          %p275 = pneg %p66
        $region14: #{handwritten_math_cnn_forward.1} parent=11 // pred_check_branch
          %277 = sbr.rel (%p275) target = $region16
        $region15: #{handwritten_math_cnn_forward.1} parent=11 // pred_region
          _
        $region16: #{handwritten_math_cnn_forward.1} parent=11 // pred_fallthru
          _
        // Predicated region
        $region17: #{handwritten_math_cnn_forward.1} parent=11 // pred_check
          %p278 = pneg %p87
        $region18: #{handwritten_math_cnn_forward.1} parent=11 // pred_check_branch
          %280 = sbr.rel (%p278) target = $region20
        $region19: #{handwritten_math_cnn_forward.1} parent=11 // pred_region
          _
        $region20: #{handwritten_math_cnn_forward.1} parent=11 // pred_fallthru
          _
        // Predicated region
        $region21: #{handwritten_math_cnn_forward.1} parent=11 // pred_check
          %p281 = pneg %p108
        $region22: #{handwritten_math_cnn_forward.1} parent=11 // pred_check_branch
          %283 = sbr.rel (%p281) target = $region24
        $region23: #{handwritten_math_cnn_forward.1} parent=11 // pred_region
          _
        $region24: #{handwritten_math_cnn_forward.1} parent=11 // pred_fallthru
          _
        // Predicated region
        $region25: #{handwritten_math_cnn_forward.1} parent=11 // pred_check
          %p284 = pneg %p129
        $region26: #{handwritten_math_cnn_forward.1} parent=11 // pred_check_branch
          %286 = sbr.rel (%p284) target = $region28
        $region27: #{handwritten_math_cnn_forward.1} parent=11 // pred_region
          _
        $region28: #{handwritten_math_cnn_forward.1} parent=11 // pred_fallthru
          _
        // Predicated region
        $region29: #{handwritten_math_cnn_forward.1} parent=11 // pred_check
          %p287 = pneg %p150
        $region30: #{handwritten_math_cnn_forward.1} parent=11 // pred_check_branch
          %289 = sbr.rel (%p287) target = $region32
        $region31: #{handwritten_math_cnn_forward.1} parent=11 // pred_region
          _
        $region32: #{handwritten_math_cnn_forward.1} parent=11 // pred_fallthru
          _
        // Predicated region
        $region33: #{handwritten_math_cnn_forward.1} parent=11 // pred_check
          %p290 = pneg %p171
        $region34: #{handwritten_math_cnn_forward.1} parent=11 // pred_check_branch
          %292 = sbr.rel (%p290) target = $region36
        $region35: #{handwritten_math_cnn_forward.1} parent=11 // pred_region
          _
        $region36: #{handwritten_math_cnn_forward.1} parent=11 // pred_fallthru
          _
        // Predicated region
        $region37: #{handwritten_math_cnn_forward.1} parent=11 // pred_check
          %p293 = pneg %p192
        $region38: #{handwritten_math_cnn_forward.1} parent=11 // pred_check_branch
          %295 = sbr.rel (%p293) target = $region40
        $region39: #{handwritten_math_cnn_forward.1} parent=11 // pred_region
          _
        $region40: #{handwritten_math_cnn_forward.1} parent=11 // pred_fallthru
          _
        // Predicated region
        $region41: #{handwritten_math_cnn_forward.1} parent=11 // pred_check
          %p296 = pneg %p213
        $region42: #{handwritten_math_cnn_forward.1} parent=11 // pred_check_branch
          %298 = sbr.rel (%p296) target = $region44
        $region43: #{handwritten_math_cnn_forward.1} parent=11 // pred_region
          _
        $region44: #{handwritten_math_cnn_forward.1} parent=11 // pred_fallthru
          _
        // Predicated region
        $region45: #{handwritten_math_cnn_forward.1} parent=11 // pred_check
          %p299 = pneg %p234
        $region46: #{handwritten_math_cnn_forward.1} parent=11 // pred_check_branch
          %301 = sbr.rel (%p299) target = $region48
        $region47: #{handwritten_math_cnn_forward.1} parent=11 // pred_region
          _
        $region48: #{handwritten_math_cnn_forward.1} parent=11 // pred_fallthru
          _
      $region12: #{handwritten_math_cnn_forward.1} parent=5 // pred_fallthru
        _
      %p302 = scmp.lt.s32.totalorder %s19, 2
      // Predicated region
      $region49: #{handwritten_math_cnn_forward.1} parent=5 // pred_check
        %p303 = pneg %p302
      $region50: #{handwritten_math_cnn_forward.1} parent=5 // pred_check_branch
        %305 = sbr.rel (%p303) target = $region52
      $region51: #{handwritten_math_cnn_forward.1} parent=5 // pred_region
        // Predicated region
        $region53: #{handwritten_math_cnn_forward.1} parent=51 // pred_check
          %p306 = pneg %p39
        $region54: #{handwritten_math_cnn_forward.1} parent=51 // pred_check_branch
          %308 = sbr.rel (%p306) target = $region56
        $region55: #{handwritten_math_cnn_forward.1} parent=51 // pred_region
          %p309 = scmp.lt.s32.totalorder %s19, 1
          %s310 = scalar_select %p309, %s19, 1
          %s311 = smul.addr %s310, 98
          %s312 = smul.addr %s311, 4
          %s313 = scalar_lea.vmem %s0, %s312
        $region56: #{handwritten_math_cnn_forward.1} parent=51 // pred_fallthru
          _
      $region52: #{handwritten_math_cnn_forward.1} parent=5 // pred_fallthru
        _
      %p314 = scmp.le.s32.totalorder 1, %s19
      %p315 = scmp.lt.s32.totalorder %s19, 3
      %p316 = pnand %p314, %p315
      %p317 = pneg %p316
      // Predicated region
      $region57: #{handwritten_math_cnn_forward.1} parent=5 // pred_check
        _
      $region58: #{handwritten_math_cnn_forward.1} parent=5 // pred_check_branch
        %319 = sbr.rel (%p316) target = $region60
      $region59: #{handwritten_math_cnn_forward.1} parent=5 // pred_region
        %s320 = ssub.s32 %s19, 1
        %p321 = scmp.lt.s32.totalorder %s24, 1
        %s322 = scalar_select %p321, %s24, 1
        %s323 = smul.addr %s322, 98
        %s324 = smul.addr %s323, 4
        %s325 = scalar_lea.vmem %s0, %s324
        %p326 = pneg %p45
        %p327 = pneg %p42
        %p328 = pneg %p66
        %p329 = pneg %p63
        %p330 = pneg %p87
        %p331 = pneg %p84
        %p332 = pneg %p108
        %p333 = pneg %p105
        %p334 = pneg %p129
        %p335 = pneg %p126
        %p336 = pneg %p150
        %p337 = pneg %p147
        %p338 = pneg %p171
        %p339 = pneg %p168
        %p340 = pneg %p192
        %p341 = pneg %p189
        %p342 = pneg %p213
        %p343 = pneg %p210
        %p344 = pneg %p234
        %p345 = pneg %p231
        %p346 = pneg %p260
        %p347 = pneg %p257
        %s348 = sand.u32 %s247, 1
        %s349 = scalar_lea.sflag [#allocation3], %s348
        %s350 = sand.u32 %s247, 1
        %s351 = scalar_lea.vmem [#allocation2], %s350
        %p352 = scmp.lt.s32.totalorder %s24, 1
        %s353 = scalar_select %p352, %s24, 1
        %s354 = smul.addr %s353, 98
        %s355 = smul.addr %s354, 4
        %s356 = scalar_lea.vmem %s0, %s355
        %v358 = vld [vmem:[%s356] sm:$0xf]
        %v359 = vld [vmem:[%s356 + $0x4] sm:$0xf]
        %v360 = vld [vmem:[%s356 + $0x8] sm:$0xf]
        %v361 = vld [vmem:[%s356 + $0xc] sm:$0xf]
        %v362 = vld [vmem:[%s356 + $0x10] sm:$0xf]
        %v363 = vld [vmem:[%s356 + $0x14] sm:$0xf]
        %v364 = vld [vmem:[%s356 + $0x18] sm:$0xf]
        %v365 = vld [vmem:[%s356 + $0x1c] sm:$0xf]
        %v366 = vld [vmem:[%s356 + $0x20] sm:$0xf]
        %v367 = vld [vmem:[%s356 + $0x24] sm:$0xf]
        %v368 = vld [vmem:[%s356 + $0x28] sm:$0xf]
        %v369 = vld [vmem:[%s356 + $0x2c] sm:$0xf]
        %v370 = vld [vmem:[%s356 + $0x30] sm:$0xf]
        %v371 = vld [vmem:[%s356 + $0x34] sm:$0xf]
        %v372 = vld [vmem:[%s356 + $0x38] sm:$0xf]
        %v373 = vld [vmem:[%s356 + $0x3c] sm:$0xf]
        %v374 = vld [vmem:[%s356 + $0x40] sm:$0xf]
        %v375 = vld [vmem:[%s356 + $0x44] sm:$0xf]
        %v376 = vld [vmem:[%s356 + $0x48] sm:$0xf]
        %v377 = vld [vmem:[%s356 + $0x4c] sm:$0xf]
        %v378 = vld [vmem:[%s356 + $0x50] sm:$0xf]
        %v379 = vld [vmem:[%s356 + $0x54] sm:$0xf]
        %v380 = vld [vmem:[%s356 + $0x58] sm:$0xf]
        %v381 = vld [vmem:[%s356 + $0x5c] sm:$0xf]
        %v382 = vld [vmem:[%s356 + $0x60] sm:$0xf]
        %v383 = vld [vmem:[%s356 + $0x64] sm:$0xf]
        %v384 = vld [vmem:[%s356 + $0x68] sm:$0xf]
        %v385 = vld [vmem:[%s356 + $0x6c] sm:$0xf]
        %v386 = vld [vmem:[%s356 + $0x70] sm:$0xf]
        %v387 = vld [vmem:[%s356 + $0x74] sm:$0xf]
        %v388 = vld [vmem:[%s356 + $0x78] sm:$0xf]
        %v389 = vld [vmem:[%s356 + $0x7c] sm:$0xf]
        %v390 = vld [vmem:[%s356 + $0x80] sm:$0xf]
        %v391 = vld [vmem:[%s356 + $0x84] sm:$0xf]
        %v392 = vld [vmem:[%s356 + $0x88] sm:$0xf]
        %v393 = vld [vmem:[%s356 + $0x8c] sm:$0xf]
        %v394 = vld [vmem:[%s356 + $0x90] sm:$0xf]
        %v395 = vld [vmem:[%s356 + $0x94] sm:$0xf]
        %v396 = vld [vmem:[%s356 + $0x98] sm:$0xf]
        %v397 = vld [vmem:[%s356 + $0x9c] sm:$0xf]
        %v398 = vld [vmem:[%s356 + $0xa0] sm:$0xf]
        %v399 = vld [vmem:[%s356 + $0xa4] sm:$0xf]
        %v400 = vld [vmem:[%s356 + $0xa8] sm:$0xf]
        %v401 = vld [vmem:[%s356 + $0xac] sm:$0xf]
        %v402 = vld [vmem:[%s356 + $0xb0] sm:$0xf]
        %v403 = vld [vmem:[%s356 + $0xb4] sm:$0xf]
        %v404 = vld [vmem:[%s356 + $0xb8] sm:$0xf]
        %v405 = vld [vmem:[%s356 + $0xbc] sm:$0xf]
        %v406 = vld [vmem:[%s356 + $0xc0] sm:$0xf]
        %v407 = vld [vmem:[%s356 + $0xc4] sm:$0xf]
        %v408 = vld [vmem:[%s356 + $0xc8] sm:$0xf]
        %v409 = vld [vmem:[%s356 + $0xcc] sm:$0xf]
        %v410 = vld [vmem:[%s356 + $0xd0] sm:$0xf]
        %v411 = vld [vmem:[%s356 + $0xd4] sm:$0xf]
        %v412 = vld [vmem:[%s356 + $0xd8] sm:$0xf]
        %v413 = vld [vmem:[%s356 + $0xdc] sm:$0xf]
        %v414 = vld [vmem:[%s356 + $0xe0] sm:$0xf]
        %v415 = vld [vmem:[%s356 + $0xe4] sm:$0xf]
        %v416 = vld [vmem:[%s356 + $0xe8] sm:$0xf]
        %v417 = vld [vmem:[%s356 + $0xec] sm:$0xf]
        %v418 = vld [vmem:[%s356 + $0xf0] sm:$0xf]
        %v419 = vld [vmem:[%s356 + $0xf4] sm:$0xf]
        %v420 = vld [vmem:[%s356 + $0xf8] sm:$0xf]
        %v421 = vld [vmem:[%s356 + $0xfc] sm:$0xf]
        %v422 = vld [vmem:[%s356 + $0x100] sm:$0xf]
        %v423 = vld [vmem:[%s356 + $0x104] sm:$0xf]
        %v424 = vld [vmem:[%s356 + $0x108] sm:$0xf]
        %v425 = vld [vmem:[%s356 + $0x10c] sm:$0xf]
        %v426 = vld [vmem:[%s356 + $0x110] sm:$0xf]
        %v427 = vld [vmem:[%s356 + $0x114] sm:$0xf]
        %v428 = vld [vmem:[%s356 + $0x118] sm:$0xf]
        %v429 = vld [vmem:[%s356 + $0x11c] sm:$0xf]
        %v430 = vld [vmem:[%s356 + $0x120] sm:$0xf]
        %v431 = vld [vmem:[%s356 + $0x124] sm:$0xf]
        %v432 = vld [vmem:[%s356 + $0x128] sm:$0xf]
        %v433 = vld [vmem:[%s356 + $0x12c] sm:$0xf]
        %v434 = vld [vmem:[%s356 + $0x130] sm:$0xf]
        %v435 = vld [vmem:[%s356 + $0x134] sm:$0xf]
        %v436 = vld [vmem:[%s356 + $0x138] sm:$0xf]
        %v437 = vld [vmem:[%s356 + $0x13c] sm:$0xf]
        %v438 = vld [vmem:[%s356 + $0x140] sm:$0xf]
        %v439 = vld [vmem:[%s356 + $0x144] sm:$0xf]
        %v440 = vld [vmem:[%s356 + $0x148] sm:$0xf]
        %v441 = vld [vmem:[%s356 + $0x14c] sm:$0xf]
        %v442 = vld [vmem:[%s356 + $0x150] sm:$0xf]
        %v443 = vld [vmem:[%s356 + $0x154] sm:$0xf]
        %v444 = vld [vmem:[%s356 + $0x158] sm:$0xf]
        %v445 = vld [vmem:[%s356 + $0x15c] sm:$0xf]
        %v446 = vld [vmem:[%s356 + $0x160] sm:$0xf]
        %v447 = vld [vmem:[%s356 + $0x164] sm:$0xf]
        %v448 = vld [vmem:[%s356 + $0x168] sm:$0xf]
        %v449 = vld [vmem:[%s356 + $0x16c] sm:$0xf]
        %v450 = vld [vmem:[%s356 + $0x170] sm:$0xf]
        %v451 = vld [vmem:[%s356 + $0x174] sm:$0xf]
        %v452 = vld [vmem:[%s356 + $0x178] sm:$0xf]
        %v453 = vld [vmem:[%s356 + $0x17c] sm:$0xf]
        %v454 = vld [vmem:[%s356 + $0x180] sm:$0xf]
        %v455 = vld [vmem:[%s356 + $0x184] sm:$0xf]
        %v456 = vld [vmem:[%s2] sm:$0xf]
        %v457 = vld [vmem:[%s2 + $0x4] sm:$0x1]
        %v458 = vld [vmem:[%s3] sm:$0x1]
        %v460 = vlaneseq
        %v461 = vshrl.u32 %v460, 7
        %v462 = vsub.s32 0, %v461
        %v463 = vrot.slane %v458, %v462
        %v563 = vunpack.c.l.b16 %v358
        %v564 = vunpack.c.l.b16 %v359
        %v565 = vunpack.c.l.b16 %v360
        %v566 = vunpack.c.l.b16 %v361
        %v567 = vunpack.c.l.b16 %v362
        %v568 = vunpack.c.l.b16 %v363
        %v569 = vunpack.c.l.b16 %v364
        %v570 = vunpack.c.l.b16 %v365
        %v571 = vunpack.c.l.b16 %v366
        %v572 = vunpack.c.l.b16 %v367
        %v573 = vunpack.c.l.b16 %v368
        %v574 = vunpack.c.l.b16 %v369
        %v575 = vunpack.c.l.b16 %v370
        %v576 = vunpack.c.l.b16 %v371
        %v577 = vunpack.c.l.b16 %v372
        %v578 = vunpack.c.l.b16 %v373
        %v579 = vunpack.c.l.b16 %v374
        %v580 = vunpack.c.l.b16 %v375
        %v581 = vunpack.c.l.b16 %v376
        %v582 = vunpack.c.l.b16 %v377
        %v583 = vunpack.c.l.b16 %v378
        %v584 = vunpack.c.l.b16 %v379
        %v585 = vunpack.c.l.b16 %v380
        %v586 = vunpack.c.l.b16 %v381
        %v587 = vunpack.c.l.b16 %v382
        %v588 = vunpack.c.l.b16 %v383
        %v589 = vunpack.c.l.b16 %v384
        %v590 = vunpack.c.l.b16 %v385
        %v591 = vunpack.c.l.b16 %v386
        %v592 = vunpack.c.l.b16 %v387
        %v593 = vunpack.c.l.b16 %v388
        %v594 = vunpack.c.l.b16 %v389
        %v595 = vunpack.c.l.b16 %v390
        %v596 = vunpack.c.l.b16 %v391
        %v597 = vunpack.c.l.b16 %v392
        %v598 = vunpack.c.l.b16 %v393
        %v599 = vunpack.c.l.b16 %v394
        %v600 = vunpack.c.l.b16 %v395
        %v601 = vunpack.c.l.b16 %v396
        %v602 = vunpack.c.l.b16 %v397
        %v603 = vunpack.c.l.b16 %v398
        %v604 = vunpack.c.l.b16 %v399
        %v605 = vunpack.c.l.b16 %v400
        %v606 = vunpack.c.l.b16 %v401
        %v607 = vunpack.c.l.b16 %v402
        %v608 = vunpack.c.l.b16 %v403
        %v609 = vunpack.c.l.b16 %v404
        %v610 = vunpack.c.l.b16 %v405
        %v611 = vunpack.c.l.b16 %v406
        %v612 = vunpack.c.l.b16 %v407
        %v613 = vunpack.c.l.b16 %v408
        %v614 = vunpack.c.l.b16 %v409
        %v615 = vunpack.c.l.b16 %v410
        %v616 = vunpack.c.l.b16 %v411
        %v617 = vunpack.c.l.b16 %v412
        %v618 = vunpack.c.l.b16 %v413
        %v619 = vunpack.c.l.b16 %v414
        %v620 = vunpack.c.l.b16 %v415
        %v621 = vunpack.c.l.b16 %v416
        %v622 = vunpack.c.l.b16 %v417
        %v623 = vunpack.c.l.b16 %v418
        %v624 = vunpack.c.l.b16 %v419
        %v625 = vunpack.c.l.b16 %v420
        %v626 = vunpack.c.l.b16 %v421
        %v627 = vunpack.c.l.b16 %v422
        %v628 = vunpack.c.l.b16 %v423
        %v629 = vunpack.c.l.b16 %v424
        %v630 = vunpack.c.l.b16 %v425
        %v631 = vunpack.c.l.b16 %v426
        %v632 = vunpack.c.l.b16 %v427
        %v633 = vunpack.c.l.b16 %v428
        %v634 = vunpack.c.l.b16 %v429
        %v635 = vunpack.c.l.b16 %v430
        %v636 = vunpack.c.l.b16 %v431
        %v637 = vunpack.c.l.b16 %v432
        %v638 = vunpack.c.l.b16 %v433
        %v639 = vunpack.c.l.b16 %v434
        %v640 = vunpack.c.l.b16 %v435
        %v641 = vunpack.c.l.b16 %v436
        %v642 = vunpack.c.l.b16 %v437
        %v643 = vunpack.c.l.b16 %v438
        %v644 = vunpack.c.l.b16 %v439
        %v645 = vunpack.c.l.b16 %v440
        %v646 = vunpack.c.l.b16 %v441
        %v647 = vunpack.c.l.b16 %v442
        %v648 = vunpack.c.l.b16 %v443
        %v649 = vunpack.c.l.b16 %v444
        %v650 = vunpack.c.l.b16 %v445
        %v651 = vunpack.c.l.b16 %v446
        %v652 = vunpack.c.l.b16 %v447
        %v653 = vunpack.c.l.b16 %v448
        %v654 = vunpack.c.l.b16 %v449
        %v655 = vunpack.c.l.b16 %v450
        %v656 = vunpack.c.l.b16 %v451
        %v657 = vunpack.c.l.b16 %v452
        %v658 = vunpack.c.l.b16 %v453
        %v659 = vunpack.c.l.b16 %v454
        %v660 = vunpack.c.l.b16 %v455
        %v661 = vpack.c.b16 %v564, %v563
        %v662 = vpack.c.b16 %v566, %v565
        %v663 = vpack.c.b16 %v568, %v567
        %v664 = vpack.c.b16 %v570, %v569
        %v665 = vpack.c.b16 %v572, %v571
        %v666 = vpack.c.b16 %v574, %v573
        %v667 = vpack.c.b16 %v576, %v575
        %v668 = vpack.c.b16 %v578, %v577
        %v669 = vpack.c.b16 %v580, %v579
        %v670 = vpack.c.b16 %v582, %v581
        %v671 = vpack.c.b16 %v584, %v583
        %v672 = vpack.c.b16 %v586, %v585
        %v673 = vpack.c.b16 %v588, %v587
        %v674 = vpack.c.b16 %v590, %v589
        %v675 = vpack.c.b16 %v592, %v591
        %v676 = vpack.c.b16 %v594, %v593
        %v677 = vpack.c.b16 %v596, %v595
        %v678 = vpack.c.b16 %v598, %v597
        %v679 = vpack.c.b16 %v600, %v599
        %v680 = vpack.c.b16 %v602, %v601
        %v681 = vpack.c.b16 %v604, %v603
        %v682 = vpack.c.b16 %v606, %v605
        %v683 = vpack.c.b16 %v608, %v607
        %v684 = vpack.c.b16 %v610, %v609
        %v685 = vpack.c.b16 %v612, %v611
        %v686 = vpack.c.b16 %v614, %v613
        %v687 = vpack.c.b16 %v616, %v615
        %v688 = vpack.c.b16 %v618, %v617
        %v689 = vpack.c.b16 %v620, %v619
        %v690 = vpack.c.b16 %v622, %v621
        %v691 = vpack.c.b16 %v624, %v623
        %v692 = vpack.c.b16 %v626, %v625
        %v693 = vpack.c.b16 %v628, %v627
        %v694 = vpack.c.b16 %v630, %v629
        %v695 = vpack.c.b16 %v632, %v631
        %v696 = vpack.c.b16 %v634, %v633
        %v697 = vpack.c.b16 %v636, %v635
        %v698 = vpack.c.b16 %v638, %v637
        %v699 = vpack.c.b16 %v640, %v639
        %v700 = vpack.c.b16 %v642, %v641
        %v701 = vpack.c.b16 %v644, %v643
        %v702 = vpack.c.b16 %v646, %v645
        %v703 = vpack.c.b16 %v648, %v647
        %v704 = vpack.c.b16 %v650, %v649
        %v705 = vpack.c.b16 %v652, %v651
        %v706 = vpack.c.b16 %v654, %v653
        %v707 = vpack.c.b16 %v656, %v655
        %v708 = vpack.c.b16 %v658, %v657
        %v709 = vpack.c.b16 %v660, %v659
        %v712 = vunpack.c.l.b16 %v456
        %v713 = vunpack.c.l.b16 %v457
        %v714 = vpack.c.b16 %v713, %v712
        %vm715 = vcmask 72704
        %v717 = vsel %vm715, %v661, 0
        %v720 = vsel %vm715, %v662, 0
        %v723 = vsel %vm715, %v663, 0
        %v726 = vsel %vm715, %v664, 0
        %v729 = vsel %vm715, %v665, 0
        %v732 = vsel %vm715, %v666, 0
        %v735 = vsel %vm715, %v667, 0
        %v738 = vsel %vm715, %v668, 0
        %v741 = vsel %vm715, %v669, 0
        %v744 = vsel %vm715, %v670, 0
        %v747 = vsel %vm715, %v671, 0
        %v750 = vsel %vm715, %v672, 0
        %v753 = vsel %vm715, %v673, 0
        %v756 = vsel %vm715, %v674, 0
        %v759 = vsel %vm715, %v675, 0
        %v762 = vsel %vm715, %v676, 0
        %v765 = vsel %vm715, %v677, 0
        %v768 = vsel %vm715, %v678, 0
        %v771 = vsel %vm715, %v679, 0
        %v774 = vsel %vm715, %v680, 0
        %v777 = vsel %vm715, %v681, 0
        %v780 = vsel %vm715, %v682, 0
        %v783 = vsel %vm715, %v683, 0
        %v786 = vsel %vm715, %v684, 0
        %v789 = vsel %vm715, %v685, 0
        %v792 = vsel %vm715, %v686, 0
        %v795 = vsel %vm715, %v687, 0
        %v798 = vsel %vm715, %v688, 0
        %v801 = vsel %vm715, %v689, 0
        %v804 = vsel %vm715, %v690, 0
        %v807 = vsel %vm715, %v691, 0
        %v810 = vsel %vm715, %v692, 0
        %v813 = vsel %vm715, %v693, 0
        %v816 = vsel %vm715, %v694, 0
        %v819 = vsel %vm715, %v695, 0
        %v822 = vsel %vm715, %v696, 0
        %v825 = vsel %vm715, %v697, 0
        %v828 = vsel %vm715, %v698, 0
        %v831 = vsel %vm715, %v699, 0
        %v834 = vsel %vm715, %v700, 0
        %v837 = vsel %vm715, %v701, 0
        %v840 = vsel %vm715, %v702, 0
        %v843 = vsel %vm715, %v703, 0
        %v846 = vsel %vm715, %v704, 0
        %v849 = vsel %vm715, %v705, 0
        %v852 = vsel %vm715, %v706, 0
        %v855 = vsel %vm715, %v707, 0
        %v858 = vsel %vm715, %v708, 0
        %v861 = vsel %vm715, %v709, 0
        %vm863 = vcmask 1043456
        %vm864 = vcmask 1044480
        %v865 = vsel %vm863, 4294967295, 65535
        %v866 = vsel %vm864, %v865, 0
        %v868 = vand.u32 %v714, %v866
        %870 = vmatprep.subr.bf16.mxu0 0
        %871 = vmatpush1.bf16.msra.mxu0 %v868
        %872 = vmatprep.subr.bf16.mxu0 0
        %873 = vmatpush1.bf16.msra.mxu0 0
        %874 = vmatprep.subr.bf16.mxu0 0
        %875 = vmatpush1.bf16.msra.mxu0 0
        %876 = vmatprep.subr.bf16.mxu0 0
        %877 = vmatpush1.bf16.msra.mxu0 0
        %878 = vmatprep.subr.bf16.mxu0 0
        %879 = vmatpush1.bf16.msra.mxu0 0
        %880 = vmatprep.subr.bf16.mxu0 0
        %881 = vmatpush1.bf16.msra.mxu0 0
        %882 = vmatprep.subr.bf16.mxu0 0
        %883 = vmatpush1.bf16.msra.mxu0 0
        %884 = vmatprep.subr.bf16.mxu0 0
        %885 = vmatpush1.bf16.msra.mxu0 0
        %886 = vmatprep.subr.bf16.mxu0 0
        %887 = vmatpush1.bf16.msra.mxu0 0
        %888 = vmatprep.subr.bf16.mxu0 0
        %889 = vmatpush1.bf16.msra.mxu0 0
        %890 = vmatprep.subr.bf16.mxu0 0
        %891 = vmatpush1.bf16.msra.mxu0 0
        %892 = vmatprep.subr.bf16.mxu0 0
        %893 = vmatpush1.bf16.msra.mxu0 0
        %894 = vmatprep.subr.bf16.mxu0 0
        %895 = vmatpush1.bf16.msra.mxu0 0
        %896 = vmatprep.subr.bf16.mxu0 0
        %897 = vmatpush1.bf16.msra.mxu0 0
        %898 = vmatprep.subr.bf16.mxu0 0
        %899 = vmatpush1.bf16.msra.mxu0 0
        %900 = vmatprep.subr.bf16.mxu0 0
        %901 = vmatpush1.bf16.msra.mxu0 0
        %902 = vmatprep.mubr.bf16.mxu0 0
        %903 = vmatmul.mubr.bf16.gmra.mrb[0].mxu0 %v717
        %v904 = vpop.f32.mrb[0].mxu0
        %v905 = vadd.f32 %v463, %v904
        %v906 = vpop.f32.mrb[0].mxu0
        %v907 = vpop.f32.mrb[0].mxu0
        %v908 = vadd.f32 %v463, %v907
        %v909 = vpop.f32.mrb[0].mxu0
        %910 = vmatprep.mubr.bf16.mxu0 0
        %911 = vmatmul.mubr.bf16.gmra.mrb[0].mxu0 %v720
        %v912 = vpop.f32.mrb[0].mxu0
        %v913 = vadd.f32 %v463, %v912
        %v914 = vpop.f32.mrb[0].mxu0
        %v915 = vpop.f32.mrb[0].mxu0
        %v916 = vadd.f32 %v463, %v915
        %v917 = vpop.f32.mrb[0].mxu0
        %918 = vmatprep.mubr.bf16.mxu0 0
        %919 = vmatmul.mubr.bf16.gmra.mrb[0].mxu0 %v723
        %v920 = vpop.f32.mrb[0].mxu0
        %v921 = vadd.f32 %v463, %v920
        %v922 = vpop.f32.mrb[0].mxu0
        %v923 = vpop.f32.mrb[0].mxu0
        %v924 = vadd.f32 %v463, %v923
        %v925 = vpop.f32.mrb[0].mxu0
        %926 = vmatprep.mubr.bf16.mxu0 0
        %927 = vmatmul.mubr.bf16.gmra.mrb[0].mxu0 %v726
        %v928 = vpop.f32.mrb[0].mxu0
        %v929 = vadd.f32 %v463, %v928
        %v930 = vpop.f32.mrb[0].mxu0
        %v931 = vpop.f32.mrb[0].mxu0
        %v932 = vadd.f32 %v463, %v931
        %v933 = vpop.f32.mrb[0].mxu0
        %934 = vmatprep.mubr.bf16.mxu0 0
        %935 = vmatmul.mubr.bf16.gmra.mrb[0].mxu0 %v729
        %v936 = vpop.f32.mrb[0].mxu0
        %v937 = vadd.f32 %v463, %v936
        %v938 = vpop.f32.mrb[0].mxu0
        %v939 = vpop.f32.mrb[0].mxu0
        %v940 = vadd.f32 %v463, %v939
        %v941 = vpop.f32.mrb[0].mxu0
        %942 = vmatprep.mubr.bf16.mxu0 0
        %943 = vmatmul.mubr.bf16.gmra.mrb[0].mxu0 %v732
        %v944 = vpop.f32.mrb[0].mxu0
        %v945 = vadd.f32 %v463, %v944
        %v946 = vpop.f32.mrb[0].mxu0
        %v947 = vpop.f32.mrb[0].mxu0
        %v948 = vadd.f32 %v463, %v947
        %v949 = vpop.f32.mrb[0].mxu0
        %950 = vmatprep.mubr.bf16.mxu0 0
        %951 = vmatmul.mubr.bf16.gmra.mrb[0].mxu0 %v735
        %v952 = vpop.f32.mrb[0].mxu0
        %v953 = vadd.f32 %v463, %v952
        %v954 = vpop.f32.mrb[0].mxu0
        %v955 = vpop.f32.mrb[0].mxu0
        %v956 = vadd.f32 %v463, %v955
        %v957 = vpop.f32.mrb[0].mxu0
        %958 = vmatprep.mubr.bf16.mxu0 0
        %959 = vmatmul.mubr.bf16.gmra.mrb[0].mxu0 %v738
        %v960 = vpop.f32.mrb[0].mxu0
        %v961 = vadd.f32 %v463, %v960
        %v962 = vpop.f32.mrb[0].mxu0
        %v963 = vpop.f32.mrb[0].mxu0
        %v964 = vadd.f32 %v463, %v963
        %v965 = vpop.f32.mrb[0].mxu0
        %966 = vmatprep.mubr.bf16.mxu0 0
        %967 = vmatmul.mubr.bf16.gmra.mrb[0].mxu0 %v741
        %v968 = vpop.f32.mrb[0].mxu0
        %v969 = vadd.f32 %v463, %v968
        %v970 = vpop.f32.mrb[0].mxu0
        %v971 = vpop.f32.mrb[0].mxu0
        %v972 = vadd.f32 %v463, %v971
        %v973 = vpop.f32.mrb[0].mxu0
        %974 = vmatprep.mubr.bf16.mxu0 0
        %975 = vmatmul.mubr.bf16.gmra.mrb[0].mxu0 %v744
        %v976 = vpop.f32.mrb[0].mxu0
        %v977 = vadd.f32 %v463, %v976
        %v978 = vpop.f32.mrb[0].mxu0
        %v979 = vpop.f32.mrb[0].mxu0
        %v980 = vadd.f32 %v463, %v979
        %v981 = vpop.f32.mrb[0].mxu0
        %982 = vmatprep.mubr.bf16.mxu0 0
        %983 = vmatmul.mubr.bf16.gmra.mrb[0].mxu0 %v747
        %v984 = vpop.f32.mrb[0].mxu0
        %v985 = vadd.f32 %v463, %v984
        %v986 = vpop.f32.mrb[0].mxu0
        %v987 = vpop.f32.mrb[0].mxu0
        %v988 = vadd.f32 %v463, %v987
        %v989 = vpop.f32.mrb[0].mxu0
        %990 = vmatprep.mubr.bf16.mxu0 0
        %991 = vmatmul.mubr.bf16.gmra.mrb[0].mxu0 %v750
        %v992 = vpop.f32.mrb[0].mxu0
        %v993 = vadd.f32 %v463, %v992
        %v994 = vpop.f32.mrb[0].mxu0
        %v995 = vpop.f32.mrb[0].mxu0
        %v996 = vadd.f32 %v463, %v995
        %v997 = vpop.f32.mrb[0].mxu0
        %998 = vmatprep.mubr.bf16.mxu0 0
        %999 = vmatmul.mubr.bf16.gmra.mrb[0].mxu0 %v753
        %v1000 = vpop.f32.mrb[0].mxu0
        %v1001 = vadd.f32 %v463, %v1000
        %v1002 = vpop.f32.mrb[0].mxu0
        %v1003 = vpop.f32.mrb[0].mxu0
        %v1004 = vadd.f32 %v463, %v1003
        %v1005 = vpop.f32.mrb[0].mxu0
        %1006 = vmatprep.mubr.bf16.mxu0 0
        %1007 = vmatmul.mubr.bf16.gmra.mrb[0].mxu0 %v756
        %v1008 = vpop.f32.mrb[0].mxu0
        %v1009 = vadd.f32 %v463, %v1008
        %v1010 = vpop.f32.mrb[0].mxu0
        %v1011 = vpop.f32.mrb[0].mxu0
        %v1012 = vadd.f32 %v463, %v1011
        %v1013 = vpop.f32.mrb[0].mxu0
        %1014 = vmatprep.mubr.bf16.mxu0 0
        %1015 = vmatmul.mubr.bf16.gmra.mrb[0].mxu0 %v759
        %v1016 = vpop.f32.mrb[0].mxu0
        %v1017 = vadd.f32 %v463, %v1016
        %v1018 = vpop.f32.mrb[0].mxu0
        %v1019 = vpop.f32.mrb[0].mxu0
        %v1020 = vadd.f32 %v463, %v1019
        %v1021 = vpop.f32.mrb[0].mxu0
        %1022 = vmatprep.mubr.bf16.mxu0 0
        %1023 = vmatmul.mubr.bf16.gmra.mrb[0].mxu0 %v762
        %v1024 = vpop.f32.mrb[0].mxu0
        %v1025 = vadd.f32 %v463, %v1024
        %v1026 = vpop.f32.mrb[0].mxu0
        %v1027 = vpop.f32.mrb[0].mxu0
        %v1028 = vadd.f32 %v463, %v1027
        %v1029 = vpop.f32.mrb[0].mxu0
        %1030 = vmatprep.mubr.bf16.mxu0 0
        %1031 = vmatmul.mubr.bf16.gmra.mrb[0].mxu0 %v765
        %v1032 = vpop.f32.mrb[0].mxu0
        %v1033 = vadd.f32 %v463, %v1032
        %v1034 = vpop.f32.mrb[0].mxu0
        %v1035 = vpop.f32.mrb[0].mxu0
        %v1036 = vadd.f32 %v463, %v1035
        %v1037 = vpop.f32.mrb[0].mxu0
        %1038 = vmatprep.mubr.bf16.mxu0 0
        %1039 = vmatmul.mubr.bf16.gmra.mrb[0].mxu0 %v768
        %v1040 = vpop.f32.mrb[0].mxu0
        %v1041 = vadd.f32 %v463, %v1040
        %v1042 = vpop.f32.mrb[0].mxu0
        %v1043 = vpop.f32.mrb[0].mxu0
        %v1044 = vadd.f32 %v463, %v1043
        %v1045 = vpop.f32.mrb[0].mxu0
        %1046 = vmatprep.mubr.bf16.mxu0 0
        %1047 = vmatmul.mubr.bf16.gmra.mrb[0].mxu0 %v771
        %v1048 = vpop.f32.mrb[0].mxu0
        %v1049 = vadd.f32 %v463, %v1048
        %v1050 = vpop.f32.mrb[0].mxu0
        %v1051 = vpop.f32.mrb[0].mxu0
        %v1052 = vadd.f32 %v463, %v1051
        %v1053 = vpop.f32.mrb[0].mxu0
        %1054 = vmatprep.mubr.bf16.mxu0 0
        %1055 = vmatmul.mubr.bf16.gmra.mrb[0].mxu0 %v774
        %v1056 = vpop.f32.mrb[0].mxu0
        %v1057 = vadd.f32 %v463, %v1056
        %v1058 = vpop.f32.mrb[0].mxu0
        %v1059 = vpop.f32.mrb[0].mxu0
        %v1060 = vadd.f32 %v463, %v1059
        %v1061 = vpop.f32.mrb[0].mxu0
        %1062 = vmatprep.mubr.bf16.mxu0 0
        %1063 = vmatmul.mubr.bf16.gmra.mrb[0].mxu0 %v777
        %v1064 = vpop.f32.mrb[0].mxu0
        %v1065 = vadd.f32 %v463, %v1064
        %v1066 = vpop.f32.mrb[0].mxu0
        %v1067 = vpop.f32.mrb[0].mxu0
        %v1068 = vadd.f32 %v463, %v1067
        %v1069 = vpop.f32.mrb[0].mxu0
        %1070 = vmatprep.mubr.bf16.mxu0 0
        %1071 = vmatmul.mubr.bf16.gmra.mrb[0].mxu0 %v780
        %v1072 = vpop.f32.mrb[0].mxu0
        %v1073 = vadd.f32 %v463, %v1072
        %v1074 = vpop.f32.mrb[0].mxu0
        %v1075 = vpop.f32.mrb[0].mxu0
        %v1076 = vadd.f32 %v463, %v1075
        %v1077 = vpop.f32.mrb[0].mxu0
        %1078 = vmatprep.mubr.bf16.mxu0 0
        %1079 = vmatmul.mubr.bf16.gmra.mrb[0].mxu0 %v783
        %v1080 = vpop.f32.mrb[0].mxu0
        %v1081 = vadd.f32 %v463, %v1080
        %v1082 = vpop.f32.mrb[0].mxu0
        %v1083 = vpop.f32.mrb[0].mxu0
        %v1084 = vadd.f32 %v463, %v1083
        %v1085 = vpop.f32.mrb[0].mxu0
        %1086 = vmatprep.mubr.bf16.mxu0 0
        %1087 = vmatmul.mubr.bf16.gmra.mrb[0].mxu0 %v786
        %v1088 = vpop.f32.mrb[0].mxu0
        %v1089 = vadd.f32 %v463, %v1088
        %v1090 = vpop.f32.mrb[0].mxu0
        %v1091 = vpop.f32.mrb[0].mxu0
        %v1092 = vadd.f32 %v463, %v1091
        %v1093 = vpop.f32.mrb[0].mxu0
        %1094 = vmatprep.mubr.bf16.mxu0 0
        %1095 = vmatmul.mubr.bf16.gmra.mrb[0].mxu0 %v789
        %v1096 = vpop.f32.mrb[0].mxu0
        %v1097 = vadd.f32 %v463, %v1096
        %v1098 = vpop.f32.mrb[0].mxu0
        %v1099 = vpop.f32.mrb[0].mxu0
        %v1100 = vadd.f32 %v463, %v1099
        %v1101 = vpop.f32.mrb[0].mxu0
        %1102 = vmatprep.mubr.bf16.mxu0 0
        %1103 = vmatmul.mubr.bf16.gmra.mrb[0].mxu0 %v792
        %v1104 = vpop.f32.mrb[0].mxu0
        %v1105 = vadd.f32 %v463, %v1104
        %v1106 = vpop.f32.mrb[0].mxu0
        %v1107 = vpop.f32.mrb[0].mxu0
        %v1108 = vadd.f32 %v463, %v1107
        %v1109 = vpop.f32.mrb[0].mxu0
        %1110 = vmatprep.mubr.bf16.mxu0 0
        %1111 = vmatmul.mubr.bf16.gmra.mrb[0].mxu0 %v795
        %v1112 = vpop.f32.mrb[0].mxu0
        %v1113 = vadd.f32 %v463, %v1112
        %v1114 = vpop.f32.mrb[0].mxu0
        %v1115 = vpop.f32.mrb[0].mxu0
        %v1116 = vadd.f32 %v463, %v1115
        %v1117 = vpop.f32.mrb[0].mxu0
        %1118 = vmatprep.mubr.bf16.mxu0 0
        %1119 = vmatmul.mubr.bf16.gmra.mrb[0].mxu0 %v798
        %v1120 = vpop.f32.mrb[0].mxu0
        %v1121 = vadd.f32 %v463, %v1120
        %v1122 = vpop.f32.mrb[0].mxu0
        %v1123 = vpop.f32.mrb[0].mxu0
        %v1124 = vadd.f32 %v463, %v1123
        %v1125 = vpop.f32.mrb[0].mxu0
        %1126 = vmatprep.mubr.bf16.mxu0 0
        %1127 = vmatmul.mubr.bf16.gmra.mrb[0].mxu0 %v801
        %v1128 = vpop.f32.mrb[0].mxu0
        %v1129 = vadd.f32 %v463, %v1128
        %v1130 = vpop.f32.mrb[0].mxu0
        %v1131 = vpop.f32.mrb[0].mxu0
        %v1132 = vadd.f32 %v463, %v1131
        %v1133 = vpop.f32.mrb[0].mxu0
        %1134 = vmatprep.mubr.bf16.mxu0 0
        %1135 = vmatmul.mubr.bf16.gmra.mrb[0].mxu0 %v804
        %v1136 = vpop.f32.mrb[0].mxu0
        %v1137 = vadd.f32 %v463, %v1136
        %v1138 = vpop.f32.mrb[0].mxu0
        %v1139 = vpop.f32.mrb[0].mxu0
        %v1140 = vadd.f32 %v463, %v1139
        %v1141 = vpop.f32.mrb[0].mxu0
        %1142 = vmatprep.mubr.bf16.mxu0 0
        %1143 = vmatmul.mubr.bf16.gmra.mrb[0].mxu0 %v807
        %v1144 = vpop.f32.mrb[0].mxu0
        %v1145 = vadd.f32 %v463, %v1144
        %v1146 = vpop.f32.mrb[0].mxu0
        %v1147 = vpop.f32.mrb[0].mxu0
        %v1148 = vadd.f32 %v463, %v1147
        %v1149 = vpop.f32.mrb[0].mxu0
        %1150 = vmatprep.mubr.bf16.mxu0 0
        %1151 = vmatmul.mubr.bf16.gmra.mrb[0].mxu0 %v810
        %v1152 = vpop.f32.mrb[0].mxu0
        %v1153 = vadd.f32 %v463, %v1152
        %v1154 = vpop.f32.mrb[0].mxu0
        %v1155 = vpop.f32.mrb[0].mxu0
        %v1156 = vadd.f32 %v463, %v1155
        %v1157 = vpop.f32.mrb[0].mxu0
        %1158 = vmatprep.mubr.bf16.mxu0 0
        %1159 = vmatmul.mubr.bf16.gmra.mrb[0].mxu0 %v813
        %v1160 = vpop.f32.mrb[0].mxu0
        %v1161 = vadd.f32 %v463, %v1160
        %v1162 = vpop.f32.mrb[0].mxu0
        %v1163 = vpop.f32.mrb[0].mxu0
        %v1164 = vadd.f32 %v463, %v1163
        %v1165 = vpop.f32.mrb[0].mxu0
        %1166 = vmatprep.mubr.bf16.mxu0 0
        %1167 = vmatmul.mubr.bf16.gmra.mrb[0].mxu0 %v816
        %v1168 = vpop.f32.mrb[0].mxu0
        %v1169 = vadd.f32 %v463, %v1168
        %v1170 = vpop.f32.mrb[0].mxu0
        %v1171 = vpop.f32.mrb[0].mxu0
        %v1172 = vadd.f32 %v463, %v1171
        %v1173 = vpop.f32.mrb[0].mxu0
        %1174 = vmatprep.mubr.bf16.mxu0 0
        %1175 = vmatmul.mubr.bf16.gmra.mrb[0].mxu0 %v819
        %v1176 = vpop.f32.mrb[0].mxu0
        %v1177 = vadd.f32 %v463, %v1176
        %v1178 = vpop.f32.mrb[0].mxu0
        %v1179 = vpop.f32.mrb[0].mxu0
        %v1180 = vadd.f32 %v463, %v1179
        %v1181 = vpop.f32.mrb[0].mxu0
        %1182 = vmatprep.mubr.bf16.mxu0 0
        %1183 = vmatmul.mubr.bf16.gmra.mrb[0].mxu0 %v822
        %v1184 = vpop.f32.mrb[0].mxu0
        %v1185 = vadd.f32 %v463, %v1184
        %v1186 = vpop.f32.mrb[0].mxu0
        %v1187 = vpop.f32.mrb[0].mxu0
        %v1188 = vadd.f32 %v463, %v1187
        %v1189 = vpop.f32.mrb[0].mxu0
        %1190 = vmatprep.mubr.bf16.mxu0 0
        %1191 = vmatmul.mubr.bf16.gmra.mrb[0].mxu0 %v825
        %v1192 = vpop.f32.mrb[0].mxu0
        %v1193 = vadd.f32 %v463, %v1192
        %v1194 = vpop.f32.mrb[0].mxu0
        %v1195 = vpop.f32.mrb[0].mxu0
        %v1196 = vadd.f32 %v463, %v1195
        %v1197 = vpop.f32.mrb[0].mxu0
        %1198 = vmatprep.mubr.bf16.mxu0 0
        %1199 = vmatmul.mubr.bf16.gmra.mrb[0].mxu0 %v828
        %v1200 = vpop.f32.mrb[0].mxu0
        %v1201 = vadd.f32 %v463, %v1200
        %v1202 = vpop.f32.mrb[0].mxu0
        %v1203 = vpop.f32.mrb[0].mxu0
        %v1204 = vadd.f32 %v463, %v1203
        %v1205 = vpop.f32.mrb[0].mxu0
        %1206 = vmatprep.mubr.bf16.mxu0 0
        %1207 = vmatmul.mubr.bf16.gmra.mrb[0].mxu0 %v831
        %v1208 = vpop.f32.mrb[0].mxu0
        %v1209 = vadd.f32 %v463, %v1208
        %v1210 = vpop.f32.mrb[0].mxu0
        %v1211 = vpop.f32.mrb[0].mxu0
        %v1212 = vadd.f32 %v463, %v1211
        %v1213 = vpop.f32.mrb[0].mxu0
        %1214 = vmatprep.mubr.bf16.mxu0 0
        %1215 = vmatmul.mubr.bf16.gmra.mrb[0].mxu0 %v834
        %v1216 = vpop.f32.mrb[0].mxu0
        %v1217 = vadd.f32 %v463, %v1216
        %v1218 = vpop.f32.mrb[0].mxu0
        %v1219 = vpop.f32.mrb[0].mxu0
        %v1220 = vadd.f32 %v463, %v1219
        %v1221 = vpop.f32.mrb[0].mxu0
        %1222 = vmatprep.mubr.bf16.mxu0 0
        %1223 = vmatmul.mubr.bf16.gmra.mrb[0].mxu0 %v837
        %v1224 = vpop.f32.mrb[0].mxu0
        %v1225 = vadd.f32 %v463, %v1224
        %v1226 = vpop.f32.mrb[0].mxu0
        %v1227 = vpop.f32.mrb[0].mxu0
        %v1228 = vadd.f32 %v463, %v1227
        %v1229 = vpop.f32.mrb[0].mxu0
        %1230 = vmatprep.mubr.bf16.mxu0 0
        %1231 = vmatmul.mubr.bf16.gmra.mrb[0].mxu0 %v840
        %v1232 = vpop.f32.mrb[0].mxu0
        %v1233 = vadd.f32 %v463, %v1232
        %v1234 = vpop.f32.mrb[0].mxu0
        %v1235 = vpop.f32.mrb[0].mxu0
        %v1236 = vadd.f32 %v463, %v1235
        %v1237 = vpop.f32.mrb[0].mxu0
        %1238 = vmatprep.mubr.bf16.mxu0 0
        %1239 = vmatmul.mubr.bf16.gmra.mrb[0].mxu0 %v843
        %v1240 = vpop.f32.mrb[0].mxu0
        %v1241 = vadd.f32 %v463, %v1240
        %v1242 = vpop.f32.mrb[0].mxu0
        %v1243 = vpop.f32.mrb[0].mxu0
        %v1244 = vadd.f32 %v463, %v1243
        %v1245 = vpop.f32.mrb[0].mxu0
        %1246 = vmatprep.mubr.bf16.mxu0 0
        %1247 = vmatmul.mubr.bf16.gmra.mrb[0].mxu0 %v846
        %v1248 = vpop.f32.mrb[0].mxu0
        %v1249 = vadd.f32 %v463, %v1248
        %v1250 = vpop.f32.mrb[0].mxu0
        %v1251 = vpop.f32.mrb[0].mxu0
        %v1252 = vadd.f32 %v463, %v1251
        %v1253 = vpop.f32.mrb[0].mxu0
        %1254 = vmatprep.mubr.bf16.mxu0 0
        %1255 = vmatmul.mubr.bf16.gmra.mrb[0].mxu0 %v849
        %v1256 = vpop.f32.mrb[0].mxu0
        %v1257 = vadd.f32 %v463, %v1256
        %v1258 = vpop.f32.mrb[0].mxu0
        %v1259 = vpop.f32.mrb[0].mxu0
        %v1260 = vadd.f32 %v463, %v1259
        %v1261 = vpop.f32.mrb[0].mxu0
        %1262 = vmatprep.mubr.bf16.mxu0 0
        %1263 = vmatmul.mubr.bf16.gmra.mrb[0].mxu0 %v852
        %v1264 = vpop.f32.mrb[0].mxu0
        %v1265 = vadd.f32 %v463, %v1264
        %v1266 = vpop.f32.mrb[0].mxu0
        %v1267 = vpop.f32.mrb[0].mxu0
        %v1268 = vadd.f32 %v463, %v1267
        %v1269 = vpop.f32.mrb[0].mxu0
        %1270 = vmatprep.mubr.bf16.mxu0 0
        %1271 = vmatmul.mubr.bf16.gmra.mrb[0].mxu0 %v855
        %v1272 = vpop.f32.mrb[0].mxu0
        %v1273 = vadd.f32 %v463, %v1272
        %v1274 = vpop.f32.mrb[0].mxu0
        %v1275 = vpop.f32.mrb[0].mxu0
        %v1276 = vadd.f32 %v463, %v1275
        %v1277 = vpop.f32.mrb[0].mxu0
        %1278 = vmatprep.mubr.bf16.mxu0 0
        %1279 = vmatmul.mubr.bf16.gmra.mrb[0].mxu0 %v858
        %v1280 = vpop.f32.mrb[0].mxu0
        %v1281 = vadd.f32 %v463, %v1280
        %v1282 = vpop.f32.mrb[0].mxu0
        %v1283 = vpop.f32.mrb[0].mxu0
        %v1284 = vadd.f32 %v463, %v1283
        %v1285 = vpop.f32.mrb[0].mxu0
        %1286 = vmatprep.mubr.bf16.mxu0 0
        %1287 = vmatmul.mubr.bf16.gmra.mrb[0].mxu0 %v861
        %v1288 = vpop.f32.mrb[0].mxu0
        %v1289 = vadd.f32 %v463, %v1288
        %v1290 = vpop.f32.mrb[0].mxu0
        %v1291 = vpop.f32.mrb[0].mxu0
        %v1292 = vadd.f32 %v463, %v1291
        %v1293 = vpop.f32.mrb[0].mxu0
        %1294 = vdwg.mxu0
        %v1295 = vmax.f32 %v905, 0.0
        %v1296 = vmax.f32 %v908, 0.0
        %v1297 = vmax.f32 %v913, 0.0
        %v1298 = vmax.f32 %v916, 0.0
        %v1299 = vmax.f32 %v921, 0.0
        %v1300 = vmax.f32 %v924, 0.0
        %v1301 = vmax.f32 %v929, 0.0
        %v1302 = vmax.f32 %v932, 0.0
        %v1303 = vmax.f32 %v937, 0.0
        %v1304 = vmax.f32 %v940, 0.0
        %v1305 = vmax.f32 %v945, 0.0
        %v1306 = vmax.f32 %v948, 0.0
        %v1307 = vmax.f32 %v953, 0.0
        %v1308 = vmax.f32 %v956, 0.0
        %v1309 = vmax.f32 %v961, 0.0
        %v1310 = vmax.f32 %v964, 0.0
        %v1311 = vmax.f32 %v969, 0.0
        %v1312 = vmax.f32 %v972, 0.0
        %v1313 = vmax.f32 %v977, 0.0
        %v1314 = vmax.f32 %v980, 0.0
        %v1315 = vmax.f32 %v985, 0.0
        %v1316 = vmax.f32 %v988, 0.0
        %v1317 = vmax.f32 %v993, 0.0
        %v1318 = vmax.f32 %v996, 0.0
        %v1319 = vmax.f32 %v1001, 0.0
        %v1320 = vmax.f32 %v1004, 0.0
        %v1321 = vmax.f32 %v1009, 0.0
        %v1322 = vmax.f32 %v1012, 0.0
        %v1323 = vmax.f32 %v1017, 0.0
        %v1324 = vmax.f32 %v1020, 0.0
        %v1325 = vmax.f32 %v1025, 0.0
        %v1326 = vmax.f32 %v1028, 0.0
        %v1327 = vmax.f32 %v1033, 0.0
        %v1328 = vmax.f32 %v1036, 0.0
        %v1329 = vmax.f32 %v1041, 0.0
        %v1330 = vmax.f32 %v1044, 0.0
        %v1331 = vmax.f32 %v1049, 0.0
        %v1332 = vmax.f32 %v1052, 0.0
        %v1333 = vmax.f32 %v1057, 0.0
        %v1334 = vmax.f32 %v1060, 0.0
        %v1335 = vmax.f32 %v1065, 0.0
        %v1336 = vmax.f32 %v1068, 0.0
        %v1337 = vmax.f32 %v1073, 0.0
        %v1338 = vmax.f32 %v1076, 0.0
        %v1339 = vmax.f32 %v1081, 0.0
        %v1340 = vmax.f32 %v1084, 0.0
        %v1341 = vmax.f32 %v1089, 0.0
        %v1342 = vmax.f32 %v1092, 0.0
        %v1343 = vmax.f32 %v1097, 0.0
        %v1344 = vmax.f32 %v1100, 0.0
        %v1345 = vmax.f32 %v1105, 0.0
        %v1346 = vmax.f32 %v1108, 0.0
        %v1347 = vmax.f32 %v1113, 0.0
        %v1348 = vmax.f32 %v1116, 0.0
        %v1349 = vmax.f32 %v1121, 0.0
        %v1350 = vmax.f32 %v1124, 0.0
        %v1351 = vmax.f32 %v1129, 0.0
        %v1352 = vmax.f32 %v1132, 0.0
        %v1353 = vmax.f32 %v1137, 0.0
        %v1354 = vmax.f32 %v1140, 0.0
        %v1355 = vmax.f32 %v1145, 0.0
        %v1356 = vmax.f32 %v1148, 0.0
        %v1357 = vmax.f32 %v1153, 0.0
        %v1358 = vmax.f32 %v1156, 0.0
        %v1359 = vmax.f32 %v1161, 0.0
        %v1360 = vmax.f32 %v1164, 0.0
        %v1361 = vmax.f32 %v1169, 0.0
        %v1362 = vmax.f32 %v1172, 0.0
        %v1363 = vmax.f32 %v1177, 0.0
        %v1364 = vmax.f32 %v1180, 0.0
        %v1365 = vmax.f32 %v1185, 0.0
        %v1366 = vmax.f32 %v1188, 0.0
        %v1367 = vmax.f32 %v1193, 0.0
        %v1368 = vmax.f32 %v1196, 0.0
        %v1369 = vmax.f32 %v1201, 0.0
        %v1370 = vmax.f32 %v1204, 0.0
        %v1371 = vmax.f32 %v1209, 0.0
        %v1372 = vmax.f32 %v1212, 0.0
        %v1373 = vmax.f32 %v1217, 0.0
        %v1374 = vmax.f32 %v1220, 0.0
        %v1375 = vmax.f32 %v1225, 0.0
        %v1376 = vmax.f32 %v1228, 0.0
        %v1377 = vmax.f32 %v1233, 0.0
        %v1378 = vmax.f32 %v1236, 0.0
        %v1379 = vmax.f32 %v1241, 0.0
        %v1380 = vmax.f32 %v1244, 0.0
        %v1381 = vmax.f32 %v1249, 0.0
        %v1382 = vmax.f32 %v1252, 0.0
        %v1383 = vmax.f32 %v1257, 0.0
        %v1384 = vmax.f32 %v1260, 0.0
        %v1385 = vmax.f32 %v1265, 0.0
        %v1386 = vmax.f32 %v1268, 0.0
        %v1387 = vmax.f32 %v1273, 0.0
        %v1388 = vmax.f32 %v1276, 0.0
        %v1389 = vmax.f32 %v1281, 0.0
        %v1390 = vmax.f32 %v1284, 0.0
        %v1391 = vmax.f32 %v1289, 0.0
        %v1392 = vmax.f32 %v1292, 0.0
        %v1418 = vrot.slane %v1319, 4
        %v1419 = vrot.slane %v1320, 4
        %v1420 = vsel %vm863, %v1418, %v1419
        %v1421 = vrot.slane %v1321, 4
        %v1422 = vsel %vm863, %v1419, %v1421
        %v1423 = vrot.slane %v1322, 4
        %v1424 = vsel %vm863, %v1421, %v1423
        %v1425 = vrot.slane %v1323, 4
        %v1426 = vsel %vm863, %v1423, %v1425
        %v1427 = vrot.slane %v1324, 4
        %v1428 = vsel %vm863, %v1425, %v1427
        %v1429 = vrot.slane %v1325, 4
        %v1430 = vsel %vm863, %v1427, %v1429
        %v1431 = vrot.slane %v1326, 4
        %v1432 = vsel %vm863, %v1429, %v1431
        %v1433 = vrot.slane %v1327, 4
        %v1434 = vsel %vm863, %v1431, %v1433
        %v1435 = vrot.slane %v1328, 4
        %v1436 = vsel %vm863, %v1433, %v1435
        %v1437 = vrot.slane %v1329, 4
        %v1438 = vsel %vm863, %v1435, %v1437
        %v1439 = vrot.slane %v1330, 4
        %v1440 = vsel %vm863, %v1437, %v1439
        %v1441 = vrot.slane %v1331, 4
        %v1442 = vsel %vm863, %v1439, %v1441
        %v1443 = vrot.slane %v1332, 4
        %v1444 = vsel %vm863, %v1441, %v1443
        %v1445 = vrot.slane %v1333, 4
        %v1446 = vsel %vm863, %v1443, %v1445
        %v1447 = vrot.slane %v1334, 4
        %v1448 = vsel %vm863, %v1445, %v1447
        %v1449 = vrot.slane %v1335, 4
        %v1450 = vsel %vm863, %v1447, %v1449
        %v1451 = vrot.slane %v1336, 4
        %v1452 = vsel %vm863, %v1449, %v1451
        %v1453 = vrot.slane %v1337, 4
        %v1454 = vsel %vm863, %v1451, %v1453
        %v1455 = vrot.slane %v1338, 4
        %v1456 = vsel %vm863, %v1453, %v1455
        %v1457 = vrot.slane %v1339, 4
        %v1458 = vsel %vm863, %v1455, %v1457
        %v1459 = vrot.slane %v1340, 4
        %v1460 = vsel %vm863, %v1457, %v1459
        %v1461 = vrot.slane %v1341, 4
        %v1462 = vsel %vm863, %v1459, %v1461
        %v1463 = vrot.slane %v1342, 4
        %v1464 = vsel %vm863, %v1461, %v1463
        %v1465 = vrot.slane %v1343, 4
        %v1466 = vsel %vm863, %v1463, %v1465
        %v1492 = vmax.f32 %v1295, %v1420
        %v1493 = vmax.f32 %v1296, %v1422
        %v1494 = vmax.f32 %v1297, %v1424
        %v1495 = vmax.f32 %v1298, %v1426
        %v1496 = vmax.f32 %v1299, %v1428
        %v1497 = vmax.f32 %v1300, %v1430
        %v1498 = vmax.f32 %v1301, %v1432
        %v1499 = vmax.f32 %v1302, %v1434
        %v1500 = vmax.f32 %v1303, %v1436
        %v1501 = vmax.f32 %v1304, %v1438
        %v1502 = vmax.f32 %v1305, %v1440
        %v1503 = vmax.f32 %v1306, %v1442
        %v1504 = vmax.f32 %v1307, %v1444
        %v1505 = vmax.f32 %v1308, %v1446
        %v1506 = vmax.f32 %v1309, %v1448
        %v1507 = vmax.f32 %v1310, %v1450
        %v1508 = vmax.f32 %v1311, %v1452
        %v1509 = vmax.f32 %v1312, %v1454
        %v1510 = vmax.f32 %v1313, %v1456
        %v1511 = vmax.f32 %v1314, %v1458
        %v1512 = vmax.f32 %v1315, %v1460
        %v1513 = vmax.f32 %v1316, %v1462
        %v1514 = vmax.f32 %v1317, %v1464
        %v1515 = vmax.f32 %v1318, %v1466
        %v1516 = vmax.f32 %v1319, %v1465
        %v1542 = vrot.slane %v1368, 4
        %v1543 = vrot.slane %v1369, 4
        %v1544 = vsel %vm863, %v1542, %v1543
        %v1545 = vrot.slane %v1370, 4
        %v1546 = vsel %vm863, %v1543, %v1545
        %v1547 = vrot.slane %v1371, 4
        %v1548 = vsel %vm863, %v1545, %v1547
        %v1549 = vrot.slane %v1372, 4
        %v1550 = vsel %vm863, %v1547, %v1549
        %v1551 = vrot.slane %v1373, 4
        %v1552 = vsel %vm863, %v1549, %v1551
        %v1553 = vrot.slane %v1374, 4
        %v1554 = vsel %vm863, %v1551, %v1553
        %v1555 = vrot.slane %v1375, 4
        %v1556 = vsel %vm863, %v1553, %v1555
        %v1557 = vrot.slane %v1376, 4
        %v1558 = vsel %vm863, %v1555, %v1557
        %v1559 = vrot.slane %v1377, 4
        %v1560 = vsel %vm863, %v1557, %v1559
        %v1561 = vrot.slane %v1378, 4
        %v1562 = vsel %vm863, %v1559, %v1561
        %v1563 = vrot.slane %v1379, 4
        %v1564 = vsel %vm863, %v1561, %v1563
        %v1565 = vrot.slane %v1380, 4
        %v1566 = vsel %vm863, %v1563, %v1565
        %v1567 = vrot.slane %v1381, 4
        %v1568 = vsel %vm863, %v1565, %v1567
        %v1569 = vrot.slane %v1382, 4
        %v1570 = vsel %vm863, %v1567, %v1569
        %v1571 = vrot.slane %v1383, 4
        %v1572 = vsel %vm863, %v1569, %v1571
        %v1573 = vrot.slane %v1384, 4
        %v1574 = vsel %vm863, %v1571, %v1573
        %v1575 = vrot.slane %v1385, 4
        %v1576 = vsel %vm863, %v1573, %v1575
        %v1577 = vrot.slane %v1386, 4
        %v1578 = vsel %vm863, %v1575, %v1577
        %v1579 = vrot.slane %v1387, 4
        %v1580 = vsel %vm863, %v1577, %v1579
        %v1581 = vrot.slane %v1388, 4
        %v1582 = vsel %vm863, %v1579, %v1581
        %v1583 = vrot.slane %v1389, 4
        %v1584 = vsel %vm863, %v1581, %v1583
        %v1585 = vrot.slane %v1390, 4
        %v1586 = vsel %vm863, %v1583, %v1585
        %v1587 = vrot.slane %v1391, 4
        %v1588 = vsel %vm863, %v1585, %v1587
        %v1589 = vrot.slane %v1392, 4
        %v1590 = vsel %vm863, %v1587, %v1589
        %v1616 = vmax.f32 %v1344, %v1544
        %v1617 = vmax.f32 %v1345, %v1546
        %v1618 = vmax.f32 %v1346, %v1548
        %v1619 = vmax.f32 %v1347, %v1550
        %v1620 = vmax.f32 %v1348, %v1552
        %v1621 = vmax.f32 %v1349, %v1554
        %v1622 = vmax.f32 %v1350, %v1556
        %v1623 = vmax.f32 %v1351, %v1558
        %v1624 = vmax.f32 %v1352, %v1560
        %v1625 = vmax.f32 %v1353, %v1562
        %v1626 = vmax.f32 %v1354, %v1564
        %v1627 = vmax.f32 %v1355, %v1566
        %v1628 = vmax.f32 %v1356, %v1568
        %v1629 = vmax.f32 %v1357, %v1570
        %v1630 = vmax.f32 %v1358, %v1572
        %v1631 = vmax.f32 %v1359, %v1574
        %v1632 = vmax.f32 %v1360, %v1576
        %v1633 = vmax.f32 %v1361, %v1578
        %v1634 = vmax.f32 %v1362, %v1580
        %v1635 = vmax.f32 %v1363, %v1582
        %v1636 = vmax.f32 %v1364, %v1584
        %v1637 = vmax.f32 %v1365, %v1586
        %v1638 = vmax.f32 %v1366, %v1588
        %v1639 = vmax.f32 %v1367, %v1590
        %v1640 = vmax.f32 %v1368, %v1589
        %v1641 = vmax.f32 %v1492, %v1616
        %v1642 = vmax.f32 %v1493, %v1617
        %v1643 = vmax.f32 %v1494, %v1618
        %v1644 = vmax.f32 %v1495, %v1619
        %v1645 = vmax.f32 %v1496, %v1620
        %v1646 = vmax.f32 %v1497, %v1621
        %v1647 = vmax.f32 %v1498, %v1622
        %v1648 = vmax.f32 %v1499, %v1623
        %v1649 = vmax.f32 %v1500, %v1624
        %v1650 = vmax.f32 %v1501, %v1625
        %v1651 = vmax.f32 %v1502, %v1626
        %v1652 = vmax.f32 %v1503, %v1627
        %v1653 = vmax.f32 %v1504, %v1628
        %v1654 = vmax.f32 %v1505, %v1629
        %v1655 = vmax.f32 %v1506, %v1630
        %v1656 = vmax.f32 %v1507, %v1631
        %v1657 = vmax.f32 %v1508, %v1632
        %v1658 = vmax.f32 %v1509, %v1633
        %v1659 = vmax.f32 %v1510, %v1634
        %v1660 = vmax.f32 %v1511, %v1635
        %v1661 = vmax.f32 %v1512, %v1636
        %v1662 = vmax.f32 %v1513, %v1637
        %v1663 = vmax.f32 %v1514, %v1638
        %v1664 = vmax.f32 %v1515, %v1639
        %v1665 = vmax.f32 %v1516, %v1640
        %v1666 = vsel %vm863, %v1665, 0.0
        %v1667 = vld [vmem:[%s1] sm:$0xff]
        %v1668 = vld [vmem:[%s1 + $0x8] sm:$0xff]
        %v1669 = vld [vmem:[%s1 + $0x10] sm:$0xff]
        %v1670 = vld [vmem:[%s1 + $0x18] sm:$0xff]
        %v1671 = vld [vmem:[%s1 + $0x20] sm:$0xff]
        %v1672 = vld [vmem:[%s1 + $0x28] sm:$0xff]
        %v1673 = vld [vmem:[%s1 + $0x30] sm:$0x1]
        %vm1681 = vcmask 1042432
        %v1682 = vrot.slane %v1667, 5
        %v1683 = vrot.slane %v1668, 5
        %v1684 = vsel %vm1681, %v1682, %v1683
        %v1685 = vrot.slane %v1669, 5
        %v1686 = vsel %vm1681, %v1683, %v1685
        %v1687 = vrot.slane %v1670, 5
        %v1688 = vsel %vm1681, %v1685, %v1687
        %v1689 = vrot.slane %v1671, 5
        %v1690 = vsel %vm1681, %v1687, %v1689
        %v1691 = vrot.slane %v1672, 5
        %v1692 = vsel %vm1681, %v1689, %v1691
        %v1693 = vrot.slane %v1673, 5
        %v1694 = vsel %vm1681, %v1691, %v1693
        %v1702 = vmul.f32 %v1658, %v1682
        %v1703 = vmul.f32 %v1659, %v1684
        %v1704 = vmul.f32 %v1660, %v1686
        %v1705 = vmul.f32 %v1661, %v1688
        %v1706 = vmul.f32 %v1662, %v1690
        %v1707 = vmul.f32 %v1663, %v1692
        %v1708 = vmul.f32 %v1664, %v1694
        %s1709 = scalar_lea.vmem %s1, 56
        %v1710 = vld [vmem:[%s1709] sm:$0xff]
        %v1711 = vld [vmem:[%s1709 + $0x8] sm:$0xff]
        %v1712 = vld [vmem:[%s1709 + $0x10] sm:$0xff]
        %v1713 = vld [vmem:[%s1709 + $0x18] sm:$0xff]
        %v1714 = vld [vmem:[%s1709 + $0x20] sm:$0xff]
        %v1715 = vld [vmem:[%s1709 + $0x28] sm:$0xff]
        %v1716 = vld [vmem:[%s1709 + $0x30] sm:$0x1]
        %v1724 = vrot.slane %v1710, 5
        %v1725 = vrot.slane %v1711, 5
        %v1726 = vsel %vm1681, %v1724, %v1725
        %v1727 = vrot.slane %v1712, 5
        %v1728 = vsel %vm1681, %v1725, %v1727
        %v1729 = vrot.slane %v1713, 5
        %v1730 = vsel %vm1681, %v1727, %v1729
        %v1731 = vrot.slane %v1714, 5
        %v1732 = vsel %vm1681, %v1729, %v1731
        %v1733 = vrot.slane %v1715, 5
        %v1734 = vsel %vm1681, %v1731, %v1733
        %v1735 = vrot.slane %v1716, 5
        %v1736 = vsel %vm1681, %v1733, %v1735
        %v1744 = vmul.f32 %v1652, %v1724
        %v1745 = vmul.f32 %v1653, %v1726
        %v1746 = vmul.f32 %v1654, %v1728
        %v1747 = vmul.f32 %v1655, %v1730
        %v1748 = vmul.f32 %v1656, %v1732
        %v1749 = vmul.f32 %v1657, %v1734
        %v1750 = vmul.f32 %v1658, %v1736
        %v1751 = vrot.slane %v1710, 4
        %v1752 = vrot.slane %v1711, 4
        %v1753 = vsel %vm863, %v1751, %v1752
        %v1754 = vrot.slane %v1712, 4
        %v1755 = vsel %vm863, %v1752, %v1754
        %v1756 = vrot.slane %v1713, 4
        %v1757 = vsel %vm863, %v1754, %v1756
        %v1758 = vrot.slane %v1714, 4
        %v1759 = vsel %vm863, %v1756, %v1758
        %v1760 = vrot.slane %v1715, 4
        %v1761 = vsel %vm863, %v1758, %v1760
        %v1762 = vrot.slane %v1716, 4
        %v1763 = vsel %vm863, %v1760, %v1762
        %v1771 = vmul.f32 %v1658, %v1751
        %v1772 = vmul.f32 %v1659, %v1753
        %v1773 = vmul.f32 %v1660, %v1755
        %v1774 = vmul.f32 %v1661, %v1757
        %v1775 = vmul.f32 %v1662, %v1759
        %v1776 = vmul.f32 %v1663, %v1761
        %v1777 = vmul.f32 %v1664, %v1763
        %s1778 = scalar_lea.vmem %s1, 112
        %v1779 = vld [vmem:[%s1778] sm:$0xff]
        %v1780 = vld [vmem:[%s1778 + $0x8] sm:$0xff]
        %v1781 = vld [vmem:[%s1778 + $0x10] sm:$0xff]
        %v1782 = vld [vmem:[%s1778 + $0x18] sm:$0xff]
        %v1783 = vld [vmem:[%s1778 + $0x20] sm:$0xff]
        %v1784 = vld [vmem:[%s1778 + $0x28] sm:$0xff]
        %v1785 = vld [vmem:[%s1778 + $0x30] sm:$0x1]
        %v1793 = vrot.slane %v1779, 4
        %v1794 = vrot.slane %v1780, 4
        %v1795 = vsel %vm863, %v1793, %v1794
        %v1796 = vrot.slane %v1781, 4
        %v1797 = vsel %vm863, %v1794, %v1796
        %v1798 = vrot.slane %v1782, 4
        %v1799 = vsel %vm863, %v1796, %v1798
        %v1800 = vrot.slane %v1783, 4
        %v1801 = vsel %vm863, %v1798, %v1800
        %v1802 = vrot.slane %v1784, 4
        %v1803 = vsel %vm863, %v1800, %v1802
        %v1804 = vrot.slane %v1785, 4
        %v1805 = vsel %vm863, %v1802, %v1804
        %v1813 = vmul.f32 %v1652, %v1793
        %v1814 = vmul.f32 %v1653, %v1795
        %v1815 = vmul.f32 %v1654, %v1797
        %v1816 = vmul.f32 %v1655, %v1799
        %v1817 = vmul.f32 %v1656, %v1801
        %v1818 = vmul.f32 %v1657, %v1803
        %v1819 = vmul.f32 %v1658, %v1805
        %s1820 = scalar_lea.vmem %s1, 168
        %v1821 = vld [vmem:[%s1820] sm:$0xff]
        %v1822 = vld [vmem:[%s1820 + $0x8] sm:$0xff]
        %v1823 = vld [vmem:[%s1820 + $0x10] sm:$0xff]
        %v1824 = vld [vmem:[%s1820 + $0x18] sm:$0xff]
        %v1825 = vld [vmem:[%s1820 + $0x20] sm:$0xff]
        %v1826 = vld [vmem:[%s1820 + $0x28] sm:$0xff]
        %v1827 = vld [vmem:[%s1820 + $0x30] sm:$0x1]
        %v1828 = vmul.f32 %v1647, %v1821
        %v1829 = vmul.f32 %v1648, %v1822
        %v1830 = vmul.f32 %v1649, %v1823
        %v1831 = vmul.f32 %v1650, %v1824
        %v1832 = vmul.f32 %v1651, %v1825
        %v1833 = vmul.f32 %v1652, %v1826
        %v1834 = vmul.f32 %v1653, %v1827
        %s1835 = scalar_lea.vmem %s1, 224
        %v1836 = vld [vmem:[%s1835] sm:$0xff]
        %v1837 = vld [vmem:[%s1835 + $0x8] sm:$0xff]
        %v1838 = vld [vmem:[%s1835 + $0x10] sm:$0xff]
        %v1839 = vld [vmem:[%s1835 + $0x18] sm:$0xff]
        %v1840 = vld [vmem:[%s1835 + $0x20] sm:$0xff]
        %v1841 = vld [vmem:[%s1835 + $0x28] sm:$0xff]
        %v1842 = vld [vmem:[%s1835 + $0x30] sm:$0x1]
        %v1843 = vmul.f32 %v1641, %v1836
        %v1844 = vmul.f32 %v1642, %v1837
        %v1845 = vmul.f32 %v1643, %v1838
        %v1846 = vmul.f32 %v1644, %v1839
        %v1847 = vmul.f32 %v1645, %v1840
        %v1848 = vmul.f32 %v1646, %v1841
        %v1849 = vmul.f32 %v1647, %v1842
        %vm1857 = vcmask 1040384
        %v1858 = vrot.slane %v1836, 7
        %v1859 = vrot.slane %v1837, 7
        %v1860 = vsel %vm1857, %v1858, %v1859
        %v1861 = vrot.slane %v1838, 7
        %v1862 = vsel %vm1857, %v1859, %v1861
        %v1863 = vrot.slane %v1839, 7
        %v1864 = vsel %vm1857, %v1861, %v1863
        %v1865 = vrot.slane %v1840, 7
        %v1866 = vsel %vm1857, %v1863, %v1865
        %v1867 = vrot.slane %v1841, 7
        %v1868 = vsel %vm1857, %v1865, %v1867
        %v1869 = vrot.slane %v1842, 7
        %v1870 = vsel %vm1857, %v1867, %v1869
        %v1878 = vmul.f32 %v1647, %v1858
        %v1879 = vmul.f32 %v1648, %v1860
        %v1880 = vmul.f32 %v1649, %v1862
        %v1881 = vmul.f32 %v1650, %v1864
        %v1882 = vmul.f32 %v1651, %v1866
        %v1883 = vmul.f32 %v1652, %v1868
        %v1884 = vmul.f32 %v1653, %v1870
        %s1885 = scalar_lea.vmem %s1, 280
        %v1886 = vld [vmem:[%s1885] sm:$0xff]
        %v1887 = vld [vmem:[%s1885 + $0x8] sm:$0xff]
        %v1888 = vld [vmem:[%s1885 + $0x10] sm:$0xff]
        %v1889 = vld [vmem:[%s1885 + $0x18] sm:$0xff]
        %v1890 = vld [vmem:[%s1885 + $0x20] sm:$0xff]
        %v1891 = vld [vmem:[%s1885 + $0x28] sm:$0xff]
        %v1892 = vld [vmem:[%s1885 + $0x30] sm:$0x1]
        %v1900 = vrot.slane %v1886, 7
        %v1901 = vrot.slane %v1887, 7
        %v1902 = vsel %vm1857, %v1900, %v1901
        %v1903 = vrot.slane %v1888, 7
        %v1904 = vsel %vm1857, %v1901, %v1903
        %v1905 = vrot.slane %v1889, 7
        %v1906 = vsel %vm1857, %v1903, %v1905
        %v1907 = vrot.slane %v1890, 7
        %v1908 = vsel %vm1857, %v1905, %v1907
        %v1909 = vrot.slane %v1891, 7
        %v1910 = vsel %vm1857, %v1907, %v1909
        %v1911 = vrot.slane %v1892, 7
        %v1912 = vsel %vm1857, %v1909, %v1911
        %v1920 = vmul.f32 %v1641, %v1900
        %v1921 = vmul.f32 %v1642, %v1902
        %v1922 = vmul.f32 %v1643, %v1904
        %v1923 = vmul.f32 %v1644, %v1906
        %v1924 = vmul.f32 %v1645, %v1908
        %v1925 = vmul.f32 %v1646, %v1910
        %v1926 = vmul.f32 %v1647, %v1912
        %vm1934 = vcmask 1041408
        %v1935 = vrot.slane %v1821, 6
        %v1936 = vrot.slane %v1822, 6
        %v1937 = vsel %vm1934, %v1935, %v1936
        %v1938 = vrot.slane %v1823, 6
        %v1939 = vsel %vm1934, %v1936, %v1938
        %v1940 = vrot.slane %v1824, 6
        %v1941 = vsel %vm1934, %v1938, %v1940
        %v1942 = vrot.slane %v1825, 6
        %v1943 = vsel %vm1934, %v1940, %v1942
        %v1944 = vrot.slane %v1826, 6
        %v1945 = vsel %vm1934, %v1942, %v1944
        %v1946 = vrot.slane %v1827, 6
        %v1947 = vsel %vm1934, %v1944, %v1946
        %v1955 = vmul.f32 %v1659, %v1935
        %v1956 = vmul.f32 %v1660, %v1937
        %v1957 = vmul.f32 %v1661, %v1939
        %v1958 = vmul.f32 %v1662, %v1941
        %v1959 = vmul.f32 %v1663, %v1943
        %v1960 = vmul.f32 %v1664, %v1945
        %v1961 = vmul.f32 %v1666, %v1947
        %v1962 = vrot.slane %v1836, 6
        %v1963 = vrot.slane %v1837, 6
        %v1964 = vsel %vm1934, %v1962, %v1963
        %v1965 = vrot.slane %v1838, 6
        %v1966 = vsel %vm1934, %v1963, %v1965
        %v1967 = vrot.slane %v1839, 6
        %v1968 = vsel %vm1934, %v1965, %v1967
        %v1969 = vrot.slane %v1840, 6
        %v1970 = vsel %vm1934, %v1967, %v1969
        %v1971 = vrot.slane %v1841, 6
        %v1972 = vsel %vm1934, %v1969, %v1971
        %v1973 = vrot.slane %v1842, 6
        %v1974 = vsel %vm1934, %v1971, %v1973
        %v1982 = vmul.f32 %v1653, %v1962
        %v1983 = vmul.f32 %v1654, %v1964
        %v1984 = vmul.f32 %v1655, %v1966
        %v1985 = vmul.f32 %v1656, %v1968
        %v1986 = vmul.f32 %v1657, %v1970
        %v1987 = vmul.f32 %v1658, %v1972
        %v1988 = vmul.f32 %v1659, %v1974
        %v1989 = vrot.slane %v1836, 5
        %v1990 = vrot.slane %v1837, 5
        %v1991 = vsel %vm1681, %v1989, %v1990
        %v1992 = vrot.slane %v1838, 5
        %v1993 = vsel %vm1681, %v1990, %v1992
        %v1994 = vrot.slane %v1839, 5
        %v1995 = vsel %vm1681, %v1992, %v1994
        %v1996 = vrot.slane %v1840, 5
        %v1997 = vsel %vm1681, %v1994, %v1996
        %v1998 = vrot.slane %v1841, 5
        %v1999 = vsel %vm1681, %v1996, %v1998
        %v2000 = vrot.slane %v1842, 5
        %v2001 = vsel %vm1681, %v1998, %v2000
        %v2009 = vmul.f32 %v1659, %v1989
        %v2010 = vmul.f32 %v1660, %v1991
        %v2011 = vmul.f32 %v1661, %v1993
        %v2012 = vmul.f32 %v1662, %v1995
        %v2013 = vmul.f32 %v1663, %v1997
        %v2014 = vmul.f32 %v1664, %v1999
        %v2015 = vmul.f32 %v1666, %v2001
        %v2016 = vrot.slane %v1886, 5
        %v2017 = vrot.slane %v1887, 5
        %v2018 = vsel %vm1681, %v2016, %v2017
        %v2019 = vrot.slane %v1888, 5
        %v2020 = vsel %vm1681, %v2017, %v2019
        %v2021 = vrot.slane %v1889, 5
        %v2022 = vsel %vm1681, %v2019, %v2021
        %v2023 = vrot.slane %v1890, 5
        %v2024 = vsel %vm1681, %v2021, %v2023
        %v2025 = vrot.slane %v1891, 5
        %v2026 = vsel %vm1681, %v2023, %v2025
        %v2027 = vrot.slane %v1892, 5
        %v2028 = vsel %vm1681, %v2025, %v2027
        %v2036 = vmul.f32 %v1653, %v2016
        %v2037 = vmul.f32 %v1654, %v2018
        %v2038 = vmul.f32 %v1655, %v2020
        %v2039 = vmul.f32 %v1656, %v2022
        %v2040 = vmul.f32 %v1657, %v2024
        %v2041 = vmul.f32 %v1658, %v2026
        %v2042 = vmul.f32 %v1659, %v2028
        %s2043 = scalar_lea.vmem %s1, 336
        %v2044 = vld [vmem:[%s2043] sm:$0xff]
        %v2045 = vld [vmem:[%s2043 + $0x8] sm:$0xff]
        %v2046 = vld [vmem:[%s2043 + $0x10] sm:$0xff]
        %v2047 = vld [vmem:[%s2043 + $0x18] sm:$0xff]
        %v2048 = vld [vmem:[%s2043 + $0x20] sm:$0xff]
        %v2049 = vld [vmem:[%s2043 + $0x28] sm:$0xff]
        %v2050 = vld [vmem:[%s2043 + $0x30] sm:$0x1]
        %vm2058 = vcmask 1046528
        %v2059 = vrot.slane %v2044, 1
        %v2060 = vrot.slane %v2045, 1
        %v2061 = vsel %vm2058, %v2059, %v2060
        %v2062 = vrot.slane %v2046, 1
        %v2063 = vsel %vm2058, %v2060, %v2062
        %v2064 = vrot.slane %v2047, 1
        %v2065 = vsel %vm2058, %v2062, %v2064
        %v2066 = vrot.slane %v2048, 1
        %v2067 = vsel %vm2058, %v2064, %v2066
        %v2068 = vrot.slane %v2049, 1
        %v2069 = vsel %vm2058, %v2066, %v2068
        %v2070 = vrot.slane %v2050, 1
        %v2071 = vsel %vm2058, %v2068, %v2070
        %v2079 = vmul.f32 %v1647, %v2059
        %v2080 = vmul.f32 %v1648, %v2061
        %v2081 = vmul.f32 %v1649, %v2063
        %v2082 = vmul.f32 %v1650, %v2065
        %v2083 = vmul.f32 %v1651, %v2067
        %v2084 = vmul.f32 %v1652, %v2069
        %v2085 = vmul.f32 %v1653, %v2071
        %s2086 = scalar_lea.vmem %s1, 392
        %v2087 = vld [vmem:[%s2086] sm:$0xff]
        %v2088 = vld [vmem:[%s2086 + $0x8] sm:$0xff]
        %v2089 = vld [vmem:[%s2086 + $0x10] sm:$0xff]
        %v2090 = vld [vmem:[%s2086 + $0x18] sm:$0xff]
        %v2091 = vld [vmem:[%s2086 + $0x20] sm:$0xff]
        %v2092 = vld [vmem:[%s2086 + $0x28] sm:$0xff]
        %v2093 = vld [vmem:[%s2086 + $0x30] sm:$0x1]
        %v2101 = vrot.slane %v2087, 1
        %v2102 = vrot.slane %v2088, 1
        %v2103 = vsel %vm2058, %v2101, %v2102
        %v2104 = vrot.slane %v2089, 1
        %v2105 = vsel %vm2058, %v2102, %v2104
        %v2106 = vrot.slane %v2090, 1
        %v2107 = vsel %vm2058, %v2104, %v2106
        %v2108 = vrot.slane %v2091, 1
        %v2109 = vsel %vm2058, %v2106, %v2108
        %v2110 = vrot.slane %v2092, 1
        %v2111 = vsel %vm2058, %v2108, %v2110
        %v2112 = vrot.slane %v2093, 1
        %v2113 = vsel %vm2058, %v2110, %v2112
        %v2121 = vmul.f32 %v1641, %v2101
        %v2122 = vmul.f32 %v1642, %v2103
        %v2123 = vmul.f32 %v1643, %v2105
        %v2124 = vmul.f32 %v1644, %v2107
        %v2125 = vmul.f32 %v1645, %v2109
        %v2126 = vmul.f32 %v1646, %v2111
        %v2127 = vmul.f32 %v1647, %v2113
        %v2128 = vmul.f32 %v1648, %v2087
        %v2129 = vmul.f32 %v1649, %v2088
        %v2130 = vmul.f32 %v1650, %v2089
        %v2131 = vmul.f32 %v1651, %v2090
        %v2132 = vmul.f32 %v1652, %v2091
        %v2133 = vmul.f32 %v1653, %v2092
        %v2134 = vmul.f32 %v1654, %v2093
        %s2135 = scalar_lea.vmem %s1, 448
        %v2136 = vld [vmem:[%s2135] sm:$0xff]
        %v2137 = vld [vmem:[%s2135 + $0x8] sm:$0xff]
        %v2138 = vld [vmem:[%s2135 + $0x10] sm:$0xff]
        %v2139 = vld [vmem:[%s2135 + $0x18] sm:$0xff]
        %v2140 = vld [vmem:[%s2135 + $0x20] sm:$0xff]
        %v2141 = vld [vmem:[%s2135 + $0x28] sm:$0xff]
        %v2142 = vld [vmem:[%s2135 + $0x30] sm:$0x1]
        %v2143 = vmul.f32 %v1642, %v2136
        %v2144 = vmul.f32 %v1643, %v2137
        %v2145 = vmul.f32 %v1644, %v2138
        %v2146 = vmul.f32 %v1645, %v2139
        %v2147 = vmul.f32 %v1646, %v2140
        %v2148 = vmul.f32 %v1647, %v2141
        %v2149 = vmul.f32 %v1648, %v2142
        %2157 = vrot.lane.b32.xlu0 %v1744, 32
        %v2158 = vpop.permute.xlu0 %2157
        %2159 = vrot.lane.b32.xlu0 %v1745, 32
        %v2160 = vpop.permute.xlu0 %2159
        %2161 = vrot.lane.b32.xlu0 %v1746, 32
        %v2162 = vpop.permute.xlu0 %2161
        %2163 = vrot.lane.b32.xlu0 %v1747, 32
        %v2164 = vpop.permute.xlu0 %2163
        %2165 = vrot.lane.b32.xlu0 %v1748, 32
        %v2166 = vpop.permute.xlu0 %2165
        %2167 = vrot.lane.b32.xlu0 %v1749, 32
        %v2168 = vpop.permute.xlu0 %2167
        %2169 = vrot.lane.b32.xlu0 %v1750, 32
        %v2170 = vpop.permute.xlu0 %2169
        %v2185 = vrot.slane %v1771, 1
        %v2186 = vrot.slane %v1772, 1
        %v2187 = vsel %vm2058, %v2185, %v2186
        %v2188 = vrot.slane %v1773, 1
        %v2189 = vsel %vm2058, %v2186, %v2188
        %v2190 = vrot.slane %v1774, 1
        %v2191 = vsel %vm2058, %v2188, %v2190
        %v2192 = vrot.slane %v1775, 1
        %v2193 = vsel %vm2058, %v2190, %v2192
        %v2194 = vrot.slane %v1776, 1
        %v2195 = vsel %vm2058, %v2192, %v2194
        %v2196 = vrot.slane %v1777, 1
        %v2197 = vsel %vm2058, %v2194, %v2196
        %2198 = vrot.lane.b32.xlu0 %v2187, 64
        %v2199 = vpop.permute.xlu0 %2198
        %2200 = vrot.lane.b32.xlu0 %v2189, 64
        %v2201 = vpop.permute.xlu0 %2200
        %2202 = vrot.lane.b32.xlu0 %v2191, 64
        %v2203 = vpop.permute.xlu0 %2202
        %2204 = vrot.lane.b32.xlu0 %v2193, 64
        %v2205 = vpop.permute.xlu0 %2204
        %2206 = vrot.lane.b32.xlu0 %v2195, 64
        %v2207 = vpop.permute.xlu0 %2206
        %2208 = vrot.lane.b32.xlu0 %v2197, 64
        %v2209 = vpop.permute.xlu0 %2208
        %2210 = vrot.lane.b32.xlu0 %v2196, 64
        %v2211 = vpop.permute.xlu0 %2210
        %v2226 = vrot.slane %v1828, 5
        %v2227 = vrot.slane %v1829, 5
        %v2228 = vsel %vm1681, %v2226, %v2227
        %v2229 = vrot.slane %v1830, 5
        %v2230 = vsel %vm1681, %v2227, %v2229
        %v2231 = vrot.slane %v1831, 5
        %v2232 = vsel %vm1681, %v2229, %v2231
        %v2233 = vrot.slane %v1832, 5
        %v2234 = vsel %vm1681, %v2231, %v2233
        %v2235 = vrot.slane %v1833, 5
        %v2236 = vsel %vm1681, %v2233, %v2235
        %v2237 = vrot.slane %v1834, 5
        %v2238 = vsel %vm1681, %v2235, %v2237
        %2239 = vrot.lane.b32.xlu0 %v2226, 96
        %v2240 = vpop.permute.xlu0 %2239
        %2241 = vrot.lane.b32.xlu0 %v2228, 96
        %v2242 = vpop.permute.xlu0 %2241
        %2243 = vrot.lane.b32.xlu0 %v2230, 96
        %v2244 = vpop.permute.xlu0 %2243
        %2245 = vrot.lane.b32.xlu0 %v2232, 96
        %v2246 = vpop.permute.xlu0 %2245
        %2247 = vrot.lane.b32.xlu0 %v2234, 96
        %v2248 = vpop.permute.xlu0 %2247
        %2249 = vrot.lane.b32.xlu0 %v2236, 96
        %v2250 = vpop.permute.xlu0 %2249
        %2251 = vrot.lane.b32.xlu0 %v2238, 96
        %v2252 = vpop.permute.xlu0 %2251
        %v2267 = vrot.slane %v1843, 5
        %v2268 = vrot.slane %v1844, 5
        %v2269 = vsel %vm1681, %v2267, %v2268
        %v2270 = vrot.slane %v1845, 5
        %v2271 = vsel %vm1681, %v2268, %v2270
        %v2272 = vrot.slane %v1846, 5
        %v2273 = vsel %vm1681, %v2270, %v2272
        %v2274 = vrot.slane %v1847, 5
        %v2275 = vsel %vm1681, %v2272, %v2274
        %v2276 = vrot.slane %v1848, 5
        %v2277 = vsel %vm1681, %v2274, %v2276
        %v2278 = vrot.slane %v1849, 5
        %v2279 = vsel %vm1681, %v2276, %v2278
        %v2294 = vrot.slane %v1878, 6
        %v2295 = vrot.slane %v1879, 6
        %v2296 = vsel %vm1934, %v2294, %v2295
        %v2297 = vrot.slane %v1880, 6
        %v2298 = vsel %vm1934, %v2295, %v2297
        %v2299 = vrot.slane %v1881, 6
        %v2300 = vsel %vm1934, %v2297, %v2299
        %v2301 = vrot.slane %v1882, 6
        %v2302 = vsel %vm1934, %v2299, %v2301
        %v2303 = vrot.slane %v1883, 6
        %v2304 = vsel %vm1934, %v2301, %v2303
        %v2305 = vrot.slane %v1884, 6
        %v2306 = vsel %vm1934, %v2303, %v2305
        %2307 = vrot.lane.b32.xlu0 %v2294, 32
        %v2308 = vpop.permute.xlu0 %2307
        %2309 = vrot.lane.b32.xlu0 %v2296, 32
        %v2310 = vpop.permute.xlu0 %2309
        %2311 = vrot.lane.b32.xlu0 %v2298, 32
        %v2312 = vpop.permute.xlu0 %2311
        %2313 = vrot.lane.b32.xlu0 %v2300, 32
        %v2314 = vpop.permute.xlu0 %2313
        %2315 = vrot.lane.b32.xlu0 %v2302, 32
        %v2316 = vpop.permute.xlu0 %2315
        %2317 = vrot.lane.b32.xlu0 %v2304, 32
        %v2318 = vpop.permute.xlu0 %2317
        %2319 = vrot.lane.b32.xlu0 %v2306, 32
        %v2320 = vpop.permute.xlu0 %2319
        %v2335 = vrot.slane %v1955, 7
        %v2336 = vrot.slane %v1956, 7
        %v2337 = vsel %vm1857, %v2335, %v2336
        %v2338 = vrot.slane %v1957, 7
        %v2339 = vsel %vm1857, %v2336, %v2338
        %v2340 = vrot.slane %v1958, 7
        %v2341 = vsel %vm1857, %v2338, %v2340
        %v2342 = vrot.slane %v1959, 7
        %v2343 = vsel %vm1857, %v2340, %v2342
        %v2344 = vrot.slane %v1960, 7
        %v2345 = vsel %vm1857, %v2342, %v2344
        %v2346 = vrot.slane %v1961, 7
        %v2347 = vsel %vm1857, %v2344, %v2346
        %2348 = vrot.lane.b32.xlu0 %v2335, 64
        %v2349 = vpop.permute.xlu0 %2348
        %2350 = vrot.lane.b32.xlu0 %v2337, 64
        %v2351 = vpop.permute.xlu0 %2350
        %2352 = vrot.lane.b32.xlu0 %v2339, 64
        %v2353 = vpop.permute.xlu0 %2352
        %2354 = vrot.lane.b32.xlu0 %v2341, 64
        %v2355 = vpop.permute.xlu0 %2354
        %2356 = vrot.lane.b32.xlu0 %v2343, 64
        %v2357 = vpop.permute.xlu0 %2356
        %2358 = vrot.lane.b32.xlu0 %v2345, 64
        %v2359 = vpop.permute.xlu0 %2358
        %2360 = vrot.lane.b32.xlu0 %v2347, 64
        %v2361 = vpop.permute.xlu0 %2360
        %v2376 = vrot.slane %v1982, 7
        %v2377 = vrot.slane %v1983, 7
        %v2378 = vsel %vm1857, %v2376, %v2377
        %v2379 = vrot.slane %v1984, 7
        %v2380 = vsel %vm1857, %v2377, %v2379
        %v2381 = vrot.slane %v1985, 7
        %v2382 = vsel %vm1857, %v2379, %v2381
        %v2383 = vrot.slane %v1986, 7
        %v2384 = vsel %vm1857, %v2381, %v2383
        %v2385 = vrot.slane %v1987, 7
        %v2386 = vsel %vm1857, %v2383, %v2385
        %v2387 = vrot.slane %v1988, 7
        %v2388 = vsel %vm1857, %v2385, %v2387
        %2389 = vrot.lane.b32.xlu0 %v2376, 96
        %v2390 = vpop.permute.xlu0 %2389
        %2391 = vrot.lane.b32.xlu0 %v2378, 96
        %v2392 = vpop.permute.xlu0 %2391
        %2393 = vrot.lane.b32.xlu0 %v2380, 96
        %v2394 = vpop.permute.xlu0 %2393
        %2395 = vrot.lane.b32.xlu0 %v2382, 96
        %v2396 = vpop.permute.xlu0 %2395
        %2397 = vrot.lane.b32.xlu0 %v2384, 96
        %v2398 = vpop.permute.xlu0 %2397
        %2399 = vrot.lane.b32.xlu0 %v2386, 96
        %v2400 = vpop.permute.xlu0 %2399
        %2401 = vrot.lane.b32.xlu0 %v2388, 96
        %v2402 = vpop.permute.xlu0 %2401
        %vm2410 = vcmask 261120
        %v2411 = vsel %vm2410, %v1702, %v2158
        %v2412 = vsel %vm2410, %v1703, %v2160
        %v2413 = vsel %vm2410, %v1704, %v2162
        %v2414 = vsel %vm2410, %v1705, %v2164
        %v2415 = vsel %vm2410, %v1706, %v2166
        %v2416 = vsel %vm2410, %v1707, %v2168
        %v2417 = vsel %vm2410, %v1708, %v2170
        %vm2418 = vcmask 523264
        %v2419 = vsel %vm2418, %v2411, %v2199
        %v2420 = vsel %vm2418, %v2412, %v2201
        %v2421 = vsel %vm2418, %v2413, %v2203
        %v2422 = vsel %vm2418, %v2414, %v2205
        %v2423 = vsel %vm2418, %v2415, %v2207
        %v2424 = vsel %vm2418, %v2416, %v2209
        %v2425 = vsel %vm2418, %v2417, %v2211
        %vm2426 = vcmask 785408
        %v2427 = vsel %vm2426, %v2419, %v2240
        %v2428 = vsel %vm2426, %v2420, %v2242
        %v2429 = vsel %vm2426, %v2421, %v2244
        %v2430 = vsel %vm2426, %v2422, %v2246
        %v2431 = vsel %vm2426, %v2423, %v2248
        %v2432 = vsel %vm2426, %v2424, %v2250
        %v2433 = vsel %vm2426, %v2425, %v2252
        %v2434 = vsel %vm2410, %v2267, %v2308
        %v2435 = vsel %vm2410, %v2269, %v2310
        %v2436 = vsel %vm2410, %v2271, %v2312
        %v2437 = vsel %vm2410, %v2273, %v2314
        %v2438 = vsel %vm2410, %v2275, %v2316
        %v2439 = vsel %vm2410, %v2277, %v2318
        %v2440 = vsel %vm2410, %v2279, %v2320
        %v2441 = vsel %vm2418, %v2434, %v2349
        %v2442 = vsel %vm2418, %v2435, %v2351
        %v2443 = vsel %vm2418, %v2436, %v2353
        %v2444 = vsel %vm2418, %v2437, %v2355
        %v2445 = vsel %vm2418, %v2438, %v2357
        %v2446 = vsel %vm2418, %v2439, %v2359
        %v2447 = vsel %vm2418, %v2440, %v2361
        %v2448 = vsel %vm2426, %v2441, %v2390
        %v2449 = vsel %vm2426, %v2442, %v2392
        %v2450 = vsel %vm2426, %v2443, %v2394
        %v2451 = vsel %vm2426, %v2444, %v2396
        %v2452 = vsel %vm2426, %v2445, %v2398
        %v2453 = vsel %vm2426, %v2446, %v2400
        %v2454 = vsel %vm2426, %v2447, %v2402
        %2455 = vrot.lane.b32.xlu0 %v2187, 32
        %v2456 = vpop.permute.xlu0 %2455
        %2457 = vrot.lane.b32.xlu0 %v2189, 32
        %v2458 = vpop.permute.xlu0 %2457
        %2459 = vrot.lane.b32.xlu0 %v2191, 32
        %v2460 = vpop.permute.xlu0 %2459
        %2461 = vrot.lane.b32.xlu0 %v2193, 32
        %v2462 = vpop.permute.xlu0 %2461
        %2463 = vrot.lane.b32.xlu0 %v2195, 32
        %v2464 = vpop.permute.xlu0 %2463
        %2465 = vrot.lane.b32.xlu0 %v2197, 32
        %v2466 = vpop.permute.xlu0 %2465
        %2467 = vrot.lane.b32.xlu0 %v2196, 32
        %v2468 = vpop.permute.xlu0 %2467
        %v2483 = vrot.slane %v1813, 1
        %v2484 = vrot.slane %v1814, 1
        %v2485 = vsel %vm2058, %v2483, %v2484
        %v2486 = vrot.slane %v1815, 1
        %v2487 = vsel %vm2058, %v2484, %v2486
        %v2488 = vrot.slane %v1816, 1
        %v2489 = vsel %vm2058, %v2486, %v2488
        %v2490 = vrot.slane %v1817, 1
        %v2491 = vsel %vm2058, %v2488, %v2490
        %v2492 = vrot.slane %v1818, 1
        %v2493 = vsel %vm2058, %v2490, %v2492
        %v2494 = vrot.slane %v1819, 1
        %v2495 = vsel %vm2058, %v2492, %v2494
        %2496 = vrot.lane.b32.xlu0 %v2485, 64
        %v2497 = vpop.permute.xlu0 %2496
        %2498 = vrot.lane.b32.xlu0 %v2487, 64
        %v2499 = vpop.permute.xlu0 %2498
        %2500 = vrot.lane.b32.xlu0 %v2489, 64
        %v2501 = vpop.permute.xlu0 %2500
        %2502 = vrot.lane.b32.xlu0 %v2491, 64
        %v2503 = vpop.permute.xlu0 %2502
        %2504 = vrot.lane.b32.xlu0 %v2493, 64
        %v2505 = vpop.permute.xlu0 %2504
        %2506 = vrot.lane.b32.xlu0 %v2495, 64
        %v2507 = vpop.permute.xlu0 %2506
        %2508 = vrot.lane.b32.xlu0 %v2494, 64
        %v2509 = vpop.permute.xlu0 %2508
        %2517 = vrot.lane.b32.xlu0 %v2267, 96
        %v2518 = vpop.permute.xlu0 %2517
        %2519 = vrot.lane.b32.xlu0 %v2269, 96
        %v2520 = vpop.permute.xlu0 %2519
        %2521 = vrot.lane.b32.xlu0 %v2271, 96
        %v2522 = vpop.permute.xlu0 %2521
        %2523 = vrot.lane.b32.xlu0 %v2273, 96
        %v2524 = vpop.permute.xlu0 %2523
        %2525 = vrot.lane.b32.xlu0 %v2275, 96
        %v2526 = vpop.permute.xlu0 %2525
        %2527 = vrot.lane.b32.xlu0 %v2277, 96
        %v2528 = vpop.permute.xlu0 %2527
        %2529 = vrot.lane.b32.xlu0 %v2279, 96
        %v2530 = vpop.permute.xlu0 %2529
        %v2552 = vrot.slane %v1920, 6
        %v2553 = vrot.slane %v1921, 6
        %v2554 = vsel %vm1934, %v2552, %v2553
        %v2555 = vrot.slane %v1922, 6
        %v2556 = vsel %vm1934, %v2553, %v2555
        %v2557 = vrot.slane %v1923, 6
        %v2558 = vsel %vm1934, %v2555, %v2557
        %v2559 = vrot.slane %v1924, 6
        %v2560 = vsel %vm1934, %v2557, %v2559
        %v2561 = vrot.slane %v1925, 6
        %v2562 = vsel %vm1934, %v2559, %v2561
        %v2563 = vrot.slane %v1926, 6
        %v2564 = vsel %vm1934, %v2561, %v2563
        %2565 = vrot.lane.b32.xlu0 %v2552, 32
        %v2566 = vpop.permute.xlu0 %2565
        %2567 = vrot.lane.b32.xlu0 %v2554, 32
        %v2568 = vpop.permute.xlu0 %2567
        %2569 = vrot.lane.b32.xlu0 %v2556, 32
        %v2570 = vpop.permute.xlu0 %2569
        %2571 = vrot.lane.b32.xlu0 %v2558, 32
        %v2572 = vpop.permute.xlu0 %2571
        %2573 = vrot.lane.b32.xlu0 %v2560, 32
        %v2574 = vpop.permute.xlu0 %2573
        %2575 = vrot.lane.b32.xlu0 %v2562, 32
        %v2576 = vpop.permute.xlu0 %2575
        %2577 = vrot.lane.b32.xlu0 %v2564, 32
        %v2578 = vpop.permute.xlu0 %2577
        %2586 = vrot.lane.b32.xlu0 %v2376, 64
        %v2587 = vpop.permute.xlu0 %2586
        %2588 = vrot.lane.b32.xlu0 %v2378, 64
        %v2589 = vpop.permute.xlu0 %2588
        %2590 = vrot.lane.b32.xlu0 %v2380, 64
        %v2591 = vpop.permute.xlu0 %2590
        %2592 = vrot.lane.b32.xlu0 %v2382, 64
        %v2593 = vpop.permute.xlu0 %2592
        %2594 = vrot.lane.b32.xlu0 %v2384, 64
        %v2595 = vpop.permute.xlu0 %2594
        %2596 = vrot.lane.b32.xlu0 %v2386, 64
        %v2597 = vpop.permute.xlu0 %2596
        %2598 = vrot.lane.b32.xlu0 %v2388, 64
        %v2599 = vpop.permute.xlu0 %2598
        %2614 = vrot.lane.b32.xlu0 %v2009, 96
        %v2615 = vpop.permute.xlu0 %2614
        %2616 = vrot.lane.b32.xlu0 %v2010, 96
        %v2617 = vpop.permute.xlu0 %2616
        %2618 = vrot.lane.b32.xlu0 %v2011, 96
        %v2619 = vpop.permute.xlu0 %2618
        %2620 = vrot.lane.b32.xlu0 %v2012, 96
        %v2621 = vpop.permute.xlu0 %2620
        %2622 = vrot.lane.b32.xlu0 %v2013, 96
        %v2623 = vpop.permute.xlu0 %2622
        %2624 = vrot.lane.b32.xlu0 %v2014, 96
        %v2625 = vpop.permute.xlu0 %2624
        %2626 = vrot.lane.b32.xlu0 %v2015, 96
        %v2627 = vpop.permute.xlu0 %2626
        %v2635 = vsel %vm2410, %v1744, %v2456
        %v2636 = vsel %vm2410, %v1745, %v2458
        %v2637 = vsel %vm2410, %v1746, %v2460
        %v2638 = vsel %vm2410, %v1747, %v2462
        %v2639 = vsel %vm2410, %v1748, %v2464
        %v2640 = vsel %vm2410, %v1749, %v2466
        %v2641 = vsel %vm2410, %v1750, %v2468
        %v2642 = vsel %vm2418, %v2635, %v2497
        %v2643 = vsel %vm2418, %v2636, %v2499
        %v2644 = vsel %vm2418, %v2637, %v2501
        %v2645 = vsel %vm2418, %v2638, %v2503
        %v2646 = vsel %vm2418, %v2639, %v2505
        %v2647 = vsel %vm2418, %v2640, %v2507
        %v2648 = vsel %vm2418, %v2641, %v2509
        %v2649 = vsel %vm2426, %v2642, %v2518
        %v2650 = vsel %vm2426, %v2643, %v2520
        %v2651 = vsel %vm2426, %v2644, %v2522
        %v2652 = vsel %vm2426, %v2645, %v2524
        %v2653 = vsel %vm2426, %v2646, %v2526
        %v2654 = vsel %vm2426, %v2647, %v2528
        %v2655 = vsel %vm2426, %v2648, %v2530
        %v2656 = vsel %vm2410, %v2294, %v2566
        %v2657 = vsel %vm2410, %v2296, %v2568
        %v2658 = vsel %vm2410, %v2298, %v2570
        %v2659 = vsel %vm2410, %v2300, %v2572
        %v2660 = vsel %vm2410, %v2302, %v2574
        %v2661 = vsel %vm2410, %v2304, %v2576
        %v2662 = vsel %vm2410, %v2306, %v2578
        %v2663 = vsel %vm2418, %v2656, %v2587
        %v2664 = vsel %vm2418, %v2657, %v2589
        %v2665 = vsel %vm2418, %v2658, %v2591
        %v2666 = vsel %vm2418, %v2659, %v2593
        %v2667 = vsel %vm2418, %v2660, %v2595
        %v2668 = vsel %vm2418, %v2661, %v2597
        %v2669 = vsel %vm2418, %v2662, %v2599
        %v2670 = vsel %vm2426, %v2663, %v2615
        %v2671 = vsel %vm2426, %v2664, %v2617
        %v2672 = vsel %vm2426, %v2665, %v2619
        %v2673 = vsel %vm2426, %v2666, %v2621
        %v2674 = vsel %vm2426, %v2667, %v2623
        %v2675 = vsel %vm2426, %v2668, %v2625
        %v2676 = vsel %vm2426, %v2669, %v2627
        %2677 = vrot.lane.b32.xlu0 %v1843, 32
        %v2678 = vpop.permute.xlu0 %2677
        %2679 = vrot.lane.b32.xlu0 %v1844, 32
        %v2680 = vpop.permute.xlu0 %2679
        %2681 = vrot.lane.b32.xlu0 %v1845, 32
        %v2682 = vpop.permute.xlu0 %2681
        %2683 = vrot.lane.b32.xlu0 %v1846, 32
        %v2684 = vpop.permute.xlu0 %2683
        %2685 = vrot.lane.b32.xlu0 %v1847, 32
        %v2686 = vpop.permute.xlu0 %2685
        %2687 = vrot.lane.b32.xlu0 %v1848, 32
        %v2688 = vpop.permute.xlu0 %2687
        %2689 = vrot.lane.b32.xlu0 %v1849, 32
        %v2690 = vpop.permute.xlu0 %2689
        %v2698 = vrot.slane %v1878, 1
        %v2699 = vrot.slane %v1879, 1
        %v2700 = vsel %vm2058, %v2698, %v2699
        %v2701 = vrot.slane %v1880, 1
        %v2702 = vsel %vm2058, %v2699, %v2701
        %v2703 = vrot.slane %v1881, 1
        %v2704 = vsel %vm2058, %v2701, %v2703
        %v2705 = vrot.slane %v1882, 1
        %v2706 = vsel %vm2058, %v2703, %v2705
        %v2707 = vrot.slane %v1883, 1
        %v2708 = vsel %vm2058, %v2705, %v2707
        %v2709 = vrot.slane %v1884, 1
        %v2710 = vsel %vm2058, %v2707, %v2709
        %2711 = vrot.lane.b32.xlu0 %v2700, 64
        %v2712 = vpop.permute.xlu0 %2711
        %2713 = vrot.lane.b32.xlu0 %v2702, 64
        %v2714 = vpop.permute.xlu0 %2713
        %2715 = vrot.lane.b32.xlu0 %v2704, 64
        %v2716 = vpop.permute.xlu0 %2715
        %2717 = vrot.lane.b32.xlu0 %v2706, 64
        %v2718 = vpop.permute.xlu0 %2717
        %2719 = vrot.lane.b32.xlu0 %v2708, 64
        %v2720 = vpop.permute.xlu0 %2719
        %2721 = vrot.lane.b32.xlu0 %v2710, 64
        %v2722 = vpop.permute.xlu0 %2721
        %2723 = vrot.lane.b32.xlu0 %v2709, 64
        %v2724 = vpop.permute.xlu0 %2723
        %vm2732 = vcmask 1045504
        %v2733 = vrot.slane %v1955, 2
        %v2734 = vrot.slane %v1956, 2
        %v2735 = vsel %vm2732, %v2733, %v2734
        %v2736 = vrot.slane %v1957, 2
        %v2737 = vsel %vm2732, %v2734, %v2736
        %v2738 = vrot.slane %v1958, 2
        %v2739 = vsel %vm2732, %v2736, %v2738
        %v2740 = vrot.slane %v1959, 2
        %v2741 = vsel %vm2732, %v2738, %v2740
        %v2742 = vrot.slane %v1960, 2
        %v2743 = vsel %vm2732, %v2740, %v2742
        %v2744 = vrot.slane %v1961, 2
        %v2745 = vsel %vm2732, %v2742, %v2744
        %2746 = vrot.lane.b32.xlu0 %v2735, 96
        %v2747 = vpop.permute.xlu0 %2746
        %2748 = vrot.lane.b32.xlu0 %v2737, 96
        %v2749 = vpop.permute.xlu0 %2748
        %2750 = vrot.lane.b32.xlu0 %v2739, 96
        %v2751 = vpop.permute.xlu0 %2750
        %2752 = vrot.lane.b32.xlu0 %v2741, 96
        %v2753 = vpop.permute.xlu0 %2752
        %2754 = vrot.lane.b32.xlu0 %v2743, 96
        %v2755 = vpop.permute.xlu0 %2754
        %2756 = vrot.lane.b32.xlu0 %v2745, 96
        %v2757 = vpop.permute.xlu0 %2756
        %2758 = vrot.lane.b32.xlu0 %v2744, 96
        %v2759 = vpop.permute.xlu0 %2758
        %v2767 = vrot.slane %v1982, 2
        %v2768 = vrot.slane %v1983, 2
        %v2769 = vsel %vm2732, %v2767, %v2768
        %v2770 = vrot.slane %v1984, 2
        %v2771 = vsel %vm2732, %v2768, %v2770
        %v2772 = vrot.slane %v1985, 2
        %v2773 = vsel %vm2732, %v2770, %v2772
        %v2774 = vrot.slane %v1986, 2
        %v2775 = vsel %vm2732, %v2772, %v2774
        %v2776 = vrot.slane %v1987, 2
        %v2777 = vsel %vm2732, %v2774, %v2776
        %v2778 = vrot.slane %v1988, 2
        %v2779 = vsel %vm2732, %v2776, %v2778
        %v2787 = vrot.slane %v2009, 3
        %v2788 = vrot.slane %v2010, 3
        %v2789 = vsel %vm864, %v2787, %v2788
        %v2790 = vrot.slane %v2011, 3
        %v2791 = vsel %vm864, %v2788, %v2790
        %v2792 = vrot.slane %v2012, 3
        %v2793 = vsel %vm864, %v2790, %v2792
        %v2794 = vrot.slane %v2013, 3
        %v2795 = vsel %vm864, %v2792, %v2794
        %v2796 = vrot.slane %v2014, 3
        %v2797 = vsel %vm864, %v2794, %v2796
        %v2798 = vrot.slane %v2015, 3
        %v2799 = vsel %vm864, %v2796, %v2798
        %2800 = vrot.lane.b32.xlu0 %v2789, 32
        %v2801 = vpop.permute.xlu0 %2800
        %2802 = vrot.lane.b32.xlu0 %v2791, 32
        %v2803 = vpop.permute.xlu0 %2802
        %2804 = vrot.lane.b32.xlu0 %v2793, 32
        %v2805 = vpop.permute.xlu0 %2804
        %2806 = vrot.lane.b32.xlu0 %v2795, 32
        %v2807 = vpop.permute.xlu0 %2806
        %2808 = vrot.lane.b32.xlu0 %v2797, 32
        %v2809 = vpop.permute.xlu0 %2808
        %2810 = vrot.lane.b32.xlu0 %v2799, 32
        %v2811 = vpop.permute.xlu0 %2810
        %2812 = vrot.lane.b32.xlu0 %v2798, 32
        %v2813 = vpop.permute.xlu0 %2812
        %v2828 = vrot.slane %v2079, 7
        %v2829 = vrot.slane %v2080, 7
        %v2830 = vsel %vm1857, %v2828, %v2829
        %v2831 = vrot.slane %v2081, 7
        %v2832 = vsel %vm1857, %v2829, %v2831
        %v2833 = vrot.slane %v2082, 7
        %v2834 = vsel %vm1857, %v2831, %v2833
        %v2835 = vrot.slane %v2083, 7
        %v2836 = vsel %vm1857, %v2833, %v2835
        %v2837 = vrot.slane %v2084, 7
        %v2838 = vsel %vm1857, %v2835, %v2837
        %v2839 = vrot.slane %v2085, 7
        %v2840 = vsel %vm1857, %v2837, %v2839
        %2841 = vrot.lane.b32.xlu0 %v2830, 64
        %v2842 = vpop.permute.xlu0 %2841
        %2843 = vrot.lane.b32.xlu0 %v2832, 64
        %v2844 = vpop.permute.xlu0 %2843
        %2845 = vrot.lane.b32.xlu0 %v2834, 64
        %v2846 = vpop.permute.xlu0 %2845
        %2847 = vrot.lane.b32.xlu0 %v2836, 64
        %v2848 = vpop.permute.xlu0 %2847
        %2849 = vrot.lane.b32.xlu0 %v2838, 64
        %v2850 = vpop.permute.xlu0 %2849
        %2851 = vrot.lane.b32.xlu0 %v2840, 64
        %v2852 = vpop.permute.xlu0 %2851
        %2853 = vrot.lane.b32.xlu0 %v2839, 64
        %v2854 = vpop.permute.xlu0 %2853
        %v2869 = vrot.slane %v2121, 7
        %v2870 = vrot.slane %v2122, 7
        %v2871 = vsel %vm1857, %v2869, %v2870
        %v2872 = vrot.slane %v2123, 7
        %v2873 = vsel %vm1857, %v2870, %v2872
        %v2874 = vrot.slane %v2124, 7
        %v2875 = vsel %vm1857, %v2872, %v2874
        %v2876 = vrot.slane %v2125, 7
        %v2877 = vsel %vm1857, %v2874, %v2876
        %v2878 = vrot.slane %v2126, 7
        %v2879 = vsel %vm1857, %v2876, %v2878
        %v2880 = vrot.slane %v2127, 7
        %v2881 = vsel %vm1857, %v2878, %v2880
        %2882 = vrot.lane.b32.xlu0 %v2871, 96
        %v2883 = vpop.permute.xlu0 %2882
        %2884 = vrot.lane.b32.xlu0 %v2873, 96
        %v2885 = vpop.permute.xlu0 %2884
        %2886 = vrot.lane.b32.xlu0 %v2875, 96
        %v2887 = vpop.permute.xlu0 %2886
        %2888 = vrot.lane.b32.xlu0 %v2877, 96
        %v2889 = vpop.permute.xlu0 %2888
        %2890 = vrot.lane.b32.xlu0 %v2879, 96
        %v2891 = vpop.permute.xlu0 %2890
        %2892 = vrot.lane.b32.xlu0 %v2881, 96
        %v2893 = vpop.permute.xlu0 %2892
        %2894 = vrot.lane.b32.xlu0 %v2880, 96
        %v2895 = vpop.permute.xlu0 %2894
        %v2903 = vsel %vm2410, %v1828, %v2678
        %v2904 = vsel %vm2410, %v1829, %v2680
        %v2905 = vsel %vm2410, %v1830, %v2682
        %v2906 = vsel %vm2410, %v1831, %v2684
        %v2907 = vsel %vm2410, %v1832, %v2686
        %v2908 = vsel %vm2410, %v1833, %v2688
        %v2909 = vsel %vm2410, %v1834, %v2690
        %v2910 = vsel %vm2418, %v2903, %v2712
        %v2911 = vsel %vm2418, %v2904, %v2714
        %v2912 = vsel %vm2418, %v2905, %v2716
        %v2913 = vsel %vm2418, %v2906, %v2718
        %v2914 = vsel %vm2418, %v2907, %v2720
        %v2915 = vsel %vm2418, %v2908, %v2722
        %v2916 = vsel %vm2418, %v2909, %v2724
        %v2917 = vsel %vm2426, %v2910, %v2747
        %v2918 = vsel %vm2426, %v2911, %v2749
        %v2919 = vsel %vm2426, %v2912, %v2751
        %v2920 = vsel %vm2426, %v2913, %v2753
        %v2921 = vsel %vm2426, %v2914, %v2755
        %v2922 = vsel %vm2426, %v2915, %v2757
        %v2923 = vsel %vm2426, %v2916, %v2759
        %v2924 = vsel %vm2410, %v2769, %v2801
        %v2925 = vsel %vm2410, %v2771, %v2803
        %v2926 = vsel %vm2410, %v2773, %v2805
        %v2927 = vsel %vm2410, %v2775, %v2807
        %v2928 = vsel %vm2410, %v2777, %v2809
        %v2929 = vsel %vm2410, %v2779, %v2811
        %v2930 = vsel %vm2410, %v2778, %v2813
        %v2931 = vsel %vm2418, %v2924, %v2842
        %v2932 = vsel %vm2418, %v2925, %v2844
        %v2933 = vsel %vm2418, %v2926, %v2846
        %v2934 = vsel %vm2418, %v2927, %v2848
        %v2935 = vsel %vm2418, %v2928, %v2850
        %v2936 = vsel %vm2418, %v2929, %v2852
        %v2937 = vsel %vm2418, %v2930, %v2854
        %v2938 = vsel %vm2426, %v2931, %v2883
        %v2939 = vsel %vm2426, %v2932, %v2885
        %v2940 = vsel %vm2426, %v2933, %v2887
        %v2941 = vsel %vm2426, %v2934, %v2889
        %v2942 = vsel %vm2426, %v2935, %v2891
        %v2943 = vsel %vm2426, %v2936, %v2893
        %v2944 = vsel %vm2426, %v2937, %v2895
        %2945 = vrot.lane.b32.xlu0 %v2700, 32
        %v2946 = vpop.permute.xlu0 %2945
        %2947 = vrot.lane.b32.xlu0 %v2702, 32
        %v2948 = vpop.permute.xlu0 %2947
        %2949 = vrot.lane.b32.xlu0 %v2704, 32
        %v2950 = vpop.permute.xlu0 %2949
        %2951 = vrot.lane.b32.xlu0 %v2706, 32
        %v2952 = vpop.permute.xlu0 %2951
        %2953 = vrot.lane.b32.xlu0 %v2708, 32
        %v2954 = vpop.permute.xlu0 %2953
        %2955 = vrot.lane.b32.xlu0 %v2710, 32
        %v2956 = vpop.permute.xlu0 %2955
        %2957 = vrot.lane.b32.xlu0 %v2709, 32
        %v2958 = vpop.permute.xlu0 %2957
        %v2966 = vrot.slane %v1920, 1
        %v2967 = vrot.slane %v1921, 1
        %v2968 = vsel %vm2058, %v2966, %v2967
        %v2969 = vrot.slane %v1922, 1
        %v2970 = vsel %vm2058, %v2967, %v2969
        %v2971 = vrot.slane %v1923, 1
        %v2972 = vsel %vm2058, %v2969, %v2971
        %v2973 = vrot.slane %v1924, 1
        %v2974 = vsel %vm2058, %v2971, %v2973
        %v2975 = vrot.slane %v1925, 1
        %v2976 = vsel %vm2058, %v2973, %v2975
        %v2977 = vrot.slane %v1926, 1
        %v2978 = vsel %vm2058, %v2975, %v2977
        %2979 = vrot.lane.b32.xlu0 %v2968, 64
        %v2980 = vpop.permute.xlu0 %2979
        %2981 = vrot.lane.b32.xlu0 %v2970, 64
        %v2982 = vpop.permute.xlu0 %2981
        %2983 = vrot.lane.b32.xlu0 %v2972, 64
        %v2984 = vpop.permute.xlu0 %2983
        %2985 = vrot.lane.b32.xlu0 %v2974, 64
        %v2986 = vpop.permute.xlu0 %2985
        %2987 = vrot.lane.b32.xlu0 %v2976, 64
        %v2988 = vpop.permute.xlu0 %2987
        %2989 = vrot.lane.b32.xlu0 %v2978, 64
        %v2990 = vpop.permute.xlu0 %2989
        %2991 = vrot.lane.b32.xlu0 %v2977, 64
        %v2992 = vpop.permute.xlu0 %2991
        %3000 = vrot.lane.b32.xlu0 %v2769, 96
        %v3001 = vpop.permute.xlu0 %3000
        %3002 = vrot.lane.b32.xlu0 %v2771, 96
        %v3003 = vpop.permute.xlu0 %3002
        %3004 = vrot.lane.b32.xlu0 %v2773, 96
        %v3005 = vpop.permute.xlu0 %3004
        %3006 = vrot.lane.b32.xlu0 %v2775, 96
        %v3007 = vpop.permute.xlu0 %3006
        %3008 = vrot.lane.b32.xlu0 %v2777, 96
        %v3009 = vpop.permute.xlu0 %3008
        %3010 = vrot.lane.b32.xlu0 %v2779, 96
        %v3011 = vpop.permute.xlu0 %3010
        %3012 = vrot.lane.b32.xlu0 %v2778, 96
        %v3013 = vpop.permute.xlu0 %3012
        %v3035 = vrot.slane %v2036, 3
        %v3036 = vrot.slane %v2037, 3
        %v3037 = vsel %vm864, %v3035, %v3036
        %v3038 = vrot.slane %v2038, 3
        %v3039 = vsel %vm864, %v3036, %v3038
        %v3040 = vrot.slane %v2039, 3
        %v3041 = vsel %vm864, %v3038, %v3040
        %v3042 = vrot.slane %v2040, 3
        %v3043 = vsel %vm864, %v3040, %v3042
        %v3044 = vrot.slane %v2041, 3
        %v3045 = vsel %vm864, %v3042, %v3044
        %v3046 = vrot.slane %v2042, 3
        %v3047 = vsel %vm864, %v3044, %v3046
        %3048 = vrot.lane.b32.xlu0 %v3037, 32
        %v3049 = vpop.permute.xlu0 %3048
        %3050 = vrot.lane.b32.xlu0 %v3039, 32
        %v3051 = vpop.permute.xlu0 %3050
        %3052 = vrot.lane.b32.xlu0 %v3041, 32
        %v3053 = vpop.permute.xlu0 %3052
        %3054 = vrot.lane.b32.xlu0 %v3043, 32
        %v3055 = vpop.permute.xlu0 %3054
        %3056 = vrot.lane.b32.xlu0 %v3045, 32
        %v3057 = vpop.permute.xlu0 %3056
        %3058 = vrot.lane.b32.xlu0 %v3047, 32
        %v3059 = vpop.permute.xlu0 %3058
        %3060 = vrot.lane.b32.xlu0 %v3046, 32
        %v3061 = vpop.permute.xlu0 %3060
        %3069 = vrot.lane.b32.xlu0 %v2871, 64
        %v3070 = vpop.permute.xlu0 %3069
        %3071 = vrot.lane.b32.xlu0 %v2873, 64
        %v3072 = vpop.permute.xlu0 %3071
        %3073 = vrot.lane.b32.xlu0 %v2875, 64
        %v3074 = vpop.permute.xlu0 %3073
        %3075 = vrot.lane.b32.xlu0 %v2877, 64
        %v3076 = vpop.permute.xlu0 %3075
        %3077 = vrot.lane.b32.xlu0 %v2879, 64
        %v3078 = vpop.permute.xlu0 %3077
        %3079 = vrot.lane.b32.xlu0 %v2881, 64
        %v3080 = vpop.permute.xlu0 %3079
        %3081 = vrot.lane.b32.xlu0 %v2880, 64
        %v3082 = vpop.permute.xlu0 %3081
        %3097 = vrot.lane.b32.xlu0 %v2128, 96
        %v3098 = vpop.permute.xlu0 %3097
        %3099 = vrot.lane.b32.xlu0 %v2129, 96
        %v3100 = vpop.permute.xlu0 %3099
        %3101 = vrot.lane.b32.xlu0 %v2130, 96
        %v3102 = vpop.permute.xlu0 %3101
        %3103 = vrot.lane.b32.xlu0 %v2131, 96
        %v3104 = vpop.permute.xlu0 %3103
        %3105 = vrot.lane.b32.xlu0 %v2132, 96
        %v3106 = vpop.permute.xlu0 %3105
        %3107 = vrot.lane.b32.xlu0 %v2133, 96
        %v3108 = vpop.permute.xlu0 %3107
        %3109 = vrot.lane.b32.xlu0 %v2134, 96
        %v3110 = vpop.permute.xlu0 %3109
        %v3118 = vsel %vm2410, %v1843, %v2946
        %v3119 = vsel %vm2410, %v1844, %v2948
        %v3120 = vsel %vm2410, %v1845, %v2950
        %v3121 = vsel %vm2410, %v1846, %v2952
        %v3122 = vsel %vm2410, %v1847, %v2954
        %v3123 = vsel %vm2410, %v1848, %v2956
        %v3124 = vsel %vm2410, %v1849, %v2958
        %v3125 = vsel %vm2418, %v3118, %v2980
        %v3126 = vsel %vm2418, %v3119, %v2982
        %v3127 = vsel %vm2418, %v3120, %v2984
        %v3128 = vsel %vm2418, %v3121, %v2986
        %v3129 = vsel %vm2418, %v3122, %v2988
        %v3130 = vsel %vm2418, %v3123, %v2990
        %v3131 = vsel %vm2418, %v3124, %v2992
        %v3132 = vsel %vm2426, %v3125, %v3001
        %v3133 = vsel %vm2426, %v3126, %v3003
        %v3134 = vsel %vm2426, %v3127, %v3005
        %v3135 = vsel %vm2426, %v3128, %v3007
        %v3136 = vsel %vm2426, %v3129, %v3009
        %v3137 = vsel %vm2426, %v3130, %v3011
        %v3138 = vsel %vm2426, %v3131, %v3013
        %v3139 = vsel %vm2410, %v2789, %v3049
        %v3140 = vsel %vm2410, %v2791, %v3051
        %v3141 = vsel %vm2410, %v2793, %v3053
        %v3142 = vsel %vm2410, %v2795, %v3055
        %v3143 = vsel %vm2410, %v2797, %v3057
        %v3144 = vsel %vm2410, %v2799, %v3059
        %v3145 = vsel %vm2410, %v2798, %v3061
        %v3146 = vsel %vm2418, %v3139, %v3070
        %v3147 = vsel %vm2418, %v3140, %v3072
        %v3148 = vsel %vm2418, %v3141, %v3074
        %v3149 = vsel %vm2418, %v3142, %v3076
        %v3150 = vsel %vm2418, %v3143, %v3078
        %v3151 = vsel %vm2418, %v3144, %v3080
        %v3152 = vsel %vm2418, %v3145, %v3082
        %v3153 = vsel %vm2426, %v3146, %v3098
        %v3154 = vsel %vm2426, %v3147, %v3100
        %v3155 = vsel %vm2426, %v3148, %v3102
        %v3156 = vsel %vm2426, %v3149, %v3104
        %v3157 = vsel %vm2426, %v3150, %v3106
        %v3158 = vsel %vm2426, %v3151, %v3108
        %v3159 = vsel %vm2426, %v3152, %v3110
        %v3174 = vrot.slane %v2427, 3
        %v3175 = vrot.slane %v2428, 3
        %v3176 = vsel %vm864, %v3174, %v3175
        %v3177 = vrot.slane %v2448, 3
        %v3178 = vrot.slane %v2449, 3
        %v3179 = vsel %vm864, %v3177, %v3178
        %v3180 = vrot.slane %v2429, 3
        %v3181 = vsel %vm864, %v3175, %v3180
        %v3182 = vrot.slane %v2450, 3
        %v3183 = vsel %vm864, %v3178, %v3182
        %v3184 = vrot.slane %v2430, 3
        %v3185 = vsel %vm864, %v3180, %v3184
        %v3186 = vrot.slane %v2451, 3
        %v3187 = vsel %vm864, %v3182, %v3186
        %v3188 = vrot.slane %v2431, 3
        %v3189 = vsel %vm864, %v3184, %v3188
        %v3190 = vrot.slane %v2452, 3
        %v3191 = vsel %vm864, %v3186, %v3190
        %v3192 = vrot.slane %v2432, 3
        %v3193 = vsel %vm864, %v3188, %v3192
        %v3194 = vrot.slane %v2453, 3
        %v3195 = vsel %vm864, %v3190, %v3194
        %v3196 = vrot.slane %v2433, 3
        %v3197 = vsel %vm864, %v3192, %v3196
        %v3198 = vrot.slane %v2454, 3
        %v3199 = vsel %vm864, %v3194, %v3198
        %v3228 = vrot.slane %v2649, 2
        %v3229 = vrot.slane %v2650, 2
        %v3230 = vsel %vm2732, %v3228, %v3229
        %v3231 = vrot.slane %v2670, 2
        %v3232 = vrot.slane %v2671, 2
        %v3233 = vsel %vm2732, %v3231, %v3232
        %v3234 = vrot.slane %v2036, 2
        %v3235 = vrot.slane %v2037, 2
        %v3236 = vsel %vm2732, %v3234, %v3235
        %v3237 = vrot.slane %v2651, 2
        %v3238 = vsel %vm2732, %v3229, %v3237
        %v3239 = vrot.slane %v2672, 2
        %v3240 = vsel %vm2732, %v3232, %v3239
        %v3241 = vrot.slane %v2038, 2
        %v3242 = vsel %vm2732, %v3235, %v3241
        %v3243 = vrot.slane %v2652, 2
        %v3244 = vsel %vm2732, %v3237, %v3243
        %v3245 = vrot.slane %v2673, 2
        %v3246 = vsel %vm2732, %v3239, %v3245
        %v3247 = vrot.slane %v2039, 2
        %v3248 = vsel %vm2732, %v3241, %v3247
        %v3249 = vrot.slane %v2653, 2
        %v3250 = vsel %vm2732, %v3243, %v3249
        %v3251 = vrot.slane %v2674, 2
        %v3252 = vsel %vm2732, %v3245, %v3251
        %v3253 = vrot.slane %v2040, 2
        %v3254 = vsel %vm2732, %v3247, %v3253
        %v3255 = vrot.slane %v2654, 2
        %v3256 = vsel %vm2732, %v3249, %v3255
        %v3257 = vrot.slane %v2675, 2
        %v3258 = vsel %vm2732, %v3251, %v3257
        %v3259 = vrot.slane %v2041, 2
        %v3260 = vsel %vm2732, %v3253, %v3259
        %v3261 = vrot.slane %v2655, 2
        %v3262 = vsel %vm2732, %v3255, %v3261
        %v3263 = vrot.slane %v2676, 2
        %v3264 = vsel %vm2732, %v3257, %v3263
        %v3265 = vrot.slane %v2042, 2
        %v3266 = vsel %vm2732, %v3259, %v3265
        %v3302 = vrot.slane %v2917, 6
        %v3303 = vrot.slane %v2938, 6
        %v3304 = vrot.slane %v2128, 6
        %v3305 = vrot.slane %v2918, 6
        %v3306 = vsel %vm1934, %v3302, %v3305
        %v3307 = vrot.slane %v2939, 6
        %v3308 = vsel %vm1934, %v3303, %v3307
        %v3309 = vrot.slane %v2129, 6
        %v3310 = vsel %vm1934, %v3304, %v3309
        %v3311 = vrot.slane %v2919, 6
        %v3312 = vsel %vm1934, %v3305, %v3311
        %v3313 = vrot.slane %v2940, 6
        %v3314 = vsel %vm1934, %v3307, %v3313
        %v3315 = vrot.slane %v2130, 6
        %v3316 = vsel %vm1934, %v3309, %v3315
        %v3317 = vrot.slane %v2920, 6
        %v3318 = vsel %vm1934, %v3311, %v3317
        %v3319 = vrot.slane %v2941, 6
        %v3320 = vsel %vm1934, %v3313, %v3319
        %v3321 = vrot.slane %v2131, 6
        %v3322 = vsel %vm1934, %v3315, %v3321
        %v3323 = vrot.slane %v2921, 6
        %v3324 = vsel %vm1934, %v3317, %v3323
        %v3325 = vrot.slane %v2942, 6
        %v3326 = vsel %vm1934, %v3319, %v3325
        %v3327 = vrot.slane %v2132, 6
        %v3328 = vsel %vm1934, %v3321, %v3327
        %v3329 = vrot.slane %v2922, 6
        %v3330 = vsel %vm1934, %v3323, %v3329
        %v3331 = vrot.slane %v2943, 6
        %v3332 = vsel %vm1934, %v3325, %v3331
        %v3333 = vrot.slane %v2133, 6
        %v3334 = vsel %vm1934, %v3327, %v3333
        %v3335 = vrot.slane %v2923, 6
        %v3336 = vsel %vm1934, %v3329, %v3335
        %v3337 = vrot.slane %v2944, 6
        %v3338 = vsel %vm1934, %v3331, %v3337
        %v3339 = vrot.slane %v2134, 6
        %v3340 = vsel %vm1934, %v3333, %v3339
        %v3383 = vrot.slane %v3132, 5
        %v3384 = vrot.slane %v3153, 5
        %v3385 = vrot.slane %v2143, 5
        %v3386 = vrot.slane %v3133, 5
        %v3387 = vsel %vm1681, %v3383, %v3386
        %v3388 = vrot.slane %v3154, 5
        %v3389 = vsel %vm1681, %v3384, %v3388
        %v3390 = vrot.slane %v2144, 5
        %v3391 = vsel %vm1681, %v3385, %v3390
        %v3392 = vrot.slane %v3134, 5
        %v3393 = vsel %vm1681, %v3386, %v3392
        %v3394 = vrot.slane %v3155, 5
        %v3395 = vsel %vm1681, %v3388, %v3394
        %v3396 = vrot.slane %v2145, 5
        %v3397 = vsel %vm1681, %v3390, %v3396
        %v3398 = vrot.slane %v3135, 5
        %v3399 = vsel %vm1681, %v3392, %v3398
        %v3400 = vrot.slane %v3156, 5
        %v3401 = vsel %vm1681, %v3394, %v3400
        %v3402 = vrot.slane %v2146, 5
        %v3403 = vsel %vm1681, %v3396, %v3402
        %v3404 = vrot.slane %v3136, 5
        %v3405 = vsel %vm1681, %v3398, %v3404
        %v3406 = vrot.slane %v3157, 5
        %v3407 = vsel %vm1681, %v3400, %v3406
        %v3408 = vrot.slane %v2147, 5
        %v3409 = vsel %vm1681, %v3402, %v3408
        %v3410 = vrot.slane %v3137, 5
        %v3411 = vsel %vm1681, %v3404, %v3410
        %v3412 = vrot.slane %v3158, 5
        %v3413 = vsel %vm1681, %v3406, %v3412
        %v3414 = vrot.slane %v2148, 5
        %v3415 = vsel %vm1681, %v3408, %v3414
        %v3416 = vrot.slane %v3138, 5
        %v3417 = vsel %vm1681, %v3410, %v3416
        %v3418 = vrot.slane %v3159, 5
        %v3419 = vsel %vm1681, %v3412, %v3418
        %v3420 = vrot.slane %v2149, 5
        %v3421 = vsel %vm1681, %v3414, %v3420
        %v3443 = vsel %vm1857, %v3196, %v3230
        %v3444 = vsel %vm1857, %v3198, %v3233
        %v3445 = vsel %vm1857, %v2798, %v3236
        %v3446 = vsel %vm1934, %v3261, %v3302
        %v3447 = vsel %vm1934, %v3263, %v3303
        %v3448 = vsel %vm1934, %v3265, %v3304
        %v3449 = vsel %vm1681, %v3336, %v3383
        %v3450 = vsel %vm1681, %v3338, %v3384
        %v3451 = vsel %vm1681, %v3340, %v3385
        %v3452 = vpack.c.bf16 %v3181, %v3176
        %v3453 = vpack.c.bf16 %v3183, %v3179
        %v3454 = vpack.c.bf16 %v2791, %v2789
        %v3455 = vpack.c.bf16 %v3189, %v3185
        %v3456 = vpack.c.bf16 %v3191, %v3187
        %v3457 = vpack.c.bf16 %v2795, %v2793
        %v3458 = vpack.c.bf16 %v3197, %v3193
        %v3459 = vpack.c.bf16 %v3199, %v3195
        %v3460 = vpack.c.bf16 %v2799, %v2797
        %v3461 = vpack.c.bf16 %v3238, %v3443
        %v3462 = vpack.c.bf16 %v3240, %v3444
        %v3463 = vpack.c.bf16 %v3242, %v3445
        %v3464 = vpack.c.bf16 %v3250, %v3244
        %v3465 = vpack.c.bf16 %v3252, %v3246
        %v3466 = vpack.c.bf16 %v3254, %v3248
        %v3467 = vpack.c.bf16 %v3262, %v3256
        %v3468 = vpack.c.bf16 %v3264, %v3258
        %v3469 = vpack.c.bf16 %v3266, %v3260
        %v3470 = vpack.c.bf16 %v3306, %v3446
        %v3471 = vpack.c.bf16 %v3308, %v3447
        %v3472 = vpack.c.bf16 %v3310, %v3448
        %v3473 = vpack.c.bf16 %v3318, %v3312
        %v3474 = vpack.c.bf16 %v3320, %v3314
        %v3475 = vpack.c.bf16 %v3322, %v3316
        %v3476 = vpack.c.bf16 %v3330, %v3324
        %v3477 = vpack.c.bf16 %v3332, %v3326
        %v3478 = vpack.c.bf16 %v3334, %v3328
        %v3479 = vpack.c.bf16 %v3387, %v3449
        %v3480 = vpack.c.bf16 %v3389, %v3450
        %v3481 = vpack.c.bf16 %v3391, %v3451
        %v3482 = vpack.c.bf16 %v3399, %v3393
        %v3483 = vpack.c.bf16 %v3401, %v3395
        %v3484 = vpack.c.bf16 %v3403, %v3397
        %v3485 = vpack.c.bf16 %v3411, %v3405
        %v3486 = vpack.c.bf16 %v3413, %v3407
        %v3487 = vpack.c.bf16 %v3415, %v3409
        %v3488 = vpack.c.bf16 %v3417, %v3417
        %v3489 = vpack.c.bf16 %v3419, %v3419
        %v3490 = vpack.c.bf16 %v3421, %v3421
        %v3491 = vld [vmem:[%s4] sm:$0xf]
        %v3492 = vld [vmem:[%s4 + $0x4] sm:$0xf]
        %v3493 = vld [vmem:[%s4 + $0x8] sm:$0xf]
        %v3494 = vld [vmem:[%s4 + $0xc] sm:$0xf]
        %v3495 = vld [vmem:[%s4 + $0x10] sm:$0xf]
        %v3496 = vld [vmem:[%s4 + $0x14] sm:$0xf]
        %v3497 = vld [vmem:[%s4 + $0x18] sm:$0xf]
        %v3498 = vld [vmem:[%s4 + $0x1c] sm:$0xf]
        %v3499 = vld [vmem:[%s4 + $0x20] sm:$0xf]
        %v3500 = vld [vmem:[%s4 + $0x24] sm:$0xf]
        %v3501 = vld [vmem:[%s4 + $0x28] sm:$0xf]
        %v3502 = vld [vmem:[%s4 + $0x2c] sm:$0xf]
        %v3503 = vld [vmem:[%s4 + $0x30] sm:$0xf]
        %v3504 = vld [vmem:[%s4 + $0x34] sm:$0xf]
        %v3505 = vld [vmem:[%s4 + $0x38] sm:$0xf]
        %v3506 = vld [vmem:[%s4 + $0x3c] sm:$0xf]
        %v3507 = vld [vmem:[%s4 + $0x40] sm:$0xf]
        %v3508 = vld [vmem:[%s4 + $0x44] sm:$0xf]
        %v3509 = vld [vmem:[%s4 + $0x48] sm:$0xf]
        %v3510 = vld [vmem:[%s4 + $0x4c] sm:$0xf]
        %v3511 = vld [vmem:[%s4 + $0x50] sm:$0xf]
        %v3512 = vld [vmem:[%s4 + $0x54] sm:$0xf]
        %v3513 = vld [vmem:[%s4 + $0x58] sm:$0xf]
        %v3514 = vld [vmem:[%s4 + $0x5c] sm:$0xf]
        %v3515 = vld [vmem:[%s4 + $0x60] sm:$0xf]
        %v3516 = vld [vmem:[%s4 + $0x64] sm:$0xf]
        %v3517 = vld [vmem:[%s4 + $0x68] sm:$0xf]
        %v3518 = vld [vmem:[%s4 + $0x6c] sm:$0xf]
        %v3519 = vld [vmem:[%s4 + $0x70] sm:$0xf]
        %v3520 = vld [vmem:[%s4 + $0x74] sm:$0xf]
        %v3521 = vld [vmem:[%s4 + $0x78] sm:$0xf]
        %v3522 = vld [vmem:[%s4 + $0x7c] sm:$0xf]
        %v3523 = vld [vmem:[%s4 + $0x80] sm:$0xf]
        %v3524 = vld [vmem:[%s4 + $0x84] sm:$0xf]
        %v3525 = vld [vmem:[%s4 + $0x88] sm:$0xf]
        %v3526 = vld [vmem:[%s4 + $0x8c] sm:$0xf]
        %v3527 = vld [vmem:[%s5] sm:$0x1]
        %v3529 = vlaneseq
        %v3530 = vshrl.u32 %v3529, 7
        %v3531 = vsub.s32 0, %v3530
        %v3532 = vrot.slane %v3527, %v3531
        %v3570 = vunpack.c.l.b16 %v3491
        %v3571 = vunpack.c.l.b16 %v3492
        %v3572 = vunpack.c.l.b16 %v3493
        %v3573 = vunpack.c.l.b16 %v3494
        %v3574 = vunpack.c.l.b16 %v3495
        %v3575 = vunpack.c.l.b16 %v3496
        %v3576 = vunpack.c.l.b16 %v3497
        %v3577 = vunpack.c.l.b16 %v3498
        %v3578 = vunpack.c.l.b16 %v3499
        %v3579 = vunpack.c.l.b16 %v3500
        %v3580 = vunpack.c.l.b16 %v3501
        %v3581 = vunpack.c.l.b16 %v3502
        %v3582 = vunpack.c.l.b16 %v3503
        %v3583 = vunpack.c.l.b16 %v3504
        %v3584 = vunpack.c.l.b16 %v3505
        %v3585 = vunpack.c.l.b16 %v3506
        %v3586 = vunpack.c.l.b16 %v3507
        %v3587 = vunpack.c.l.b16 %v3508
        %v3588 = vunpack.c.l.b16 %v3509
        %v3589 = vunpack.c.l.b16 %v3510
        %v3590 = vunpack.c.l.b16 %v3511
        %v3591 = vunpack.c.l.b16 %v3512
        %v3592 = vunpack.c.l.b16 %v3513
        %v3593 = vunpack.c.l.b16 %v3514
        %v3594 = vunpack.c.l.b16 %v3515
        %v3595 = vunpack.c.l.b16 %v3516
        %v3596 = vunpack.c.l.b16 %v3517
        %v3597 = vunpack.c.l.b16 %v3518
        %v3598 = vunpack.c.l.b16 %v3519
        %v3599 = vunpack.c.l.b16 %v3520
        %v3600 = vunpack.c.l.b16 %v3521
        %v3601 = vunpack.c.l.b16 %v3522
        %v3602 = vunpack.c.l.b16 %v3523
        %v3603 = vunpack.c.l.b16 %v3524
        %v3604 = vunpack.c.l.b16 %v3525
        %v3605 = vunpack.c.l.b16 %v3526
        %v3606 = vpack.c.b16 %v3571, %v3570
        %v3607 = vpack.c.b16 %v3573, %v3572
        %v3608 = vpack.c.b16 %v3575, %v3574
        %v3609 = vpack.c.b16 %v3577, %v3576
        %v3610 = vpack.c.b16 %v3579, %v3578
        %v3611 = vpack.c.b16 %v3581, %v3580
        %v3612 = vpack.c.b16 %v3583, %v3582
        %v3613 = vpack.c.b16 %v3585, %v3584
        %v3614 = vpack.c.b16 %v3587, %v3586
        %v3615 = vpack.c.b16 %v3589, %v3588
        %v3616 = vpack.c.b16 %v3591, %v3590
        %v3617 = vpack.c.b16 %v3593, %v3592
        %v3618 = vpack.c.b16 %v3595, %v3594
        %v3619 = vpack.c.b16 %v3597, %v3596
        %v3620 = vpack.c.b16 %v3599, %v3598
        %v3621 = vpack.c.b16 %v3601, %v3600
        %v3622 = vpack.c.b16 %v3603, %v3602
        %v3623 = vpack.c.b16 %v3605, %v3604
        %v3643 = vsel %vm2410, %v3454, 0
        %v3646 = vsel %vm2410, %v3457, 0
        %v3649 = vsel %vm2410, %v3460, 0
        %v3652 = vsel %vm2410, %v3463, 0
        %v3655 = vsel %vm2410, %v3466, 0
        %v3658 = vsel %vm2410, %v3469, 0
        %v3661 = vsel %vm2410, %v3472, 0
        %v3664 = vsel %vm2410, %v3475, 0
        %v3667 = vsel %vm2410, %v3478, 0
        %v3670 = vsel %vm2410, %v3481, 0
        %v3673 = vsel %vm2410, %v3484, 0
        %v3676 = vsel %vm2410, %v3487, 0
        %v3679 = vsel %vm2410, %v3490, 0
        %3681 = vmatprep.subr.bf16.mxu0 0
        %3682 = vmatpush1.bf16.msra.mxu0 %v3606
        %3683 = vmatprep.subr.bf16.mxu0 0
        %3684 = vmatpush1.bf16.msra.mxu0 %v3607
        %3685 = vmatprep.subr.bf16.mxu0 0
        %3686 = vmatpush1.bf16.msra.mxu0 %v3608
        %3687 = vmatprep.subr.bf16.mxu0 0
        %3688 = vmatpush1.bf16.msra.mxu0 %v3609
        %3689 = vmatprep.subr.bf16.mxu0 0
        %3690 = vmatpush1.bf16.msra.mxu0 %v3610
        %3691 = vmatprep.subr.bf16.mxu0 0
        %3692 = vmatpush1.bf16.msra.mxu0 %v3611
        %3693 = vmatprep.subr.bf16.mxu0 0
        %3694 = vmatpush1.bf16.msra.mxu0 %v3612
        %3695 = vmatprep.subr.bf16.mxu0 0
        %3696 = vmatpush1.bf16.msra.mxu0 %v3613
        %3697 = vmatprep.subr.bf16.mxu0 0
        %3698 = vmatpush1.bf16.msra.mxu0 %v3614
        %3699 = vmatprep.subr.bf16.mxu0 0
        %3700 = vmatpush1.bf16.msra.mxu0 %v3615
        %3701 = vmatprep.subr.bf16.mxu0 0
        %3702 = vmatpush1.bf16.msra.mxu0 %v3616
        %3703 = vmatprep.subr.bf16.mxu0 0
        %3704 = vmatpush1.bf16.msra.mxu0 %v3617
        %3705 = vmatprep.subr.bf16.mxu0 0
        %3706 = vmatpush1.bf16.msra.mxu0 %v3618
        %3707 = vmatprep.subr.bf16.mxu0 0
        %3708 = vmatpush1.bf16.msra.mxu0 %v3619
        %3709 = vmatprep.subr.bf16.mxu0 0
        %3710 = vmatpush1.bf16.msra.mxu0 %v3620
        %3711 = vmatprep.subr.bf16.mxu0 0
        %3712 = vmatpush1.bf16.msra.mxu0 %v3621
        %3713 = vmatprep.mubr.bf16.mxu0 %v3453
        %3714 = vmatmul.mubr.bf16.gmra.mrb[0].mxu0 %v3452
        %v3715 = vpop.f32.mrb[0].mxu0
        %v3716 = vadd.f32 %v3532, %v3715
        %v3717 = vpop.f32.mrb[0].mxu0
        %v3718 = vpop.f32.mrb[0].mxu0
        %v3719 = vadd.f32 %v3532, %v3718
        %v3720 = vpop.f32.mrb[0].mxu0
        %3721 = vmatprep.mubr.bf16.mxu0 %v3456
        %3722 = vmatmul.mubr.bf16.gmra.mrb[0].mxu0 %v3455
        %v3723 = vpop.f32.mrb[0].mxu0
        %v3724 = vadd.f32 %v3532, %v3723
        %v3725 = vpop.f32.mrb[0].mxu0
        %v3726 = vpop.f32.mrb[0].mxu0
        %v3727 = vadd.f32 %v3532, %v3726
        %v3728 = vpop.f32.mrb[0].mxu0
        %3729 = vmatprep.mubr.bf16.mxu0 %v3459
        %3730 = vmatmul.mubr.bf16.gmra.mrb[0].mxu0 %v3458
        %v3731 = vpop.f32.mrb[0].mxu0
        %v3732 = vadd.f32 %v3532, %v3731
        %v3733 = vpop.f32.mrb[0].mxu0
        %v3734 = vpop.f32.mrb[0].mxu0
        %v3735 = vadd.f32 %v3532, %v3734
        %v3736 = vpop.f32.mrb[0].mxu0
        %3737 = vmatprep.mubr.bf16.mxu0 %v3462
        %3738 = vmatmul.mubr.bf16.gmra.mrb[0].mxu0 %v3461
        %v3739 = vpop.f32.mrb[0].mxu0
        %v3740 = vadd.f32 %v3532, %v3739
        %v3741 = vpop.f32.mrb[0].mxu0
        %v3742 = vpop.f32.mrb[0].mxu0
        %v3743 = vadd.f32 %v3532, %v3742
        %v3744 = vpop.f32.mrb[0].mxu0
        %3745 = vmatprep.mubr.bf16.mxu0 %v3465
        %3746 = vmatmul.mubr.bf16.gmra.mrb[0].mxu0 %v3464
        %v3747 = vpop.f32.mrb[0].mxu0
        %v3748 = vadd.f32 %v3532, %v3747
        %v3749 = vpop.f32.mrb[0].mxu0
        %v3750 = vpop.f32.mrb[0].mxu0
        %v3751 = vadd.f32 %v3532, %v3750
        %v3752 = vpop.f32.mrb[0].mxu0
        %3753 = vmatprep.mubr.bf16.mxu0 %v3468
        %3754 = vmatmul.mubr.bf16.gmra.mrb[0].mxu0 %v3467
        %v3755 = vpop.f32.mrb[0].mxu0
        %v3756 = vadd.f32 %v3532, %v3755
        %v3757 = vpop.f32.mrb[0].mxu0
        %v3758 = vpop.f32.mrb[0].mxu0
        %v3759 = vadd.f32 %v3532, %v3758
        %v3760 = vpop.f32.mrb[0].mxu0
        %3761 = vmatprep.mubr.bf16.mxu0 %v3471
        %3762 = vmatmul.mubr.bf16.gmra.mrb[0].mxu0 %v3470
        %v3763 = vpop.f32.mrb[0].mxu0
        %v3764 = vadd.f32 %v3532, %v3763
        %v3765 = vpop.f32.mrb[0].mxu0
        %v3766 = vpop.f32.mrb[0].mxu0
        %v3767 = vadd.f32 %v3532, %v3766
        %v3768 = vpop.f32.mrb[0].mxu0
        %3769 = vmatprep.mubr.bf16.mxu0 %v3474
        %3770 = vmatmul.mubr.bf16.gmra.mrb[0].mxu0 %v3473
        %v3771 = vpop.f32.mrb[0].mxu0
        %v3772 = vadd.f32 %v3532, %v3771
        %v3773 = vpop.f32.mrb[0].mxu0
        %v3774 = vpop.f32.mrb[0].mxu0
        %v3775 = vadd.f32 %v3532, %v3774
        %v3776 = vpop.f32.mrb[0].mxu0
        %3777 = vmatprep.mubr.bf16.mxu0 %v3477
        %3778 = vmatmul.mubr.bf16.gmra.mrb[0].mxu0 %v3476
        %v3779 = vpop.f32.mrb[0].mxu0
        %v3780 = vadd.f32 %v3532, %v3779
        %v3781 = vpop.f32.mrb[0].mxu0
        %v3782 = vpop.f32.mrb[0].mxu0
        %v3783 = vadd.f32 %v3532, %v3782
        %v3784 = vpop.f32.mrb[0].mxu0
        %3785 = vmatprep.mubr.bf16.mxu0 %v3480
        %3786 = vmatmul.mubr.bf16.gmra.mrb[0].mxu0 %v3479
        %v3787 = vpop.f32.mrb[0].mxu0
        %v3788 = vadd.f32 %v3532, %v3787
        %v3789 = vpop.f32.mrb[0].mxu0
        %v3790 = vpop.f32.mrb[0].mxu0
        %v3791 = vadd.f32 %v3532, %v3790
        %v3792 = vpop.f32.mrb[0].mxu0
        %3793 = vmatprep.mubr.bf16.mxu0 %v3483
        %3794 = vmatmul.mubr.bf16.gmra.mrb[0].mxu0 %v3482
        %v3795 = vpop.f32.mrb[0].mxu0
        %v3796 = vadd.f32 %v3532, %v3795
        %v3797 = vpop.f32.mrb[0].mxu0
        %v3798 = vpop.f32.mrb[0].mxu0
        %v3799 = vadd.f32 %v3532, %v3798
        %v3800 = vpop.f32.mrb[0].mxu0
        %3801 = vmatprep.mubr.bf16.mxu0 %v3486
        %3802 = vmatmul.mubr.bf16.gmra.mrb[0].mxu0 %v3485
        %v3803 = vpop.f32.mrb[0].mxu0
        %v3804 = vadd.f32 %v3532, %v3803
        %v3805 = vpop.f32.mrb[0].mxu0
        %v3806 = vpop.f32.mrb[0].mxu0
        %v3807 = vadd.f32 %v3532, %v3806
        %v3808 = vpop.f32.mrb[0].mxu0
        %3809 = vmatprep.mubr.bf16.mxu0 %v3489
        %3810 = vmatmul.mubr.bf16.gmra.mrb[0].mxu0 %v3488
        %v3811 = vpop.f32.mrb[0].mxu0
        %v3812 = vadd.f32 %v3532, %v3811
        %v3813 = vpop.f32.mrb[0].mxu0
        %v3814 = vpop.f32.mrb[0].mxu0
        %v3815 = vpop.f32.mrb[0].mxu0
        %3816 = vdwg.mxu0
        %3817 = vmatprep.subr.bf16.mxu0 0
        %3818 = vmatpush1.bf16.msra.mxu0 %v3622
        %3819 = vmatprep.subr.bf16.mxu0 0
        %3820 = vmatpush1.bf16.msra.mxu0 %v3623
        %3821 = vmatprep.subr.bf16.mxu0 0
        %3822 = vmatpush1.bf16.msra.mxu0 0
        %3823 = vmatprep.subr.bf16.mxu0 0
        %3824 = vmatpush1.bf16.msra.mxu0 0
        %3825 = vmatprep.subr.bf16.mxu0 0
        %3826 = vmatpush1.bf16.msra.mxu0 0
        %3827 = vmatprep.subr.bf16.mxu0 0
        %3828 = vmatpush1.bf16.msra.mxu0 0
        %3829 = vmatprep.subr.bf16.mxu0 0
        %3830 = vmatpush1.bf16.msra.mxu0 0
        %3831 = vmatprep.subr.bf16.mxu0 0
        %3832 = vmatpush1.bf16.msra.mxu0 0
        %3833 = vmatprep.subr.bf16.mxu0 0
        %3834 = vmatpush1.bf16.msra.mxu0 0
        %3835 = vmatprep.subr.bf16.mxu0 0
        %3836 = vmatpush1.bf16.msra.mxu0 0
        %3837 = vmatprep.subr.bf16.mxu0 0
        %3838 = vmatpush1.bf16.msra.mxu0 0
        %3839 = vmatprep.subr.bf16.mxu0 0
        %3840 = vmatpush1.bf16.msra.mxu0 0
        %3841 = vmatprep.subr.bf16.mxu0 0
        %3842 = vmatpush1.bf16.msra.mxu0 0
        %3843 = vmatprep.subr.bf16.mxu0 0
        %3844 = vmatpush1.bf16.msra.mxu0 0
        %3845 = vmatprep.subr.bf16.mxu0 0
        %3846 = vmatpush1.bf16.msra.mxu0 0
        %3847 = vmatprep.subr.bf16.mxu0 0
        %3848 = vmatpush1.bf16.msra.mxu0 0
        %3849 = vmatprep.mubr.bf16.mxu0 0
        %3850 = vmatmul.mubr.bf16.gmra.mrb[0].mxu0 %v3643
        %v3851 = vpop.f32.mrb[0].mxu0
        %v3852 = vadd.f32 %v3716, %v3851
        %v3853 = vpop.f32.mrb[0].mxu0
        %v3854 = vpop.f32.mrb[0].mxu0
        %v3855 = vadd.f32 %v3719, %v3854
        %v3856 = vpop.f32.mrb[0].mxu0
        %3857 = vmatprep.mubr.bf16.mxu0 0
        %3858 = vmatmul.mubr.bf16.gmra.mrb[0].mxu0 %v3646
        %v3859 = vpop.f32.mrb[0].mxu0
        %v3860 = vadd.f32 %v3724, %v3859
        %v3861 = vpop.f32.mrb[0].mxu0
        %v3862 = vpop.f32.mrb[0].mxu0
        %v3863 = vadd.f32 %v3727, %v3862
        %v3864 = vpop.f32.mrb[0].mxu0
        %3865 = vmatprep.mubr.bf16.mxu0 0
        %3866 = vmatmul.mubr.bf16.gmra.mrb[0].mxu0 %v3649
        %v3867 = vpop.f32.mrb[0].mxu0
        %v3868 = vadd.f32 %v3732, %v3867
        %v3869 = vpop.f32.mrb[0].mxu0
        %v3870 = vpop.f32.mrb[0].mxu0
        %v3871 = vadd.f32 %v3735, %v3870
        %v3872 = vpop.f32.mrb[0].mxu0
        %3873 = vmatprep.mubr.bf16.mxu0 0
        %3874 = vmatmul.mubr.bf16.gmra.mrb[0].mxu0 %v3652
        %v3875 = vpop.f32.mrb[0].mxu0
        %v3876 = vadd.f32 %v3740, %v3875
        %v3877 = vpop.f32.mrb[0].mxu0
        %v3878 = vpop.f32.mrb[0].mxu0
        %v3879 = vadd.f32 %v3743, %v3878
        %v3880 = vpop.f32.mrb[0].mxu0
        %3881 = vmatprep.mubr.bf16.mxu0 0
        %3882 = vmatmul.mubr.bf16.gmra.mrb[0].mxu0 %v3655
        %v3883 = vpop.f32.mrb[0].mxu0
        %v3884 = vadd.f32 %v3748, %v3883
        %v3885 = vpop.f32.mrb[0].mxu0
        %v3886 = vpop.f32.mrb[0].mxu0
        %v3887 = vadd.f32 %v3751, %v3886
        %v3888 = vpop.f32.mrb[0].mxu0
        %3889 = vmatprep.mubr.bf16.mxu0 0
        %3890 = vmatmul.mubr.bf16.gmra.mrb[0].mxu0 %v3658
        %v3891 = vpop.f32.mrb[0].mxu0
        %v3892 = vadd.f32 %v3756, %v3891
        %v3893 = vpop.f32.mrb[0].mxu0
        %v3894 = vpop.f32.mrb[0].mxu0
        %v3895 = vadd.f32 %v3759, %v3894
        %v3896 = vpop.f32.mrb[0].mxu0
        %3897 = vmatprep.mubr.bf16.mxu0 0
        %3898 = vmatmul.mubr.bf16.gmra.mrb[0].mxu0 %v3661
        %v3899 = vpop.f32.mrb[0].mxu0
        %v3900 = vadd.f32 %v3764, %v3899
        %v3901 = vpop.f32.mrb[0].mxu0
        %v3902 = vpop.f32.mrb[0].mxu0
        %v3903 = vadd.f32 %v3767, %v3902
        %v3904 = vpop.f32.mrb[0].mxu0
        %3905 = vmatprep.mubr.bf16.mxu0 0
        %3906 = vmatmul.mubr.bf16.gmra.mrb[0].mxu0 %v3664
        %v3907 = vpop.f32.mrb[0].mxu0
        %v3908 = vadd.f32 %v3772, %v3907
        %v3909 = vpop.f32.mrb[0].mxu0
        %v3910 = vpop.f32.mrb[0].mxu0
        %v3911 = vadd.f32 %v3775, %v3910
        %v3912 = vpop.f32.mrb[0].mxu0
        %3913 = vmatprep.mubr.bf16.mxu0 0
        %3914 = vmatmul.mubr.bf16.gmra.mrb[0].mxu0 %v3667
        %v3915 = vpop.f32.mrb[0].mxu0
        %v3916 = vadd.f32 %v3780, %v3915
        %v3917 = vpop.f32.mrb[0].mxu0
        %v3918 = vpop.f32.mrb[0].mxu0
        %v3919 = vadd.f32 %v3783, %v3918
        %v3920 = vpop.f32.mrb[0].mxu0
        %3921 = vmatprep.mubr.bf16.mxu0 0
        %3922 = vmatmul.mubr.bf16.gmra.mrb[0].mxu0 %v3670
        %v3923 = vpop.f32.mrb[0].mxu0
        %v3924 = vadd.f32 %v3788, %v3923
        %v3925 = vpop.f32.mrb[0].mxu0
        %v3926 = vpop.f32.mrb[0].mxu0
        %v3927 = vadd.f32 %v3791, %v3926
        %v3928 = vpop.f32.mrb[0].mxu0
        %3929 = vmatprep.mubr.bf16.mxu0 0
        %3930 = vmatmul.mubr.bf16.gmra.mrb[0].mxu0 %v3673
        %v3931 = vpop.f32.mrb[0].mxu0
        %v3932 = vadd.f32 %v3796, %v3931
        %v3933 = vpop.f32.mrb[0].mxu0
        %v3934 = vpop.f32.mrb[0].mxu0
        %v3935 = vadd.f32 %v3799, %v3934
        %v3936 = vpop.f32.mrb[0].mxu0
        %3937 = vmatprep.mubr.bf16.mxu0 0
        %3938 = vmatmul.mubr.bf16.gmra.mrb[0].mxu0 %v3676
        %v3939 = vpop.f32.mrb[0].mxu0
        %v3940 = vadd.f32 %v3804, %v3939
        %v3941 = vpop.f32.mrb[0].mxu0
        %v3942 = vpop.f32.mrb[0].mxu0
        %v3943 = vadd.f32 %v3807, %v3942
        %v3944 = vpop.f32.mrb[0].mxu0
        %3945 = vmatprep.mubr.bf16.mxu0 0
        %3946 = vmatmul.mubr.bf16.gmra.mrb[0].mxu0 %v3679
        %v3947 = vpop.f32.mrb[0].mxu0
        %v3948 = vadd.f32 %v3812, %v3947
        %v3949 = vpop.f32.mrb[0].mxu0
        %v3950 = vpop.f32.mrb[0].mxu0
        %v3951 = vpop.f32.mrb[0].mxu0
        %3952 = vdwg.mxu0
        %v3953 = vmax.f32 %v3852, 0.0
        %v3954 = vmax.f32 %v3855, 0.0
        %v3955 = vmax.f32 %v3860, 0.0
        %v3956 = vmax.f32 %v3863, 0.0
        %v3957 = vmax.f32 %v3868, 0.0
        %v3958 = vmax.f32 %v3871, 0.0
        %v3959 = vmax.f32 %v3876, 0.0
        %v3960 = vmax.f32 %v3879, 0.0
        %v3961 = vmax.f32 %v3884, 0.0
        %v3962 = vmax.f32 %v3887, 0.0
        %v3963 = vmax.f32 %v3892, 0.0
        %v3964 = vmax.f32 %v3895, 0.0
        %v3965 = vmax.f32 %v3900, 0.0
        %v3966 = vmax.f32 %v3903, 0.0
        %v3967 = vmax.f32 %v3908, 0.0
        %v3968 = vmax.f32 %v3911, 0.0
        %v3969 = vmax.f32 %v3916, 0.0
        %v3970 = vmax.f32 %v3919, 0.0
        %v3971 = vmax.f32 %v3924, 0.0
        %v3972 = vmax.f32 %v3927, 0.0
        %v3973 = vmax.f32 %v3932, 0.0
        %v3974 = vmax.f32 %v3935, 0.0
        %v3975 = vmax.f32 %v3940, 0.0
        %v3976 = vmax.f32 %v3943, 0.0
        %v3977 = vmax.f32 %v3948, 0.0
        %v3985 = vrot.slane %v3959, 1
        %v3986 = vrot.slane %v3960, 1
        %v3987 = vsel %vm2058, %v3985, %v3986
        %v3988 = vrot.slane %v3961, 1
        %v3989 = vsel %vm2058, %v3986, %v3988
        %v3990 = vrot.slane %v3962, 1
        %v3991 = vsel %vm2058, %v3988, %v3990
        %v3992 = vrot.slane %v3963, 1
        %v3993 = vsel %vm2058, %v3990, %v3992
        %v3994 = vrot.slane %v3964, 1
        %v3995 = vsel %vm2058, %v3992, %v3994
        %v3996 = vrot.slane %v3965, 1
        %v3997 = vsel %vm2058, %v3994, %v3996
        %v4005 = vmax.f32 %v3953, %v3987
        %v4006 = vmax.f32 %v3954, %v3989
        %v4007 = vmax.f32 %v3955, %v3991
        %v4008 = vmax.f32 %v3956, %v3993
        %v4009 = vmax.f32 %v3957, %v3995
        %v4010 = vmax.f32 %v3958, %v3997
        %v4011 = vmax.f32 %v3959, %v3996
        %v4019 = vrot.slane %v3971, 1
        %v4020 = vrot.slane %v3972, 1
        %v4021 = vsel %vm2058, %v4019, %v4020
        %v4022 = vrot.slane %v3973, 1
        %v4023 = vsel %vm2058, %v4020, %v4022
        %v4024 = vrot.slane %v3974, 1
        %v4025 = vsel %vm2058, %v4022, %v4024
        %v4026 = vrot.slane %v3975, 1
        %v4027 = vsel %vm2058, %v4024, %v4026
        %v4028 = vrot.slane %v3976, 1
        %v4029 = vsel %vm2058, %v4026, %v4028
        %v4030 = vrot.slane %v3977, 1
        %v4031 = vsel %vm2058, %v4028, %v4030
        %v4039 = vmax.f32 %v3965, %v4021
        %v4040 = vmax.f32 %v3966, %v4023
        %v4041 = vmax.f32 %v3967, %v4025
        %v4042 = vmax.f32 %v3968, %v4027
        %v4043 = vmax.f32 %v3969, %v4029
        %v4044 = vmax.f32 %v3970, %v4031
        %v4045 = vmax.f32 %v3971, %v4030
        %v4053 = vrot.slane %v4039, 2
        %v4054 = vrot.slane %v4040, 2
        %v4055 = vsel %vm2732, %v4053, %v4054
        %v4056 = vrot.slane %v4041, 2
        %v4057 = vsel %vm2732, %v4054, %v4056
        %v4058 = vrot.slane %v4042, 2
        %v4059 = vsel %vm2732, %v4056, %v4058
        %v4060 = vrot.slane %v4043, 2
        %v4061 = vsel %vm2732, %v4058, %v4060
        %v4062 = vrot.slane %v4044, 2
        %v4063 = vsel %vm2732, %v4060, %v4062
        %v4064 = vrot.slane %v4045, 2
        %v4065 = vsel %vm2732, %v4062, %v4064
        %v4073 = vmax.f32 %v4005, %v4055
        %v4074 = vmax.f32 %v4006, %v4057
        %v4075 = vmax.f32 %v4007, %v4059
        %v4076 = vmax.f32 %v4008, %v4061
        %v4077 = vmax.f32 %v4009, %v4063
        %v4078 = vmax.f32 %v4010, %v4065
        %v4079 = vmax.f32 %v4011, %v4064
        %v4081 = vrot.slane %v4073, 1
        %4082 = vrot.lane.b32.xlu0 %v4081, 64
        %v4083 = vpop.permute.xlu0 %4082
        %v4085 = vrot.slane %v4073, 2
        %v4087 = vrot.slane %v4073, 3
        %4088 = vrot.lane.b32.xlu0 %v4087, 64
        %v4089 = vpop.permute.xlu0 %4088
        %v4091 = vrot.slane %v4073, 4
        %v4093 = vrot.slane %v4073, 5
        %4094 = vrot.lane.b32.xlu0 %v4093, 64
        %v4095 = vpop.permute.xlu0 %4094
        %v4097 = vrot.slane %v4073, 6
        %v4099 = vrot.slane %v4073, 7
        %4100 = vrot.lane.b32.xlu0 %v4099, 64
        %v4101 = vpop.permute.xlu0 %4100
        %v4104 = vrot.slane %v4074, 1
        %4105 = vrot.lane.b32.xlu0 %v4104, 64
        %v4106 = vpop.permute.xlu0 %4105
        %v4108 = vrot.slane %v4074, 2
        %v4110 = vrot.slane %v4074, 3
        %4111 = vrot.lane.b32.xlu0 %v4110, 64
        %v4112 = vpop.permute.xlu0 %4111
        %v4114 = vrot.slane %v4074, 4
        %v4116 = vrot.slane %v4074, 5
        %4117 = vrot.lane.b32.xlu0 %v4116, 64
        %v4118 = vpop.permute.xlu0 %4117
        %v4120 = vrot.slane %v4074, 6
        %v4122 = vrot.slane %v4074, 7
        %4123 = vrot.lane.b32.xlu0 %v4122, 64
        %v4124 = vpop.permute.xlu0 %4123
        %v4126 = vsel %vm2418, %v4073, %v4083
        %v4127 = vsel %vm2418, %v4085, %v4089
        %v4128 = vsel %vm2418, %v4091, %v4095
        %v4129 = vsel %vm2418, %v4097, %v4101
        %v4130 = vsel %vm2418, %v4074, %v4106
        %v4131 = vsel %vm2418, %v4108, %v4112
        %v4132 = vsel %vm2418, %v4114, %v4118
        %v4133 = vsel %vm2418, %v4120, %v4124
        %v4135 = vrot.slane %v4075, 1
        %4136 = vrot.lane.b32.xlu0 %v4135, 64
        %v4137 = vpop.permute.xlu0 %4136
        %v4139 = vrot.slane %v4075, 2
        %v4141 = vrot.slane %v4075, 3
        %4142 = vrot.lane.b32.xlu0 %v4141, 64
        %v4143 = vpop.permute.xlu0 %4142
        %v4145 = vrot.slane %v4075, 4
        %v4147 = vrot.slane %v4075, 5
        %4148 = vrot.lane.b32.xlu0 %v4147, 64
        %v4149 = vpop.permute.xlu0 %4148
        %v4151 = vrot.slane %v4075, 6
        %v4153 = vrot.slane %v4075, 7
        %4154 = vrot.lane.b32.xlu0 %v4153, 64
        %v4155 = vpop.permute.xlu0 %4154
        %v4158 = vrot.slane %v4076, 1
        %4159 = vrot.lane.b32.xlu0 %v4158, 64
        %v4160 = vpop.permute.xlu0 %4159
        %v4162 = vrot.slane %v4076, 2
        %v4164 = vrot.slane %v4076, 3
        %4165 = vrot.lane.b32.xlu0 %v4164, 64
        %v4166 = vpop.permute.xlu0 %4165
        %v4168 = vrot.slane %v4076, 4
        %v4170 = vrot.slane %v4076, 5
        %4171 = vrot.lane.b32.xlu0 %v4170, 64
        %v4172 = vpop.permute.xlu0 %4171
        %v4174 = vrot.slane %v4076, 6
        %v4176 = vrot.slane %v4076, 7
        %4177 = vrot.lane.b32.xlu0 %v4176, 64
        %v4178 = vpop.permute.xlu0 %4177
        %v4180 = vsel %vm2418, %v4075, %v4137
        %v4181 = vsel %vm2418, %v4139, %v4143
        %v4182 = vsel %vm2418, %v4145, %v4149
        %v4183 = vsel %vm2418, %v4151, %v4155
        %v4184 = vsel %vm2418, %v4076, %v4160
        %v4185 = vsel %vm2418, %v4162, %v4166
        %v4186 = vsel %vm2418, %v4168, %v4172
        %v4187 = vsel %vm2418, %v4174, %v4178
        %v4189 = vrot.slane %v4077, 1
        %4190 = vrot.lane.b32.xlu0 %v4189, 64
        %v4191 = vpop.permute.xlu0 %4190
        %v4193 = vrot.slane %v4077, 2
        %v4195 = vrot.slane %v4077, 3
        %4196 = vrot.lane.b32.xlu0 %v4195, 64
        %v4197 = vpop.permute.xlu0 %4196
        %v4199 = vrot.slane %v4077, 4
        %v4201 = vrot.slane %v4077, 5
        %4202 = vrot.lane.b32.xlu0 %v4201, 64
        %v4203 = vpop.permute.xlu0 %4202
        %v4205 = vrot.slane %v4077, 6
        %v4207 = vrot.slane %v4077, 7
        %4208 = vrot.lane.b32.xlu0 %v4207, 64
        %v4209 = vpop.permute.xlu0 %4208
        %v4212 = vrot.slane %v4078, 1
        %4213 = vrot.lane.b32.xlu0 %v4212, 64
        %v4214 = vpop.permute.xlu0 %4213
        %v4216 = vrot.slane %v4078, 2
        %v4218 = vrot.slane %v4078, 3
        %4219 = vrot.lane.b32.xlu0 %v4218, 64
        %v4220 = vpop.permute.xlu0 %4219
        %v4222 = vrot.slane %v4078, 4
        %v4224 = vrot.slane %v4078, 5
        %4225 = vrot.lane.b32.xlu0 %v4224, 64
        %v4226 = vpop.permute.xlu0 %4225
        %v4228 = vrot.slane %v4078, 6
        %v4230 = vrot.slane %v4078, 7
        %4231 = vrot.lane.b32.xlu0 %v4230, 64
        %v4232 = vpop.permute.xlu0 %4231
        %v4234 = vsel %vm2418, %v4077, %v4191
        %v4235 = vsel %vm2418, %v4193, %v4197
        %v4236 = vsel %vm2418, %v4199, %v4203
        %v4237 = vsel %vm2418, %v4205, %v4209
        %v4238 = vsel %vm2418, %v4078, %v4214
        %v4239 = vsel %vm2418, %v4216, %v4220
        %v4240 = vsel %vm2418, %v4222, %v4226
        %v4241 = vsel %vm2418, %v4228, %v4232
        %v4242 = vpack.c.bf16 %v4126, %v4126
        %v4243 = vpack.c.bf16 %v4127, %v4127
        %v4244 = vpack.c.bf16 %v4128, %v4128
        %v4245 = vpack.c.bf16 %v4129, %v4129
        %v4246 = vpack.c.bf16 %v4130, %v4130
        %v4247 = vpack.c.bf16 %v4131, %v4131
        %v4248 = vpack.c.bf16 %v4132, %v4132
        %v4249 = vpack.c.bf16 %v4133, %v4133
        %v4250 = vpack.c.bf16 %v4180, %v4180
        %v4251 = vpack.c.bf16 %v4181, %v4181
        %v4252 = vpack.c.bf16 %v4182, %v4182
        %v4253 = vpack.c.bf16 %v4183, %v4183
        %v4254 = vpack.c.bf16 %v4184, %v4184
        %v4255 = vpack.c.bf16 %v4185, %v4185
        %v4256 = vpack.c.bf16 %v4186, %v4186
        %v4257 = vpack.c.bf16 %v4187, %v4187
        %v4258 = vpack.c.bf16 %v4234, %v4234
        %v4259 = vpack.c.bf16 %v4235, %v4235
        %v4260 = vpack.c.bf16 %v4236, %v4236
        %v4261 = vpack.c.bf16 %v4237, %v4237
        %v4262 = vpack.c.bf16 %v4238, %v4238
        %v4263 = vpack.c.bf16 %v4239, %v4239
        %v4264 = vpack.c.bf16 %v4240, %v4240
        %v4265 = vpack.c.bf16 %v4241, %v4241
        %v4266 = vpack.c.bf16 %v4079, %v4079
        %v4267 = vld [vmem:[%s6] sm:$0xf]
        %v4268 = vld [vmem:[%s6 + $0x4] sm:$0xf]
        %v4269 = vld [vmem:[%s6 + $0x8] sm:$0xf]
        %v4270 = vld [vmem:[%s6 + $0xc] sm:$0xf]
        %v4271 = vld [vmem:[%s6 + $0x10] sm:$0xf]
        %v4272 = vld [vmem:[%s6 + $0x14] sm:$0xf]
        %v4273 = vld [vmem:[%s6 + $0x18] sm:$0xf]
        %v4274 = vld [vmem:[%s6 + $0x1c] sm:$0xf]
        %v4275 = vld [vmem:[%s6 + $0x20] sm:$0xf]
        %v4276 = vld [vmem:[%s6 + $0x24] sm:$0xf]
        %v4277 = vld [vmem:[%s6 + $0x28] sm:$0xf]
        %v4278 = vld [vmem:[%s6 + $0x2c] sm:$0xf]
        %v4279 = vld [vmem:[%s6 + $0x30] sm:$0xf]
        %v4280 = vld [vmem:[%s6 + $0x34] sm:$0xf]
        %v4281 = vld [vmem:[%s6 + $0x38] sm:$0xf]
        %v4282 = vld [vmem:[%s6 + $0x3c] sm:$0xf]
        %v4283 = vld [vmem:[%s6 + $0x40] sm:$0xf]
        %v4284 = vld [vmem:[%s6 + $0x44] sm:$0xf]
        %v4285 = vld [vmem:[%s6 + $0x48] sm:$0xf]
        %v4286 = vld [vmem:[%s6 + $0x4c] sm:$0xf]
        %v4287 = vld [vmem:[%s6 + $0x50] sm:$0xf]
        %v4288 = vld [vmem:[%s6 + $0x54] sm:$0xf]
        %v4289 = vld [vmem:[%s6 + $0x58] sm:$0xf]
        %v4290 = vld [vmem:[%s6 + $0x5c] sm:$0xf]
        %v4291 = vld [vmem:[%s6 + $0x60] sm:$0xf]
        %v4292 = vld [vmem:[%s6 + $0x64] sm:$0xf]
        %v4293 = vld [vmem:[%s6 + $0x68] sm:$0xf]
        %v4294 = vld [vmem:[%s6 + $0x6c] sm:$0xf]
        %v4295 = vld [vmem:[%s6 + $0x70] sm:$0xf]
        %v4296 = vld [vmem:[%s6 + $0x74] sm:$0xf]
        %v4297 = vld [vmem:[%s6 + $0x78] sm:$0xf]
        %v4298 = vld [vmem:[%s6 + $0x7c] sm:$0xf]
        %v4299 = vld [vmem:[%s6 + $0x80] sm:$0xf]
        %v4300 = vld [vmem:[%s6 + $0x84] sm:$0xf]
        %v4301 = vld [vmem:[%s6 + $0x88] sm:$0xf]
        %v4302 = vld [vmem:[%s6 + $0x8c] sm:$0xf]
        %v4303 = vld [vmem:[%s6 + $0x90] sm:$0xf]
        %v4304 = vld [vmem:[%s6 + $0x94] sm:$0xf]
        %v4305 = vld [vmem:[%s6 + $0x98] sm:$0xf]
        %v4306 = vld [vmem:[%s6 + $0x9c] sm:$0xf]
        %v4307 = vld [vmem:[%s6 + $0xa0] sm:$0xf]
        %v4308 = vld [vmem:[%s6 + $0xa4] sm:$0xf]
        %v4309 = vld [vmem:[%s6 + $0xa8] sm:$0xf]
        %v4310 = vld [vmem:[%s6 + $0xac] sm:$0xf]
        %v4311 = vld [vmem:[%s6 + $0xb0] sm:$0xf]
        %v4312 = vld [vmem:[%s6 + $0xb4] sm:$0xf]
        %v4313 = vld [vmem:[%s6 + $0xb8] sm:$0xf]
        %v4314 = vld [vmem:[%s6 + $0xbc] sm:$0xf]
        %v4315 = vld [vmem:[%s6 + $0xc0] sm:$0xf]
        %v4316 = vld [vmem:[%s6 + $0xc4] sm:$0xf]
        %v4317 = vld [vmem:[%s6 + $0xc8] sm:$0xf]
        %v4318 = vld [vmem:[%s6 + $0xcc] sm:$0xf]
        %v4319 = vld [vmem:[%s6 + $0xd0] sm:$0xf]
        %v4320 = vld [vmem:[%s6 + $0xd4] sm:$0xf]
        %v4321 = vld [vmem:[%s6 + $0xd8] sm:$0xf]
        %v4322 = vld [vmem:[%s6 + $0xdc] sm:$0xf]
        %v4323 = vld [vmem:[%s6 + $0xe0] sm:$0xf]
        %v4324 = vld [vmem:[%s6 + $0xe4] sm:$0xf]
        %v4325 = vld [vmem:[%s6 + $0xe8] sm:$0xf]
        %v4326 = vld [vmem:[%s6 + $0xec] sm:$0xf]
        %v4327 = vld [vmem:[%s6 + $0xf0] sm:$0xf]
        %v4328 = vld [vmem:[%s6 + $0xf4] sm:$0xf]
        %v4329 = vld [vmem:[%s6 + $0xf8] sm:$0xf]
        %v4330 = vld [vmem:[%s6 + $0xfc] sm:$0xf]
        %v4331 = vld [vmem:[%s6 + $0x100] sm:$0xf]
        %v4332 = vld [vmem:[%s6 + $0x104] sm:$0xf]
        %v4333 = vld [vmem:[%s6 + $0x108] sm:$0xf]
        %v4334 = vld [vmem:[%s6 + $0x10c] sm:$0xf]
        %v4335 = vld [vmem:[%s6 + $0x110] sm:$0xf]
        %v4336 = vld [vmem:[%s6 + $0x114] sm:$0xf]
        %v4337 = vld [vmem:[%s6 + $0x118] sm:$0xf]
        %v4338 = vld [vmem:[%s6 + $0x11c] sm:$0xf]
        %v4339 = vld [vmem:[%s6 + $0x120] sm:$0xf]
        %v4340 = vld [vmem:[%s6 + $0x124] sm:$0xf]
        %v4341 = vld [vmem:[%s6 + $0x128] sm:$0xf]
        %v4342 = vld [vmem:[%s6 + $0x12c] sm:$0xf]
        %v4343 = vld [vmem:[%s6 + $0x130] sm:$0xf]
        %v4344 = vld [vmem:[%s6 + $0x134] sm:$0xf]
        %v4345 = vld [vmem:[%s6 + $0x138] sm:$0xf]
        %v4346 = vld [vmem:[%s6 + $0x13c] sm:$0xf]
        %v4347 = vld [vmem:[%s6 + $0x140] sm:$0xf]
        %v4348 = vld [vmem:[%s6 + $0x144] sm:$0xf]
        %v4349 = vld [vmem:[%s6 + $0x148] sm:$0xf]
        %v4350 = vld [vmem:[%s6 + $0x14c] sm:$0xf]
        %v4351 = vld [vmem:[%s6 + $0x150] sm:$0xf]
        %v4352 = vld [vmem:[%s6 + $0x154] sm:$0xf]
        %v4353 = vld [vmem:[%s6 + $0x158] sm:$0xf]
        %v4354 = vld [vmem:[%s6 + $0x15c] sm:$0xf]
        %v4355 = vld [vmem:[%s6 + $0x160] sm:$0xf]
        %v4356 = vld [vmem:[%s6 + $0x164] sm:$0xf]
        %v4357 = vld [vmem:[%s6 + $0x168] sm:$0xf]
        %v4358 = vld [vmem:[%s6 + $0x16c] sm:$0xf]
        %v4359 = vld [vmem:[%s6 + $0x170] sm:$0xf]
        %v4360 = vld [vmem:[%s6 + $0x174] sm:$0xf]
        %v4361 = vld [vmem:[%s6 + $0x178] sm:$0xf]
        %v4362 = vld [vmem:[%s6 + $0x17c] sm:$0xf]
        %v4363 = vld [vmem:[%s6 + $0x180] sm:$0xf]
        %v4364 = vld [vmem:[%s6 + $0x184] sm:$0xf]
        %v4365 = vld [vmem:[%s6 + $0x188] sm:$0xf]
        %v4366 = vld [vmem:[%s6 + $0x18c] sm:$0xf]
        %v4367 = vld [vmem:[%s6 + $0x190] sm:$0xf]
        %v4368 = vld [vmem:[%s6 + $0x194] sm:$0xf]
        %v4369 = vld [vmem:[%s6 + $0x198] sm:$0xf]
        %v4370 = vld [vmem:[%s6 + $0x19c] sm:$0xf]
        %v4371 = vld [vmem:[%s6 + $0x1a0] sm:$0xf]
        %v4372 = vld [vmem:[%s6 + $0x1a4] sm:$0xf]
        %v4373 = vld [vmem:[%s6 + $0x1a8] sm:$0xf]
        %v4374 = vld [vmem:[%s6 + $0x1ac] sm:$0xf]
        %v4375 = vld [vmem:[%s6 + $0x1b0] sm:$0xf]
        %v4376 = vld [vmem:[%s6 + $0x1b4] sm:$0xf]
        %v4377 = vld [vmem:[%s6 + $0x1b8] sm:$0xf]
        %v4378 = vld [vmem:[%s6 + $0x1bc] sm:$0xf]
        %v4379 = vld [vmem:[%s6 + $0x1c0] sm:$0xf]
        %v4380 = vld [vmem:[%s6 + $0x1c4] sm:$0xf]
        %v4381 = vld [vmem:[%s6 + $0x1c8] sm:$0xf]
        %v4382 = vld [vmem:[%s6 + $0x1cc] sm:$0xf]
        %v4383 = vld [vmem:[%s6 + $0x1d0] sm:$0xf]
        %v4384 = vld [vmem:[%s6 + $0x1d4] sm:$0xf]
        %v4385 = vld [vmem:[%s6 + $0x1d8] sm:$0xf]
        %v4386 = vld [vmem:[%s6 + $0x1dc] sm:$0xf]
        %v4387 = vld [vmem:[%s6 + $0x1e0] sm:$0xf]
        %v4388 = vld [vmem:[%s6 + $0x1e4] sm:$0xf]
        %v4389 = vld [vmem:[%s6 + $0x1e8] sm:$0xf]
        %v4390 = vld [vmem:[%s6 + $0x1ec] sm:$0xf]
        %v4391 = vld [vmem:[%s6 + $0x1f0] sm:$0xf]
        %v4392 = vld [vmem:[%s6 + $0x1f4] sm:$0xf]
        %v4393 = vld [vmem:[%s6 + $0x1f8] sm:$0xf]
        %v4394 = vld [vmem:[%s6 + $0x1fc] sm:$0xf]
        %v4395 = vld [vmem:[%s6 + $0x200] sm:$0xf]
        %v4396 = vld [vmem:[%s6 + $0x204] sm:$0xf]
        %v4397 = vld [vmem:[%s6 + $0x208] sm:$0xf]
        %v4398 = vld [vmem:[%s6 + $0x20c] sm:$0xf]
        %v4399 = vld [vmem:[%s6 + $0x210] sm:$0xf]
        %v4400 = vld [vmem:[%s6 + $0x214] sm:$0xf]
        %v4401 = vld [vmem:[%s6 + $0x218] sm:$0xf]
        %v4402 = vld [vmem:[%s6 + $0x21c] sm:$0xf]
        %v4403 = vld [vmem:[%s6 + $0x220] sm:$0xf]
        %v4404 = vld [vmem:[%s6 + $0x224] sm:$0xf]
        %v4405 = vld [vmem:[%s6 + $0x228] sm:$0xf]
        %v4406 = vld [vmem:[%s6 + $0x22c] sm:$0xf]
        %v4407 = vld [vmem:[%s6 + $0x230] sm:$0xf]
        %v4408 = vld [vmem:[%s6 + $0x234] sm:$0xf]
        %v4409 = vld [vmem:[%s6 + $0x238] sm:$0xf]
        %v4410 = vld [vmem:[%s6 + $0x23c] sm:$0xf]
        %v4411 = vld [vmem:[%s6 + $0x240] sm:$0xf]
        %v4412 = vld [vmem:[%s6 + $0x244] sm:$0xf]
        %v4413 = vld [vmem:[%s6 + $0x248] sm:$0xf]
        %v4414 = vld [vmem:[%s6 + $0x24c] sm:$0xf]
        %v4415 = vld [vmem:[%s6 + $0x250] sm:$0xf]
        %v4416 = vld [vmem:[%s6 + $0x254] sm:$0xf]
        %v4417 = vld [vmem:[%s6 + $0x258] sm:$0xf]
        %v4418 = vld [vmem:[%s6 + $0x25c] sm:$0xf]
        %v4419 = vld [vmem:[%s6 + $0x260] sm:$0xf]
        %v4420 = vld [vmem:[%s6 + $0x264] sm:$0xf]
        %v4421 = vld [vmem:[%s6 + $0x268] sm:$0xf]
        %v4422 = vld [vmem:[%s6 + $0x26c] sm:$0xf]
        %v4423 = vld [vmem:[%s6 + $0x270] sm:$0xf]
        %v4424 = vld [vmem:[%s6 + $0x274] sm:$0xf]
        %v4425 = vld [vmem:[%s6 + $0x278] sm:$0xf]
        %v4426 = vld [vmem:[%s6 + $0x27c] sm:$0xf]
        %v4427 = vld [vmem:[%s6 + $0x280] sm:$0xf]
        %v4428 = vld [vmem:[%s6 + $0x284] sm:$0xf]
        %v4429 = vld [vmem:[%s6 + $0x288] sm:$0xf]
        %v4430 = vld [vmem:[%s6 + $0x28c] sm:$0xf]
        %v4431 = vld [vmem:[%s6 + $0x290] sm:$0xf]
        %v4432 = vld [vmem:[%s6 + $0x294] sm:$0xf]
        %v4433 = vld [vmem:[%s6 + $0x298] sm:$0xf]
        %v4434 = vld [vmem:[%s6 + $0x29c] sm:$0xf]
        %v4435 = vld [vmem:[%s6 + $0x2a0] sm:$0xf]
        %v4436 = vld [vmem:[%s6 + $0x2a4] sm:$0xf]
        %v4437 = vld [vmem:[%s6 + $0x2a8] sm:$0xf]
        %v4438 = vld [vmem:[%s6 + $0x2ac] sm:$0xf]
        %v4439 = vld [vmem:[%s6 + $0x2b0] sm:$0xf]
        %v4440 = vld [vmem:[%s6 + $0x2b4] sm:$0xf]
        %v4441 = vld [vmem:[%s6 + $0x2b8] sm:$0xf]
        %v4442 = vld [vmem:[%s6 + $0x2bc] sm:$0xf]
        %v4443 = vld [vmem:[%s6 + $0x2c0] sm:$0xf]
        %v4444 = vld [vmem:[%s6 + $0x2c4] sm:$0xf]
        %v4445 = vld [vmem:[%s6 + $0x2c8] sm:$0xf]
        %v4446 = vld [vmem:[%s6 + $0x2cc] sm:$0xf]
        %v4447 = vld [vmem:[%s6 + $0x2d0] sm:$0xf]
        %v4448 = vld [vmem:[%s6 + $0x2d4] sm:$0xf]
        %v4449 = vld [vmem:[%s6 + $0x2d8] sm:$0xf]
        %v4450 = vld [vmem:[%s6 + $0x2dc] sm:$0xf]
        %v4451 = vld [vmem:[%s6 + $0x2e0] sm:$0xf]
        %v4452 = vld [vmem:[%s6 + $0x2e4] sm:$0xf]
        %v4453 = vld [vmem:[%s6 + $0x2e8] sm:$0xf]
        %v4454 = vld [vmem:[%s6 + $0x2ec] sm:$0xf]
        %v4455 = vld [vmem:[%s6 + $0x2f0] sm:$0xf]
        %v4456 = vld [vmem:[%s6 + $0x2f4] sm:$0xf]
        %v4457 = vld [vmem:[%s6 + $0x2f8] sm:$0xf]
        %v4458 = vld [vmem:[%s6 + $0x2fc] sm:$0xf]
        %v4459 = vld [vmem:[%s6 + $0x300] sm:$0xf]
        %v4460 = vld [vmem:[%s6 + $0x304] sm:$0xf]
        %v4461 = vld [vmem:[%s6 + $0x308] sm:$0xf]
        %v4462 = vld [vmem:[%s6 + $0x30c] sm:$0xf]
        %v4463 = vld [vmem:[%s6 + $0x310] sm:$0xf]
        %v4464 = vld [vmem:[%s6 + $0x314] sm:$0xf]
        %v4465 = vld [vmem:[%s6 + $0x318] sm:$0xf]
        %v4466 = vld [vmem:[%s6 + $0x31c] sm:$0xf]
        %v4467 = vld [vmem:[%s6 + $0x320] sm:$0xf]
        %v4468 = vld [vmem:[%s6 + $0x324] sm:$0xf]
        %v4469 = vld [vmem:[%s6 + $0x328] sm:$0xf]
        %v4470 = vld [vmem:[%s6 + $0x32c] sm:$0xf]
        %v4471 = vld [vmem:[%s6 + $0x330] sm:$0xf]
        %v4472 = vld [vmem:[%s6 + $0x334] sm:$0xf]
        %v4473 = vld [vmem:[%s6 + $0x338] sm:$0xf]
        %v4474 = vld [vmem:[%s6 + $0x33c] sm:$0xf]
        %v4475 = vld [vmem:[%s6 + $0x340] sm:$0xf]
        %v4476 = vld [vmem:[%s6 + $0x344] sm:$0xf]
        %v4477 = vld [vmem:[%s6 + $0x348] sm:$0xf]
        %v4478 = vld [vmem:[%s6 + $0x34c] sm:$0xf]
        %v4479 = vld [vmem:[%s6 + $0x350] sm:$0xf]
        %v4480 = vld [vmem:[%s6 + $0x354] sm:$0xf]
        %v4481 = vld [vmem:[%s6 + $0x358] sm:$0xf]
        %v4482 = vld [vmem:[%s6 + $0x35c] sm:$0xf]
        %v4483 = vld [vmem:[%s6 + $0x360] sm:$0xf]
        %v4484 = vld [vmem:[%s6 + $0x364] sm:$0xf]
        %v4485 = vld [vmem:[%s6 + $0x368] sm:$0xf]
        %v4486 = vld [vmem:[%s6 + $0x36c] sm:$0xf]
        %v4487 = vld [vmem:[%s6 + $0x370] sm:$0xf]
        %v4488 = vld [vmem:[%s6 + $0x374] sm:$0xf]
        %v4489 = vld [vmem:[%s6 + $0x378] sm:$0xf]
        %v4490 = vld [vmem:[%s6 + $0x37c] sm:$0xf]
        %v4491 = vld [vmem:[%s6 + $0x380] sm:$0xf]
        %v4492 = vld [vmem:[%s6 + $0x384] sm:$0xf]
        %v4493 = vld [vmem:[%s6 + $0x388] sm:$0xf]
        %v4494 = vld [vmem:[%s6 + $0x38c] sm:$0xf]
        %v4495 = vld [vmem:[%s6 + $0x390] sm:$0xf]
        %v4496 = vld [vmem:[%s6 + $0x394] sm:$0xf]
        %v4497 = vld [vmem:[%s6 + $0x398] sm:$0xf]
        %v4498 = vld [vmem:[%s6 + $0x39c] sm:$0xf]
        %v4499 = vld [vmem:[%s6 + $0x3a0] sm:$0xf]
        %v4500 = vld [vmem:[%s6 + $0x3a4] sm:$0xf]
        %v4501 = vld [vmem:[%s6 + $0x3a8] sm:$0xf]
        %v4502 = vld [vmem:[%s6 + $0x3ac] sm:$0xf]
        %v4503 = vld [vmem:[%s6 + $0x3b0] sm:$0xf]
        %v4504 = vld [vmem:[%s6 + $0x3b4] sm:$0xf]
        %v4505 = vld [vmem:[%s6 + $0x3b8] sm:$0xf]
        %v4506 = vld [vmem:[%s6 + $0x3bc] sm:$0xf]
        %v4507 = vld [vmem:[%s6 + $0x3c0] sm:$0xf]
        %v4508 = vld [vmem:[%s6 + $0x3c4] sm:$0xf]
        %v4509 = vld [vmem:[%s6 + $0x3c8] sm:$0xf]
        %v4510 = vld [vmem:[%s6 + $0x3cc] sm:$0xf]
        %v4511 = vld [vmem:[%s6 + $0x3d0] sm:$0xf]
        %v4512 = vld [vmem:[%s6 + $0x3d4] sm:$0xf]
        %v4513 = vld [vmem:[%s6 + $0x3d8] sm:$0xf]
        %v4514 = vld [vmem:[%s6 + $0x3dc] sm:$0xf]
        %v4515 = vld [vmem:[%s6 + $0x3e0] sm:$0xf]
        %v4516 = vld [vmem:[%s6 + $0x3e4] sm:$0xf]
        %v4517 = vld [vmem:[%s6 + $0x3e8] sm:$0xf]
        %v4518 = vld [vmem:[%s6 + $0x3ec] sm:$0xf]
        %v4519 = vld [vmem:[%s6 + $0x3f0] sm:$0xf]
        %v4520 = vld [vmem:[%s6 + $0x3f4] sm:$0xf]
        %v4521 = vld [vmem:[%s6 + $0x3f8] sm:$0xf]
        %v4522 = vld [vmem:[%s6 + $0x3fc] sm:$0xf]
        %v4523 = vld [vmem:[%s6 + $0x400] sm:$0xf]
        %v4524 = vld [vmem:[%s6 + $0x404] sm:$0xf]
        %v4525 = vld [vmem:[%s6 + $0x408] sm:$0xf]
        %v4526 = vld [vmem:[%s6 + $0x40c] sm:$0xf]
        %v4527 = vld [vmem:[%s6 + $0x410] sm:$0xf]
        %v4528 = vld [vmem:[%s6 + $0x414] sm:$0xf]
        %v4529 = vld [vmem:[%s6 + $0x418] sm:$0xf]
        %v4530 = vld [vmem:[%s6 + $0x41c] sm:$0xf]
        %v4531 = vld [vmem:[%s6 + $0x420] sm:$0xf]
        %v4532 = vld [vmem:[%s6 + $0x424] sm:$0xf]
        %v4533 = vld [vmem:[%s6 + $0x428] sm:$0xf]
        %v4534 = vld [vmem:[%s6 + $0x42c] sm:$0xf]
        %v4535 = vld [vmem:[%s6 + $0x430] sm:$0xf]
        %v4536 = vld [vmem:[%s6 + $0x434] sm:$0xf]
        %v4537 = vld [vmem:[%s6 + $0x438] sm:$0xf]
        %v4538 = vld [vmem:[%s6 + $0x43c] sm:$0xf]
        %v4539 = vld [vmem:[%s6 + $0x440] sm:$0xf]
        %v4540 = vld [vmem:[%s6 + $0x444] sm:$0xf]
        %v4541 = vld [vmem:[%s6 + $0x448] sm:$0xf]
        %v4542 = vld [vmem:[%s6 + $0x44c] sm:$0xf]
        %v4543 = vld [vmem:[%s6 + $0x450] sm:$0xf]
        %v4544 = vld [vmem:[%s6 + $0x454] sm:$0xf]
        %v4545 = vld [vmem:[%s6 + $0x458] sm:$0xf]
        %v4546 = vld [vmem:[%s6 + $0x45c] sm:$0xf]
        %v4547 = vld [vmem:[%s6 + $0x460] sm:$0xf]
        %v4548 = vld [vmem:[%s6 + $0x464] sm:$0xf]
        %v4549 = vld [vmem:[%s6 + $0x468] sm:$0xf]
        %v4550 = vld [vmem:[%s6 + $0x46c] sm:$0xf]
        %v4551 = vld [vmem:[%s6 + $0x470] sm:$0xf]
        %v4552 = vld [vmem:[%s6 + $0x474] sm:$0xf]
        %v4553 = vld [vmem:[%s6 + $0x478] sm:$0xf]
        %v4554 = vld [vmem:[%s6 + $0x47c] sm:$0xf]
        %v4555 = vld [vmem:[%s6 + $0x480] sm:$0xf]
        %v4556 = vld [vmem:[%s6 + $0x484] sm:$0xf]
        %v4557 = vld [vmem:[%s6 + $0x488] sm:$0xf]
        %v4558 = vld [vmem:[%s6 + $0x48c] sm:$0xf]
        %v4559 = vld [vmem:[%s6 + $0x490] sm:$0xf]
        %v4560 = vld [vmem:[%s6 + $0x494] sm:$0xf]
        %v4561 = vld [vmem:[%s6 + $0x498] sm:$0xf]
        %v4562 = vld [vmem:[%s6 + $0x49c] sm:$0xf]
        %v4563 = vld [vmem:[%s6 + $0x4a0] sm:$0xf]
        %v4564 = vld [vmem:[%s6 + $0x4a4] sm:$0xf]
        %v4565 = vld [vmem:[%s6 + $0x4a8] sm:$0xf]
        %v4566 = vld [vmem:[%s6 + $0x4ac] sm:$0xf]
        %v4567 = vld [vmem:[%s6 + $0x4b0] sm:$0xf]
        %v4568 = vld [vmem:[%s6 + $0x4b4] sm:$0xf]
        %v4569 = vld [vmem:[%s6 + $0x4b8] sm:$0xf]
        %v4570 = vld [vmem:[%s6 + $0x4bc] sm:$0xf]
        %v4571 = vld [vmem:[%s6 + $0x4c0] sm:$0xf]
        %v4572 = vld [vmem:[%s6 + $0x4c4] sm:$0xf]
        %v4573 = vld [vmem:[%s6 + $0x4c8] sm:$0xf]
        %v4574 = vld [vmem:[%s6 + $0x4cc] sm:$0xf]
        %v4575 = vld [vmem:[%s6 + $0x4d0] sm:$0xf]
        %v4576 = vld [vmem:[%s6 + $0x4d4] sm:$0xf]
        %v4577 = vld [vmem:[%s6 + $0x4d8] sm:$0xf]
        %v4578 = vld [vmem:[%s6 + $0x4dc] sm:$0xf]
        %v4579 = vld [vmem:[%s6 + $0x4e0] sm:$0xf]
        %v4580 = vld [vmem:[%s6 + $0x4e4] sm:$0xf]
        %v4581 = vld [vmem:[%s6 + $0x4e8] sm:$0xf]
        %v4582 = vld [vmem:[%s6 + $0x4ec] sm:$0xf]
        %v4583 = vld [vmem:[%s6 + $0x4f0] sm:$0xf]
        %v4584 = vld [vmem:[%s6 + $0x4f4] sm:$0xf]
        %v4585 = vld [vmem:[%s6 + $0x4f8] sm:$0xf]
        %v4586 = vld [vmem:[%s6 + $0x4fc] sm:$0xf]
        %v4587 = vld [vmem:[%s6 + $0x500] sm:$0xf]
        %v4588 = vld [vmem:[%s6 + $0x504] sm:$0xf]
        %v4589 = vld [vmem:[%s6 + $0x508] sm:$0xf]
        %v4590 = vld [vmem:[%s6 + $0x50c] sm:$0xf]
        %v4591 = vld [vmem:[%s6 + $0x510] sm:$0xf]
        %v4592 = vld [vmem:[%s6 + $0x514] sm:$0xf]
        %v4593 = vld [vmem:[%s6 + $0x518] sm:$0xf]
        %v4594 = vld [vmem:[%s6 + $0x51c] sm:$0xf]
        %v4595 = vld [vmem:[%s6 + $0x520] sm:$0xf]
        %v4596 = vld [vmem:[%s6 + $0x524] sm:$0xf]
        %v4597 = vld [vmem:[%s6 + $0x528] sm:$0xf]
        %v4598 = vld [vmem:[%s6 + $0x52c] sm:$0xf]
        %v4599 = vld [vmem:[%s6 + $0x530] sm:$0xf]
        %v4600 = vld [vmem:[%s6 + $0x534] sm:$0xf]
        %v4601 = vld [vmem:[%s6 + $0x538] sm:$0xf]
        %v4602 = vld [vmem:[%s6 + $0x53c] sm:$0xf]
        %v4603 = vld [vmem:[%s6 + $0x540] sm:$0xf]
        %v4604 = vld [vmem:[%s6 + $0x544] sm:$0xf]
        %v4605 = vld [vmem:[%s6 + $0x548] sm:$0xf]
        %v4606 = vld [vmem:[%s6 + $0x54c] sm:$0xf]
        %v4607 = vld [vmem:[%s6 + $0x550] sm:$0xf]
        %v4608 = vld [vmem:[%s6 + $0x554] sm:$0xf]
        %v4609 = vld [vmem:[%s6 + $0x558] sm:$0xf]
        %v4610 = vld [vmem:[%s6 + $0x55c] sm:$0xf]
        %v4611 = vld [vmem:[%s6 + $0x560] sm:$0xf]
        %v4612 = vld [vmem:[%s6 + $0x564] sm:$0xf]
        %v4613 = vld [vmem:[%s6 + $0x568] sm:$0xf]
        %v4614 = vld [vmem:[%s6 + $0x56c] sm:$0xf]
        %v4615 = vld [vmem:[%s6 + $0x570] sm:$0xf]
        %v4616 = vld [vmem:[%s6 + $0x574] sm:$0xf]
        %v4617 = vld [vmem:[%s6 + $0x578] sm:$0xf]
        %v4618 = vld [vmem:[%s6 + $0x57c] sm:$0xf]
        %v4619 = vld [vmem:[%s6 + $0x580] sm:$0xf]
        %v4620 = vld [vmem:[%s6 + $0x584] sm:$0xf]
        %v4621 = vld [vmem:[%s6 + $0x588] sm:$0xf]
        %v4622 = vld [vmem:[%s6 + $0x58c] sm:$0xf]
        %v4623 = vld [vmem:[%s6 + $0x590] sm:$0xf]
        %v4624 = vld [vmem:[%s6 + $0x594] sm:$0xf]
        %v4625 = vld [vmem:[%s6 + $0x598] sm:$0xf]
        %v4626 = vld [vmem:[%s6 + $0x59c] sm:$0xf]
        %v4627 = vld [vmem:[%s6 + $0x5a0] sm:$0xf]
        %v4628 = vld [vmem:[%s6 + $0x5a4] sm:$0xf]
        %v4629 = vld [vmem:[%s6 + $0x5a8] sm:$0xf]
        %v4630 = vld [vmem:[%s6 + $0x5ac] sm:$0xf]
        %v4631 = vld [vmem:[%s6 + $0x5b0] sm:$0xf]
        %v4632 = vld [vmem:[%s6 + $0x5b4] sm:$0xf]
        %v4633 = vld [vmem:[%s6 + $0x5b8] sm:$0xf]
        %v4634 = vld [vmem:[%s6 + $0x5bc] sm:$0xf]
        %v4635 = vld [vmem:[%s6 + $0x5c0] sm:$0xf]
        %v4636 = vld [vmem:[%s6 + $0x5c4] sm:$0xf]
        %v4637 = vld [vmem:[%s6 + $0x5c8] sm:$0xf]
        %v4638 = vld [vmem:[%s6 + $0x5cc] sm:$0xf]
        %v4639 = vld [vmem:[%s6 + $0x5d0] sm:$0xf]
        %v4640 = vld [vmem:[%s6 + $0x5d4] sm:$0xf]
        %v4641 = vld [vmem:[%s6 + $0x5d8] sm:$0xf]
        %v4642 = vld [vmem:[%s6 + $0x5dc] sm:$0xf]
        %v4643 = vld [vmem:[%s6 + $0x5e0] sm:$0xf]
        %v4644 = vld [vmem:[%s6 + $0x5e4] sm:$0xf]
        %v4645 = vld [vmem:[%s6 + $0x5e8] sm:$0xf]
        %v4646 = vld [vmem:[%s6 + $0x5ec] sm:$0xf]
        %v4647 = vld [vmem:[%s6 + $0x5f0] sm:$0xf]
        %v4648 = vld [vmem:[%s6 + $0x5f4] sm:$0xf]
        %v4649 = vld [vmem:[%s6 + $0x5f8] sm:$0xf]
        %v4650 = vld [vmem:[%s6 + $0x5fc] sm:$0xf]
        %v4651 = vld [vmem:[%s6 + $0x600] sm:$0xf]
        %v4652 = vld [vmem:[%s6 + $0x604] sm:$0xf]
        %v4653 = vld [vmem:[%s6 + $0x608] sm:$0xf]
        %v4654 = vld [vmem:[%s6 + $0x60c] sm:$0xf]
        %v4655 = vld [vmem:[%s6 + $0x610] sm:$0xf]
        %v4656 = vld [vmem:[%s6 + $0x614] sm:$0xf]
        %v4657 = vld [vmem:[%s6 + $0x618] sm:$0xf]
        %v4658 = vld [vmem:[%s6 + $0x61c] sm:$0xf]
        %v4659 = vld [vmem:[%s7] sm:$0x1]
        %v5052 = vunpack.c.l.b16 %v4267
        %v5053 = vunpack.c.l.b16 %v4268
        %v5054 = vunpack.c.l.b16 %v4269
        %v5055 = vunpack.c.l.b16 %v4270
        %v5056 = vunpack.c.l.b16 %v4271
        %v5057 = vunpack.c.l.b16 %v4272
        %v5058 = vunpack.c.l.b16 %v4273
        %v5059 = vunpack.c.l.b16 %v4274
        %v5060 = vunpack.c.l.b16 %v4275
        %v5061 = vunpack.c.l.b16 %v4276
        %v5062 = vunpack.c.l.b16 %v4277
        %v5063 = vunpack.c.l.b16 %v4278
        %v5064 = vunpack.c.l.b16 %v4279
        %v5065 = vunpack.c.l.b16 %v4280
        %v5066 = vunpack.c.l.b16 %v4281
        %v5067 = vunpack.c.l.b16 %v4282
        %v5068 = vunpack.c.l.b16 %v4283
        %v5069 = vunpack.c.l.b16 %v4284
        %v5070 = vunpack.c.l.b16 %v4285
        %v5071 = vunpack.c.l.b16 %v4286
        %v5072 = vunpack.c.l.b16 %v4287
        %v5073 = vunpack.c.l.b16 %v4288
        %v5074 = vunpack.c.l.b16 %v4289
        %v5075 = vunpack.c.l.b16 %v4290
        %v5076 = vunpack.c.l.b16 %v4291
        %v5077 = vunpack.c.l.b16 %v4292
        %v5078 = vunpack.c.l.b16 %v4293
        %v5079 = vunpack.c.l.b16 %v4294
        %v5080 = vunpack.c.l.b16 %v4295
        %v5081 = vunpack.c.l.b16 %v4296
        %v5082 = vunpack.c.l.b16 %v4297
        %v5083 = vunpack.c.l.b16 %v4298
        %v5084 = vunpack.c.l.b16 %v4299
        %v5085 = vunpack.c.l.b16 %v4300
        %v5086 = vunpack.c.l.b16 %v4301
        %v5087 = vunpack.c.l.b16 %v4302
        %v5088 = vunpack.c.l.b16 %v4303
        %v5089 = vunpack.c.l.b16 %v4304
        %v5090 = vunpack.c.l.b16 %v4305
        %v5091 = vunpack.c.l.b16 %v4306
        %v5092 = vunpack.c.l.b16 %v4307
        %v5093 = vunpack.c.l.b16 %v4308
        %v5094 = vunpack.c.l.b16 %v4309
        %v5095 = vunpack.c.l.b16 %v4310
        %v5096 = vunpack.c.l.b16 %v4311
        %v5097 = vunpack.c.l.b16 %v4312
        %v5098 = vunpack.c.l.b16 %v4313
        %v5099 = vunpack.c.l.b16 %v4314
        %v5100 = vunpack.c.l.b16 %v4315
        %v5101 = vunpack.c.l.b16 %v4316
        %v5102 = vunpack.c.l.b16 %v4317
        %v5103 = vunpack.c.l.b16 %v4318
        %v5104 = vunpack.c.l.b16 %v4319
        %v5105 = vunpack.c.l.b16 %v4320
        %v5106 = vunpack.c.l.b16 %v4321
        %v5107 = vunpack.c.l.b16 %v4322
        %v5108 = vunpack.c.l.b16 %v4323
        %v5109 = vunpack.c.l.b16 %v4324
        %v5110 = vunpack.c.l.b16 %v4325
        %v5111 = vunpack.c.l.b16 %v4326
        %v5112 = vunpack.c.l.b16 %v4327
        %v5113 = vunpack.c.l.b16 %v4328
        %v5114 = vunpack.c.l.b16 %v4329
        %v5115 = vunpack.c.l.b16 %v4330
        %v5116 = vunpack.c.l.b16 %v4331
        %v5117 = vunpack.c.l.b16 %v4332
        %v5118 = vunpack.c.l.b16 %v4333
        %v5119 = vunpack.c.l.b16 %v4334
        %v5120 = vunpack.c.l.b16 %v4335
        %v5121 = vunpack.c.l.b16 %v4336
        %v5122 = vunpack.c.l.b16 %v4337
        %v5123 = vunpack.c.l.b16 %v4338
        %v5124 = vunpack.c.l.b16 %v4339
        %v5125 = vunpack.c.l.b16 %v4340
        %v5126 = vunpack.c.l.b16 %v4341
        %v5127 = vunpack.c.l.b16 %v4342
        %v5128 = vunpack.c.l.b16 %v4343
        %v5129 = vunpack.c.l.b16 %v4344
        %v5130 = vunpack.c.l.b16 %v4345
        %v5131 = vunpack.c.l.b16 %v4346
        %v5132 = vunpack.c.l.b16 %v4347
        %v5133 = vunpack.c.l.b16 %v4348
        %v5134 = vunpack.c.l.b16 %v4349
        %v5135 = vunpack.c.l.b16 %v4350
        %v5136 = vunpack.c.l.b16 %v4351
        %v5137 = vunpack.c.l.b16 %v4352
        %v5138 = vunpack.c.l.b16 %v4353
        %v5139 = vunpack.c.l.b16 %v4354
        %v5140 = vunpack.c.l.b16 %v4355
        %v5141 = vunpack.c.l.b16 %v4356
        %v5142 = vunpack.c.l.b16 %v4357
        %v5143 = vunpack.c.l.b16 %v4358
        %v5144 = vunpack.c.l.b16 %v4359
        %v5145 = vunpack.c.l.b16 %v4360
        %v5146 = vunpack.c.l.b16 %v4361
        %v5147 = vunpack.c.l.b16 %v4362
        %v5148 = vunpack.c.l.b16 %v4363
        %v5149 = vunpack.c.l.b16 %v4364
        %v5150 = vunpack.c.l.b16 %v4365
        %v5151 = vunpack.c.l.b16 %v4366
        %v5152 = vunpack.c.l.b16 %v4367
        %v5153 = vunpack.c.l.b16 %v4368
        %v5154 = vunpack.c.l.b16 %v4369
        %v5155 = vunpack.c.l.b16 %v4370
        %v5156 = vunpack.c.l.b16 %v4371
        %v5157 = vunpack.c.l.b16 %v4372
        %v5158 = vunpack.c.l.b16 %v4373
        %v5159 = vunpack.c.l.b16 %v4374
        %v5160 = vunpack.c.l.b16 %v4375
        %v5161 = vunpack.c.l.b16 %v4376
        %v5162 = vunpack.c.l.b16 %v4377
        %v5163 = vunpack.c.l.b16 %v4378
        %v5164 = vunpack.c.l.b16 %v4379
        %v5165 = vunpack.c.l.b16 %v4380
        %v5166 = vunpack.c.l.b16 %v4381
        %v5167 = vunpack.c.l.b16 %v4382
        %v5168 = vunpack.c.l.b16 %v4383
        %v5169 = vunpack.c.l.b16 %v4384
        %v5170 = vunpack.c.l.b16 %v4385
        %v5171 = vunpack.c.l.b16 %v4386
        %v5172 = vunpack.c.l.b16 %v4387
        %v5173 = vunpack.c.l.b16 %v4388
        %v5174 = vunpack.c.l.b16 %v4389
        %v5175 = vunpack.c.l.b16 %v4390
        %v5176 = vunpack.c.l.b16 %v4391
        %v5177 = vunpack.c.l.b16 %v4392
        %v5178 = vunpack.c.l.b16 %v4393
        %v5179 = vunpack.c.l.b16 %v4394
        %v5180 = vunpack.c.l.b16 %v4395
        %v5181 = vunpack.c.l.b16 %v4396
        %v5182 = vunpack.c.l.b16 %v4397
        %v5183 = vunpack.c.l.b16 %v4398
        %v5184 = vunpack.c.l.b16 %v4399
        %v5185 = vunpack.c.l.b16 %v4400
        %v5186 = vunpack.c.l.b16 %v4401
        %v5187 = vunpack.c.l.b16 %v4402
        %v5188 = vunpack.c.l.b16 %v4403
        %v5189 = vunpack.c.l.b16 %v4404
        %v5190 = vunpack.c.l.b16 %v4405
        %v5191 = vunpack.c.l.b16 %v4406
        %v5192 = vunpack.c.l.b16 %v4407
        %v5193 = vunpack.c.l.b16 %v4408
        %v5194 = vunpack.c.l.b16 %v4409
        %v5195 = vunpack.c.l.b16 %v4410
        %v5196 = vunpack.c.l.b16 %v4411
        %v5197 = vunpack.c.l.b16 %v4412
        %v5198 = vunpack.c.l.b16 %v4413
        %v5199 = vunpack.c.l.b16 %v4414
        %v5200 = vunpack.c.l.b16 %v4415
        %v5201 = vunpack.c.l.b16 %v4416
        %v5202 = vunpack.c.l.b16 %v4417
        %v5203 = vunpack.c.l.b16 %v4418
        %v5204 = vunpack.c.l.b16 %v4419
        %v5205 = vunpack.c.l.b16 %v4420
        %v5206 = vunpack.c.l.b16 %v4421
        %v5207 = vunpack.c.l.b16 %v4422
        %v5208 = vunpack.c.l.b16 %v4423
        %v5209 = vunpack.c.l.b16 %v4424
        %v5210 = vunpack.c.l.b16 %v4425
        %v5211 = vunpack.c.l.b16 %v4426
        %v5212 = vunpack.c.l.b16 %v4427
        %v5213 = vunpack.c.l.b16 %v4428
        %v5214 = vunpack.c.l.b16 %v4429
        %v5215 = vunpack.c.l.b16 %v4430
        %v5216 = vunpack.c.l.b16 %v4431
        %v5217 = vunpack.c.l.b16 %v4432
        %v5218 = vunpack.c.l.b16 %v4433
        %v5219 = vunpack.c.l.b16 %v4434
        %v5220 = vunpack.c.l.b16 %v4435
        %v5221 = vunpack.c.l.b16 %v4436
        %v5222 = vunpack.c.l.b16 %v4437
        %v5223 = vunpack.c.l.b16 %v4438
        %v5224 = vunpack.c.l.b16 %v4439
        %v5225 = vunpack.c.l.b16 %v4440
        %v5226 = vunpack.c.l.b16 %v4441
        %v5227 = vunpack.c.l.b16 %v4442
        %v5228 = vunpack.c.l.b16 %v4443
        %v5229 = vunpack.c.l.b16 %v4444
        %v5230 = vunpack.c.l.b16 %v4445
        %v5231 = vunpack.c.l.b16 %v4446
        %v5232 = vunpack.c.l.b16 %v4447
        %v5233 = vunpack.c.l.b16 %v4448
        %v5234 = vunpack.c.l.b16 %v4449
        %v5235 = vunpack.c.l.b16 %v4450
        %v5236 = vunpack.c.l.b16 %v4451
        %v5237 = vunpack.c.l.b16 %v4452
        %v5238 = vunpack.c.l.b16 %v4453
        %v5239 = vunpack.c.l.b16 %v4454
        %v5240 = vunpack.c.l.b16 %v4455
        %v5241 = vunpack.c.l.b16 %v4456
        %v5242 = vunpack.c.l.b16 %v4457
        %v5243 = vunpack.c.l.b16 %v4458
        %v5244 = vunpack.c.l.b16 %v4459
        %v5245 = vunpack.c.l.b16 %v4460
        %v5246 = vunpack.c.l.b16 %v4461
        %v5247 = vunpack.c.l.b16 %v4462
        %v5248 = vunpack.c.l.b16 %v4463
        %v5249 = vunpack.c.l.b16 %v4464
        %v5250 = vunpack.c.l.b16 %v4465
        %v5251 = vunpack.c.l.b16 %v4466
        %v5252 = vunpack.c.l.b16 %v4467
        %v5253 = vunpack.c.l.b16 %v4468
        %v5254 = vunpack.c.l.b16 %v4469
        %v5255 = vunpack.c.l.b16 %v4470
        %v5256 = vunpack.c.l.b16 %v4471
        %v5257 = vunpack.c.l.b16 %v4472
        %v5258 = vunpack.c.l.b16 %v4473
        %v5259 = vunpack.c.l.b16 %v4474
        %v5260 = vunpack.c.l.b16 %v4475
        %v5261 = vunpack.c.l.b16 %v4476
        %v5262 = vunpack.c.l.b16 %v4477
        %v5263 = vunpack.c.l.b16 %v4478
        %v5264 = vunpack.c.l.b16 %v4479
        %v5265 = vunpack.c.l.b16 %v4480
        %v5266 = vunpack.c.l.b16 %v4481
        %v5267 = vunpack.c.l.b16 %v4482
        %v5268 = vunpack.c.l.b16 %v4483
        %v5269 = vunpack.c.l.b16 %v4484
        %v5270 = vunpack.c.l.b16 %v4485
        %v5271 = vunpack.c.l.b16 %v4486
        %v5272 = vunpack.c.l.b16 %v4487
        %v5273 = vunpack.c.l.b16 %v4488
        %v5274 = vunpack.c.l.b16 %v4489
        %v5275 = vunpack.c.l.b16 %v4490
        %v5276 = vunpack.c.l.b16 %v4491
        %v5277 = vunpack.c.l.b16 %v4492
        %v5278 = vunpack.c.l.b16 %v4493
        %v5279 = vunpack.c.l.b16 %v4494
        %v5280 = vunpack.c.l.b16 %v4495
        %v5281 = vunpack.c.l.b16 %v4496
        %v5282 = vunpack.c.l.b16 %v4497
        %v5283 = vunpack.c.l.b16 %v4498
        %v5284 = vunpack.c.l.b16 %v4499
        %v5285 = vunpack.c.l.b16 %v4500
        %v5286 = vunpack.c.l.b16 %v4501
        %v5287 = vunpack.c.l.b16 %v4502
        %v5288 = vunpack.c.l.b16 %v4503
        %v5289 = vunpack.c.l.b16 %v4504
        %v5290 = vunpack.c.l.b16 %v4505
        %v5291 = vunpack.c.l.b16 %v4506
        %v5292 = vunpack.c.l.b16 %v4507
        %v5293 = vunpack.c.l.b16 %v4508
        %v5294 = vunpack.c.l.b16 %v4509
        %v5295 = vunpack.c.l.b16 %v4510
        %v5296 = vunpack.c.l.b16 %v4511
        %v5297 = vunpack.c.l.b16 %v4512
        %v5298 = vunpack.c.l.b16 %v4513
        %v5299 = vunpack.c.l.b16 %v4514
        %v5300 = vunpack.c.l.b16 %v4515
        %v5301 = vunpack.c.l.b16 %v4516
        %v5302 = vunpack.c.l.b16 %v4517
        %v5303 = vunpack.c.l.b16 %v4518
        %v5304 = vunpack.c.l.b16 %v4519
        %v5305 = vunpack.c.l.b16 %v4520
        %v5306 = vunpack.c.l.b16 %v4521
        %v5307 = vunpack.c.l.b16 %v4522
        %v5308 = vunpack.c.l.b16 %v4523
        %v5309 = vunpack.c.l.b16 %v4524
        %v5310 = vunpack.c.l.b16 %v4525
        %v5311 = vunpack.c.l.b16 %v4526
        %v5312 = vunpack.c.l.b16 %v4527
        %v5313 = vunpack.c.l.b16 %v4528
        %v5314 = vunpack.c.l.b16 %v4529
        %v5315 = vunpack.c.l.b16 %v4530
        %v5316 = vunpack.c.l.b16 %v4531
        %v5317 = vunpack.c.l.b16 %v4532
        %v5318 = vunpack.c.l.b16 %v4533
        %v5319 = vunpack.c.l.b16 %v4534
        %v5320 = vunpack.c.l.b16 %v4535
        %v5321 = vunpack.c.l.b16 %v4536
        %v5322 = vunpack.c.l.b16 %v4537
        %v5323 = vunpack.c.l.b16 %v4538
        %v5324 = vunpack.c.l.b16 %v4539
        %v5325 = vunpack.c.l.b16 %v4540
        %v5326 = vunpack.c.l.b16 %v4541
        %v5327 = vunpack.c.l.b16 %v4542
        %v5328 = vunpack.c.l.b16 %v4543
        %v5329 = vunpack.c.l.b16 %v4544
        %v5330 = vunpack.c.l.b16 %v4545
        %v5331 = vunpack.c.l.b16 %v4546
        %v5332 = vunpack.c.l.b16 %v4547
        %v5333 = vunpack.c.l.b16 %v4548
        %v5334 = vunpack.c.l.b16 %v4549
        %v5335 = vunpack.c.l.b16 %v4550
        %v5336 = vunpack.c.l.b16 %v4551
        %v5337 = vunpack.c.l.b16 %v4552
        %v5338 = vunpack.c.l.b16 %v4553
        %v5339 = vunpack.c.l.b16 %v4554
        %v5340 = vunpack.c.l.b16 %v4555
        %v5341 = vunpack.c.l.b16 %v4556
        %v5342 = vunpack.c.l.b16 %v4557
        %v5343 = vunpack.c.l.b16 %v4558
        %v5344 = vunpack.c.l.b16 %v4559
        %v5345 = vunpack.c.l.b16 %v4560
        %v5346 = vunpack.c.l.b16 %v4561
        %v5347 = vunpack.c.l.b16 %v4562
        %v5348 = vunpack.c.l.b16 %v4563
        %v5349 = vunpack.c.l.b16 %v4564
        %v5350 = vunpack.c.l.b16 %v4565
        %v5351 = vunpack.c.l.b16 %v4566
        %v5352 = vunpack.c.l.b16 %v4567
        %v5353 = vunpack.c.l.b16 %v4568
        %v5354 = vunpack.c.l.b16 %v4569
        %v5355 = vunpack.c.l.b16 %v4570
        %v5356 = vunpack.c.l.b16 %v4571
        %v5357 = vunpack.c.l.b16 %v4572
        %v5358 = vunpack.c.l.b16 %v4573
        %v5359 = vunpack.c.l.b16 %v4574
        %v5360 = vunpack.c.l.b16 %v4575
        %v5361 = vunpack.c.l.b16 %v4576
        %v5362 = vunpack.c.l.b16 %v4577
        %v5363 = vunpack.c.l.b16 %v4578
        %v5364 = vunpack.c.l.b16 %v4579
        %v5365 = vunpack.c.l.b16 %v4580
        %v5366 = vunpack.c.l.b16 %v4581
        %v5367 = vunpack.c.l.b16 %v4582
        %v5368 = vunpack.c.l.b16 %v4583
        %v5369 = vunpack.c.l.b16 %v4584
        %v5370 = vunpack.c.l.b16 %v4585
        %v5371 = vunpack.c.l.b16 %v4586
        %v5372 = vunpack.c.l.b16 %v4587
        %v5373 = vunpack.c.l.b16 %v4588
        %v5374 = vunpack.c.l.b16 %v4589
        %v5375 = vunpack.c.l.b16 %v4590
        %v5376 = vunpack.c.l.b16 %v4591
        %v5377 = vunpack.c.l.b16 %v4592
        %v5378 = vunpack.c.l.b16 %v4593
        %v5379 = vunpack.c.l.b16 %v4594
        %v5380 = vunpack.c.l.b16 %v4595
        %v5381 = vunpack.c.l.b16 %v4596
        %v5382 = vunpack.c.l.b16 %v4597
        %v5383 = vunpack.c.l.b16 %v4598
        %v5384 = vunpack.c.l.b16 %v4599
        %v5385 = vunpack.c.l.b16 %v4600
        %v5386 = vunpack.c.l.b16 %v4601
        %v5387 = vunpack.c.l.b16 %v4602
        %v5388 = vunpack.c.l.b16 %v4603
        %v5389 = vunpack.c.l.b16 %v4604
        %v5390 = vunpack.c.l.b16 %v4605
        %v5391 = vunpack.c.l.b16 %v4606
        %v5392 = vunpack.c.l.b16 %v4607
        %v5393 = vunpack.c.l.b16 %v4608
        %v5394 = vunpack.c.l.b16 %v4609
        %v5395 = vunpack.c.l.b16 %v4610
        %v5396 = vunpack.c.l.b16 %v4611
        %v5397 = vunpack.c.l.b16 %v4612
        %v5398 = vunpack.c.l.b16 %v4613
        %v5399 = vunpack.c.l.b16 %v4614
        %v5400 = vunpack.c.l.b16 %v4615
        %v5401 = vunpack.c.l.b16 %v4616
        %v5402 = vunpack.c.l.b16 %v4617
        %v5403 = vunpack.c.l.b16 %v4618
        %v5404 = vunpack.c.l.b16 %v4619
        %v5405 = vunpack.c.l.b16 %v4620
        %v5406 = vunpack.c.l.b16 %v4621
        %v5407 = vunpack.c.l.b16 %v4622
        %v5408 = vunpack.c.l.b16 %v4623
        %v5409 = vunpack.c.l.b16 %v4624
        %v5410 = vunpack.c.l.b16 %v4625
        %v5411 = vunpack.c.l.b16 %v4626
        %v5412 = vunpack.c.l.b16 %v4627
        %v5413 = vunpack.c.l.b16 %v4628
        %v5414 = vunpack.c.l.b16 %v4629
        %v5415 = vunpack.c.l.b16 %v4630
        %v5416 = vunpack.c.l.b16 %v4631
        %v5417 = vunpack.c.l.b16 %v4632
        %v5418 = vunpack.c.l.b16 %v4633
        %v5419 = vunpack.c.l.b16 %v4634
        %v5420 = vunpack.c.l.b16 %v4635
        %v5421 = vunpack.c.l.b16 %v4636
        %v5422 = vunpack.c.l.b16 %v4637
        %v5423 = vunpack.c.l.b16 %v4638
        %v5424 = vunpack.c.l.b16 %v4639
        %v5425 = vunpack.c.l.b16 %v4640
        %v5426 = vunpack.c.l.b16 %v4641
        %v5427 = vunpack.c.l.b16 %v4642
        %v5428 = vunpack.c.l.b16 %v4643
        %v5429 = vunpack.c.l.b16 %v4644
        %v5430 = vunpack.c.l.b16 %v4645
        %v5431 = vunpack.c.l.b16 %v4646
        %v5432 = vunpack.c.l.b16 %v4647
        %v5433 = vunpack.c.l.b16 %v4648
        %v5434 = vunpack.c.l.b16 %v4649
        %v5435 = vunpack.c.l.b16 %v4650
        %v5436 = vunpack.c.l.b16 %v4651
        %v5437 = vunpack.c.l.b16 %v4652
        %v5438 = vunpack.c.l.b16 %v4653
        %v5439 = vunpack.c.l.b16 %v4654
        %v5440 = vunpack.c.l.b16 %v4655
        %v5441 = vunpack.c.l.b16 %v4656
        %v5442 = vunpack.c.l.b16 %v4657
        %v5443 = vunpack.c.l.b16 %v4658
        %v5444 = vpack.c.b16 %v5053, %v5052
        %v5445 = vpack.c.b16 %v5055, %v5054
        %v5446 = vpack.c.b16 %v5057, %v5056
        %v5447 = vpack.c.b16 %v5059, %v5058
        %v5448 = vpack.c.b16 %v5061, %v5060
        %v5449 = vpack.c.b16 %v5063, %v5062
        %v5450 = vpack.c.b16 %v5065, %v5064
        %v5451 = vpack.c.b16 %v5067, %v5066
        %v5452 = vpack.c.b16 %v5069, %v5068
        %v5453 = vpack.c.b16 %v5071, %v5070
        %v5454 = vpack.c.b16 %v5073, %v5072
        %v5455 = vpack.c.b16 %v5075, %v5074
        %v5456 = vpack.c.b16 %v5077, %v5076
        %v5457 = vpack.c.b16 %v5079, %v5078
        %v5458 = vpack.c.b16 %v5081, %v5080
        %v5459 = vpack.c.b16 %v5083, %v5082
        %v5460 = vpack.c.b16 %v5085, %v5084
        %v5461 = vpack.c.b16 %v5087, %v5086
        %v5462 = vpack.c.b16 %v5089, %v5088
        %v5463 = vpack.c.b16 %v5091, %v5090
        %v5464 = vpack.c.b16 %v5093, %v5092
        %v5465 = vpack.c.b16 %v5095, %v5094
        %v5466 = vpack.c.b16 %v5097, %v5096
        %v5467 = vpack.c.b16 %v5099, %v5098
        %v5468 = vpack.c.b16 %v5101, %v5100
        %v5469 = vpack.c.b16 %v5103, %v5102
        %v5470 = vpack.c.b16 %v5105, %v5104
        %v5471 = vpack.c.b16 %v5107, %v5106
        %v5472 = vpack.c.b16 %v5109, %v5108
        %v5473 = vpack.c.b16 %v5111, %v5110
        %v5474 = vpack.c.b16 %v5113, %v5112
        %v5475 = vpack.c.b16 %v5115, %v5114
        %v5476 = vpack.c.b16 %v5117, %v5116
        %v5477 = vpack.c.b16 %v5119, %v5118
        %v5478 = vpack.c.b16 %v5121, %v5120
        %v5479 = vpack.c.b16 %v5123, %v5122
        %v5480 = vpack.c.b16 %v5125, %v5124
        %v5481 = vpack.c.b16 %v5127, %v5126
        %v5482 = vpack.c.b16 %v5129, %v5128
        %v5483 = vpack.c.b16 %v5131, %v5130
        %v5484 = vpack.c.b16 %v5133, %v5132
        %v5485 = vpack.c.b16 %v5135, %v5134
        %v5486 = vpack.c.b16 %v5137, %v5136
        %v5487 = vpack.c.b16 %v5139, %v5138
        %v5488 = vpack.c.b16 %v5141, %v5140
        %v5489 = vpack.c.b16 %v5143, %v5142
        %v5490 = vpack.c.b16 %v5145, %v5144
        %v5491 = vpack.c.b16 %v5147, %v5146
        %v5492 = vpack.c.b16 %v5149, %v5148
        %v5493 = vpack.c.b16 %v5151, %v5150
        %v5494 = vpack.c.b16 %v5153, %v5152
        %v5495 = vpack.c.b16 %v5155, %v5154
        %v5496 = vpack.c.b16 %v5157, %v5156
        %v5497 = vpack.c.b16 %v5159, %v5158
        %v5498 = vpack.c.b16 %v5161, %v5160
        %v5499 = vpack.c.b16 %v5163, %v5162
        %v5500 = vpack.c.b16 %v5165, %v5164
        %v5501 = vpack.c.b16 %v5167, %v5166
        %v5502 = vpack.c.b16 %v5169, %v5168
        %v5503 = vpack.c.b16 %v5171, %v5170
        %v5504 = vpack.c.b16 %v5173, %v5172
        %v5505 = vpack.c.b16 %v5175, %v5174
        %v5506 = vpack.c.b16 %v5177, %v5176
        %v5507 = vpack.c.b16 %v5179, %v5178
        %v5508 = vpack.c.b16 %v5181, %v5180
        %v5509 = vpack.c.b16 %v5183, %v5182
        %v5510 = vpack.c.b16 %v5185, %v5184
        %v5511 = vpack.c.b16 %v5187, %v5186
        %v5512 = vpack.c.b16 %v5189, %v5188
        %v5513 = vpack.c.b16 %v5191, %v5190
        %v5514 = vpack.c.b16 %v5193, %v5192
        %v5515 = vpack.c.b16 %v5195, %v5194
        %v5516 = vpack.c.b16 %v5197, %v5196
        %v5517 = vpack.c.b16 %v5199, %v5198
        %v5518 = vpack.c.b16 %v5201, %v5200
        %v5519 = vpack.c.b16 %v5203, %v5202
        %v5520 = vpack.c.b16 %v5205, %v5204
        %v5521 = vpack.c.b16 %v5207, %v5206
        %v5522 = vpack.c.b16 %v5209, %v5208
        %v5523 = vpack.c.b16 %v5211, %v5210
        %v5524 = vpack.c.b16 %v5213, %v5212
        %v5525 = vpack.c.b16 %v5215, %v5214
        %v5526 = vpack.c.b16 %v5217, %v5216
        %v5527 = vpack.c.b16 %v5219, %v5218
        %v5528 = vpack.c.b16 %v5221, %v5220
        %v5529 = vpack.c.b16 %v5223, %v5222
        %v5530 = vpack.c.b16 %v5225, %v5224
        %v5531 = vpack.c.b16 %v5227, %v5226
        %v5532 = vpack.c.b16 %v5229, %v5228
        %v5533 = vpack.c.b16 %v5231, %v5230
        %v5534 = vpack.c.b16 %v5233, %v5232
        %v5535 = vpack.c.b16 %v5235, %v5234
        %v5536 = vpack.c.b16 %v5237, %v5236
        %v5537 = vpack.c.b16 %v5239, %v5238
        %v5538 = vpack.c.b16 %v5241, %v5240
        %v5539 = vpack.c.b16 %v5243, %v5242
        %v5540 = vpack.c.b16 %v5245, %v5244
        %v5541 = vpack.c.b16 %v5247, %v5246
        %v5542 = vpack.c.b16 %v5249, %v5248
        %v5543 = vpack.c.b16 %v5251, %v5250
        %v5544 = vpack.c.b16 %v5253, %v5252
        %v5545 = vpack.c.b16 %v5255, %v5254
        %v5546 = vpack.c.b16 %v5257, %v5256
        %v5547 = vpack.c.b16 %v5259, %v5258
        %v5548 = vpack.c.b16 %v5261, %v5260
        %v5549 = vpack.c.b16 %v5263, %v5262
        %v5550 = vpack.c.b16 %v5265, %v5264
        %v5551 = vpack.c.b16 %v5267, %v5266
        %v5552 = vpack.c.b16 %v5269, %v5268
        %v5553 = vpack.c.b16 %v5271, %v5270
        %v5554 = vpack.c.b16 %v5273, %v5272
        %v5555 = vpack.c.b16 %v5275, %v5274
        %v5556 = vpack.c.b16 %v5277, %v5276
        %v5557 = vpack.c.b16 %v5279, %v5278
        %v5558 = vpack.c.b16 %v5281, %v5280
        %v5559 = vpack.c.b16 %v5283, %v5282
        %v5560 = vpack.c.b16 %v5285, %v5284
        %v5561 = vpack.c.b16 %v5287, %v5286
        %v5562 = vpack.c.b16 %v5289, %v5288
        %v5563 = vpack.c.b16 %v5291, %v5290
        %v5564 = vpack.c.b16 %v5293, %v5292
        %v5565 = vpack.c.b16 %v5295, %v5294
        %v5566 = vpack.c.b16 %v5297, %v5296
        %v5567 = vpack.c.b16 %v5299, %v5298
        %v5568 = vpack.c.b16 %v5301, %v5300
        %v5569 = vpack.c.b16 %v5303, %v5302
        %v5570 = vpack.c.b16 %v5305, %v5304
        %v5571 = vpack.c.b16 %v5307, %v5306
        %v5572 = vpack.c.b16 %v5309, %v5308
        %v5573 = vpack.c.b16 %v5311, %v5310
        %v5574 = vpack.c.b16 %v5313, %v5312
        %v5575 = vpack.c.b16 %v5315, %v5314
        %v5576 = vpack.c.b16 %v5317, %v5316
        %v5577 = vpack.c.b16 %v5319, %v5318
        %v5578 = vpack.c.b16 %v5321, %v5320
        %v5579 = vpack.c.b16 %v5323, %v5322
        %v5580 = vpack.c.b16 %v5325, %v5324
        %v5581 = vpack.c.b16 %v5327, %v5326
        %v5582 = vpack.c.b16 %v5329, %v5328
        %v5583 = vpack.c.b16 %v5331, %v5330
        %v5584 = vpack.c.b16 %v5333, %v5332
        %v5585 = vpack.c.b16 %v5335, %v5334
        %v5586 = vpack.c.b16 %v5337, %v5336
        %v5587 = vpack.c.b16 %v5339, %v5338
        %v5588 = vpack.c.b16 %v5341, %v5340
        %v5589 = vpack.c.b16 %v5343, %v5342
        %v5590 = vpack.c.b16 %v5345, %v5344
        %v5591 = vpack.c.b16 %v5347, %v5346
        %v5592 = vpack.c.b16 %v5349, %v5348
        %v5593 = vpack.c.b16 %v5351, %v5350
        %v5594 = vpack.c.b16 %v5353, %v5352
        %v5595 = vpack.c.b16 %v5355, %v5354
        %v5596 = vpack.c.b16 %v5357, %v5356
        %v5597 = vpack.c.b16 %v5359, %v5358
        %v5598 = vpack.c.b16 %v5361, %v5360
        %v5599 = vpack.c.b16 %v5363, %v5362
        %v5600 = vpack.c.b16 %v5365, %v5364
        %v5601 = vpack.c.b16 %v5367, %v5366
        %v5602 = vpack.c.b16 %v5369, %v5368
        %v5603 = vpack.c.b16 %v5371, %v5370
        %v5604 = vpack.c.b16 %v5373, %v5372
        %v5605 = vpack.c.b16 %v5375, %v5374
        %v5606 = vpack.c.b16 %v5377, %v5376
        %v5607 = vpack.c.b16 %v5379, %v5378
        %v5608 = vpack.c.b16 %v5381, %v5380
        %v5609 = vpack.c.b16 %v5383, %v5382
        %v5610 = vpack.c.b16 %v5385, %v5384
        %v5611 = vpack.c.b16 %v5387, %v5386
        %v5612 = vpack.c.b16 %v5389, %v5388
        %v5613 = vpack.c.b16 %v5391, %v5390
        %v5614 = vpack.c.b16 %v5393, %v5392
        %v5615 = vpack.c.b16 %v5395, %v5394
        %v5616 = vpack.c.b16 %v5397, %v5396
        %v5617 = vpack.c.b16 %v5399, %v5398
        %v5618 = vpack.c.b16 %v5401, %v5400
        %v5619 = vpack.c.b16 %v5403, %v5402
        %v5620 = vpack.c.b16 %v5405, %v5404
        %v5621 = vpack.c.b16 %v5407, %v5406
        %v5622 = vpack.c.b16 %v5409, %v5408
        %v5623 = vpack.c.b16 %v5411, %v5410
        %v5624 = vpack.c.b16 %v5413, %v5412
        %v5625 = vpack.c.b16 %v5415, %v5414
        %v5626 = vpack.c.b16 %v5417, %v5416
        %v5627 = vpack.c.b16 %v5419, %v5418
        %v5628 = vpack.c.b16 %v5421, %v5420
        %v5629 = vpack.c.b16 %v5423, %v5422
        %v5630 = vpack.c.b16 %v5425, %v5424
        %v5631 = vpack.c.b16 %v5427, %v5426
        %v5632 = vpack.c.b16 %v5429, %v5428
        %v5633 = vpack.c.b16 %v5431, %v5430
        %v5634 = vpack.c.b16 %v5433, %v5432
        %v5635 = vpack.c.b16 %v5435, %v5434
        %v5636 = vpack.c.b16 %v5437, %v5436
        %v5637 = vpack.c.b16 %v5439, %v5438
        %v5638 = vpack.c.b16 %v5441, %v5440
        %v5639 = vpack.c.b16 %v5443, %v5442
        %v5837 = vsel %vm2418, %v4266, 0
        %5839 = vmatprep.subr.bf16.mxu0 0
        %5840 = vmatpush1.bf16.msra.mxu0 %v5444
        %5841 = vmatprep.subr.bf16.mxu0 0
        %5842 = vmatpush1.bf16.msra.mxu0 %v5445
        %5843 = vmatprep.subr.bf16.mxu0 0
        %5844 = vmatpush1.bf16.msra.mxu0 %v5446
        %5845 = vmatprep.subr.bf16.mxu0 0
        %5846 = vmatpush1.bf16.msra.mxu0 %v5447
        %5847 = vmatprep.subr.bf16.mxu0 0
        %5848 = vmatpush1.bf16.msra.mxu0 %v5448
        %5849 = vmatprep.subr.bf16.mxu0 0
        %5850 = vmatpush1.bf16.msra.mxu0 %v5449
        %5851 = vmatprep.subr.bf16.mxu0 0
        %5852 = vmatpush1.bf16.msra.mxu0 %v5450
        %5853 = vmatprep.subr.bf16.mxu0 0
        %5854 = vmatpush1.bf16.msra.mxu0 %v5451
        %5855 = vmatprep.subr.bf16.mxu0 0
        %5856 = vmatpush1.bf16.msra.mxu0 %v5452
        %5857 = vmatprep.subr.bf16.mxu0 0
        %5858 = vmatpush1.bf16.msra.mxu0 %v5453
        %5859 = vmatprep.subr.bf16.mxu0 0
        %5860 = vmatpush1.bf16.msra.mxu0 %v5454
        %5861 = vmatprep.subr.bf16.mxu0 0
        %5862 = vmatpush1.bf16.msra.mxu0 %v5455
        %5863 = vmatprep.subr.bf16.mxu0 0
        %5864 = vmatpush1.bf16.msra.mxu0 %v5456
        %5865 = vmatprep.subr.bf16.mxu0 0
        %5866 = vmatpush1.bf16.msra.mxu0 %v5457
        %5867 = vmatprep.subr.bf16.mxu0 0
        %5868 = vmatpush1.bf16.msra.mxu0 %v5458
        %5869 = vmatprep.subr.bf16.mxu0 0
        %5870 = vmatpush1.bf16.msra.mxu0 %v5459
        %5871 = vmatprep.mubr.bf16.mxu0 %v4243
        %5872 = vmatmul.mubr.bf16.gmra.mrb[0].mxu0 %v4242
        %v5873 = vpop.f32.mrb[0].mxu0
        %v5874 = vadd.f32 %v4659, %v5873
        %v5875 = vpop.f32.mrb[0].mxu0
        %v5876 = vpop.f32.mrb[0].mxu0
        %v5877 = vpop.f32.mrb[0].mxu0
        %5878 = vdwg.mxu0
        %5879 = vmatprep.subr.bf16.mxu0 0
        %5880 = vmatpush1.bf16.msra.mxu0 %v5460
        %5881 = vmatprep.subr.bf16.mxu0 0
        %5882 = vmatpush1.bf16.msra.mxu0 %v5461
        %5883 = vmatprep.subr.bf16.mxu0 0
        %5884 = vmatpush1.bf16.msra.mxu0 %v5462
        %5885 = vmatprep.subr.bf16.mxu0 0
        %5886 = vmatpush1.bf16.msra.mxu0 %v5463
        %5887 = vmatprep.subr.bf16.mxu0 0
        %5888 = vmatpush1.bf16.msra.mxu0 %v5464
        %5889 = vmatprep.subr.bf16.mxu0 0
        %5890 = vmatpush1.bf16.msra.mxu0 %v5465
        %5891 = vmatprep.subr.bf16.mxu0 0
        %5892 = vmatpush1.bf16.msra.mxu0 %v5466
        %5893 = vmatprep.subr.bf16.mxu0 0
        %5894 = vmatpush1.bf16.msra.mxu0 %v5467
        %5895 = vmatprep.subr.bf16.mxu0 0
        %5896 = vmatpush1.bf16.msra.mxu0 %v5468
        %5897 = vmatprep.subr.bf16.mxu0 0
        %5898 = vmatpush1.bf16.msra.mxu0 %v5469
        %5899 = vmatprep.subr.bf16.mxu0 0
        %5900 = vmatpush1.bf16.msra.mxu0 %v5470
        %5901 = vmatprep.subr.bf16.mxu0 0
        %5902 = vmatpush1.bf16.msra.mxu0 %v5471
        %5903 = vmatprep.subr.bf16.mxu0 0
        %5904 = vmatpush1.bf16.msra.mxu0 %v5472
        %5905 = vmatprep.subr.bf16.mxu0 0
        %5906 = vmatpush1.bf16.msra.mxu0 %v5473
        %5907 = vmatprep.subr.bf16.mxu0 0
        %5908 = vmatpush1.bf16.msra.mxu0 %v5474
        %5909 = vmatprep.subr.bf16.mxu0 0
        %5910 = vmatpush1.bf16.msra.mxu0 %v5475
        %5911 = vmatprep.mubr.bf16.mxu0 %v4245
        %5912 = vmatmul.mubr.bf16.gmra.mrb[0].mxu0 %v4244
        %v5913 = vpop.f32.mrb[0].mxu0
        %v5914 = vadd.f32 %v5874, %v5913
        %v5915 = vpop.f32.mrb[0].mxu0
        %v5916 = vpop.f32.mrb[0].mxu0
        %v5917 = vpop.f32.mrb[0].mxu0
        %5918 = vdwg.mxu0
        %5919 = vmatprep.subr.bf16.mxu0 0
        %5920 = vmatpush1.bf16.msra.mxu0 %v5476
        %5921 = vmatprep.subr.bf16.mxu0 0
        %5922 = vmatpush1.bf16.msra.mxu0 %v5477
        %5923 = vmatprep.subr.bf16.mxu0 0
        %5924 = vmatpush1.bf16.msra.mxu0 %v5478
        %5925 = vmatprep.subr.bf16.mxu0 0
        %5926 = vmatpush1.bf16.msra.mxu0 %v5479
        %5927 = vmatprep.subr.bf16.mxu0 0
        %5928 = vmatpush1.bf16.msra.mxu0 %v5480
        %5929 = vmatprep.subr.bf16.mxu0 0
        %5930 = vmatpush1.bf16.msra.mxu0 %v5481
        %5931 = vmatprep.subr.bf16.mxu0 0
        %5932 = vmatpush1.bf16.msra.mxu0 %v5482
        %5933 = vmatprep.subr.bf16.mxu0 0
        %5934 = vmatpush1.bf16.msra.mxu0 %v5483
        %5935 = vmatprep.subr.bf16.mxu0 0
        %5936 = vmatpush1.bf16.msra.mxu0 %v5484
        %5937 = vmatprep.subr.bf16.mxu0 0
        %5938 = vmatpush1.bf16.msra.mxu0 %v5485
        %5939 = vmatprep.subr.bf16.mxu0 0
        %5940 = vmatpush1.bf16.msra.mxu0 %v5486
        %5941 = vmatprep.subr.bf16.mxu0 0
        %5942 = vmatpush1.bf16.msra.mxu0 %v5487
        %5943 = vmatprep.subr.bf16.mxu0 0
        %5944 = vmatpush1.bf16.msra.mxu0 %v5488
        %5945 = vmatprep.subr.bf16.mxu0 0
        %5946 = vmatpush1.bf16.msra.mxu0 %v5489
        %5947 = vmatprep.subr.bf16.mxu0 0
        %5948 = vmatpush1.bf16.msra.mxu0 %v5490
        %5949 = vmatprep.subr.bf16.mxu0 0
        %5950 = vmatpush1.bf16.msra.mxu0 %v5491
        %5951 = vmatprep.mubr.bf16.mxu0 %v4247
        %5952 = vmatmul.mubr.bf16.gmra.mrb[0].mxu0 %v4246
        %v5953 = vpop.f32.mrb[0].mxu0
        %v5954 = vadd.f32 %v5914, %v5953
        %v5955 = vpop.f32.mrb[0].mxu0
        %v5956 = vpop.f32.mrb[0].mxu0
        %v5957 = vpop.f32.mrb[0].mxu0
        %5958 = vdwg.mxu0
        %5959 = vmatprep.subr.bf16.mxu0 0
        %5960 = vmatpush1.bf16.msra.mxu0 %v5492
        %5961 = vmatprep.subr.bf16.mxu0 0
        %5962 = vmatpush1.bf16.msra.mxu0 %v5493
        %5963 = vmatprep.subr.bf16.mxu0 0
        %5964 = vmatpush1.bf16.msra.mxu0 %v5494
        %5965 = vmatprep.subr.bf16.mxu0 0
        %5966 = vmatpush1.bf16.msra.mxu0 %v5495
        %5967 = vmatprep.subr.bf16.mxu0 0
        %5968 = vmatpush1.bf16.msra.mxu0 %v5496
        %5969 = vmatprep.subr.bf16.mxu0 0
        %5970 = vmatpush1.bf16.msra.mxu0 %v5497
        %5971 = vmatprep.subr.bf16.mxu0 0
        %5972 = vmatpush1.bf16.msra.mxu0 %v5498
        %5973 = vmatprep.subr.bf16.mxu0 0
        %5974 = vmatpush1.bf16.msra.mxu0 %v5499
        %5975 = vmatprep.subr.bf16.mxu0 0
        %5976 = vmatpush1.bf16.msra.mxu0 %v5500
        %5977 = vmatprep.subr.bf16.mxu0 0
        %5978 = vmatpush1.bf16.msra.mxu0 %v5501
        %5979 = vmatprep.subr.bf16.mxu0 0
        %5980 = vmatpush1.bf16.msra.mxu0 %v5502
        %5981 = vmatprep.subr.bf16.mxu0 0
        %5982 = vmatpush1.bf16.msra.mxu0 %v5503
        %5983 = vmatprep.subr.bf16.mxu0 0
        %5984 = vmatpush1.bf16.msra.mxu0 %v5504
        %5985 = vmatprep.subr.bf16.mxu0 0
        %5986 = vmatpush1.bf16.msra.mxu0 %v5505
        %5987 = vmatprep.subr.bf16.mxu0 0
        %5988 = vmatpush1.bf16.msra.mxu0 %v5506
        %5989 = vmatprep.subr.bf16.mxu0 0
        %5990 = vmatpush1.bf16.msra.mxu0 %v5507
        %5991 = vmatprep.mubr.bf16.mxu0 %v4249
        %5992 = vmatmul.mubr.bf16.gmra.mrb[0].mxu0 %v4248
        %v5993 = vpop.f32.mrb[0].mxu0
        %v5994 = vadd.f32 %v5954, %v5993
        %v5995 = vpop.f32.mrb[0].mxu0
        %v5996 = vpop.f32.mrb[0].mxu0
        %v5997 = vpop.f32.mrb[0].mxu0
        %5998 = vdwg.mxu0
        %5999 = vmatprep.subr.bf16.mxu0 0
        %6000 = vmatpush1.bf16.msra.mxu0 %v5508
        %6001 = vmatprep.subr.bf16.mxu0 0
        %6002 = vmatpush1.bf16.msra.mxu0 %v5509
        %6003 = vmatprep.subr.bf16.mxu0 0
        %6004 = vmatpush1.bf16.msra.mxu0 %v5510
        %6005 = vmatprep.subr.bf16.mxu0 0
        %6006 = vmatpush1.bf16.msra.mxu0 %v5511
        %6007 = vmatprep.subr.bf16.mxu0 0
        %6008 = vmatpush1.bf16.msra.mxu0 %v5512
        %6009 = vmatprep.subr.bf16.mxu0 0
        %6010 = vmatpush1.bf16.msra.mxu0 %v5513
        %6011 = vmatprep.subr.bf16.mxu0 0
        %6012 = vmatpush1.bf16.msra.mxu0 %v5514
        %6013 = vmatprep.subr.bf16.mxu0 0
        %6014 = vmatpush1.bf16.msra.mxu0 %v5515
        %6015 = vmatprep.subr.bf16.mxu0 0
        %6016 = vmatpush1.bf16.msra.mxu0 %v5516
        %6017 = vmatprep.subr.bf16.mxu0 0
        %6018 = vmatpush1.bf16.msra.mxu0 %v5517
        %6019 = vmatprep.subr.bf16.mxu0 0
        %6020 = vmatpush1.bf16.msra.mxu0 %v5518
        %6021 = vmatprep.subr.bf16.mxu0 0
        %6022 = vmatpush1.bf16.msra.mxu0 %v5519
        %6023 = vmatprep.subr.bf16.mxu0 0
        %6024 = vmatpush1.bf16.msra.mxu0 %v5520
        %6025 = vmatprep.subr.bf16.mxu0 0
        %6026 = vmatpush1.bf16.msra.mxu0 %v5521
        %6027 = vmatprep.subr.bf16.mxu0 0
        %6028 = vmatpush1.bf16.msra.mxu0 %v5522
        %6029 = vmatprep.subr.bf16.mxu0 0
        %6030 = vmatpush1.bf16.msra.mxu0 %v5523
        %6031 = vmatprep.mubr.bf16.mxu0 %v4251
        %6032 = vmatmul.mubr.bf16.gmra.mrb[0].mxu0 %v4250
        %v6033 = vpop.f32.mrb[0].mxu0
        %v6034 = vadd.f32 %v5994, %v6033
        %v6035 = vpop.f32.mrb[0].mxu0
        %v6036 = vpop.f32.mrb[0].mxu0
        %v6037 = vpop.f32.mrb[0].mxu0
        %6038 = vdwg.mxu0
        %6039 = vmatprep.subr.bf16.mxu0 0
        %6040 = vmatpush1.bf16.msra.mxu0 %v5524
        %6041 = vmatprep.subr.bf16.mxu0 0
        %6042 = vmatpush1.bf16.msra.mxu0 %v5525
        %6043 = vmatprep.subr.bf16.mxu0 0
        %6044 = vmatpush1.bf16.msra.mxu0 %v5526
        %6045 = vmatprep.subr.bf16.mxu0 0
        %6046 = vmatpush1.bf16.msra.mxu0 %v5527
        %6047 = vmatprep.subr.bf16.mxu0 0
        %6048 = vmatpush1.bf16.msra.mxu0 %v5528
        %6049 = vmatprep.subr.bf16.mxu0 0
        %6050 = vmatpush1.bf16.msra.mxu0 %v5529
        %6051 = vmatprep.subr.bf16.mxu0 0
        %6052 = vmatpush1.bf16.msra.mxu0 %v5530
        %6053 = vmatprep.subr.bf16.mxu0 0
        %6054 = vmatpush1.bf16.msra.mxu0 %v5531
        %6055 = vmatprep.subr.bf16.mxu0 0
        %6056 = vmatpush1.bf16.msra.mxu0 %v5532
        %6057 = vmatprep.subr.bf16.mxu0 0
        %6058 = vmatpush1.bf16.msra.mxu0 %v5533
        %6059 = vmatprep.subr.bf16.mxu0 0
        %6060 = vmatpush1.bf16.msra.mxu0 %v5534
        %6061 = vmatprep.subr.bf16.mxu0 0
        %6062 = vmatpush1.bf16.msra.mxu0 %v5535
        %6063 = vmatprep.subr.bf16.mxu0 0
        %6064 = vmatpush1.bf16.msra.mxu0 %v5536
        %6065 = vmatprep.subr.bf16.mxu0 0
        %6066 = vmatpush1.bf16.msra.mxu0 %v5537
        %6067 = vmatprep.subr.bf16.mxu0 0
        %6068 = vmatpush1.bf16.msra.mxu0 %v5538
        %6069 = vmatprep.subr.bf16.mxu0 0
        %6070 = vmatpush1.bf16.msra.mxu0 %v5539
        %6071 = vmatprep.mubr.bf16.mxu0 %v4253
        %6072 = vmatmul.mubr.bf16.gmra.mrb[0].mxu0 %v4252
        %v6073 = vpop.f32.mrb[0].mxu0
        %v6074 = vadd.f32 %v6034, %v6073
        %v6075 = vpop.f32.mrb[0].mxu0
        %v6076 = vpop.f32.mrb[0].mxu0
        %v6077 = vpop.f32.mrb[0].mxu0
        %6078 = vdwg.mxu0
        %6079 = vmatprep.subr.bf16.mxu0 0
        %6080 = vmatpush1.bf16.msra.mxu0 %v5540
        %6081 = vmatprep.subr.bf16.mxu0 0
        %6082 = vmatpush1.bf16.msra.mxu0 %v5541
        %6083 = vmatprep.subr.bf16.mxu0 0
        %6084 = vmatpush1.bf16.msra.mxu0 %v5542
        %6085 = vmatprep.subr.bf16.mxu0 0
        %6086 = vmatpush1.bf16.msra.mxu0 %v5543
        %6087 = vmatprep.subr.bf16.mxu0 0
        %6088 = vmatpush1.bf16.msra.mxu0 %v5544
        %6089 = vmatprep.subr.bf16.mxu0 0
        %6090 = vmatpush1.bf16.msra.mxu0 %v5545
        %6091 = vmatprep.subr.bf16.mxu0 0
        %6092 = vmatpush1.bf16.msra.mxu0 %v5546
        %6093 = vmatprep.subr.bf16.mxu0 0
        %6094 = vmatpush1.bf16.msra.mxu0 %v5547
        %6095 = vmatprep.subr.bf16.mxu0 0
        %6096 = vmatpush1.bf16.msra.mxu0 %v5548
        %6097 = vmatprep.subr.bf16.mxu0 0
        %6098 = vmatpush1.bf16.msra.mxu0 %v5549
        %6099 = vmatprep.subr.bf16.mxu0 0
        %6100 = vmatpush1.bf16.msra.mxu0 %v5550
        %6101 = vmatprep.subr.bf16.mxu0 0
        %6102 = vmatpush1.bf16.msra.mxu0 %v5551
        %6103 = vmatprep.subr.bf16.mxu0 0
        %6104 = vmatpush1.bf16.msra.mxu0 %v5552
        %6105 = vmatprep.subr.bf16.mxu0 0
        %6106 = vmatpush1.bf16.msra.mxu0 %v5553
        %6107 = vmatprep.subr.bf16.mxu0 0
        %6108 = vmatpush1.bf16.msra.mxu0 %v5554
        %6109 = vmatprep.subr.bf16.mxu0 0
        %6110 = vmatpush1.bf16.msra.mxu0 %v5555
        %6111 = vmatprep.mubr.bf16.mxu0 %v4255
        %6112 = vmatmul.mubr.bf16.gmra.mrb[0].mxu0 %v4254
        %v6113 = vpop.f32.mrb[0].mxu0
        %v6114 = vadd.f32 %v6074, %v6113
        %v6115 = vpop.f32.mrb[0].mxu0
        %v6116 = vpop.f32.mrb[0].mxu0
        %v6117 = vpop.f32.mrb[0].mxu0
        %6118 = vdwg.mxu0
        %6119 = vmatprep.subr.bf16.mxu0 0
        %6120 = vmatpush1.bf16.msra.mxu0 %v5556
        %6121 = vmatprep.subr.bf16.mxu0 0
        %6122 = vmatpush1.bf16.msra.mxu0 %v5557
        %6123 = vmatprep.subr.bf16.mxu0 0
        %6124 = vmatpush1.bf16.msra.mxu0 %v5558
        %6125 = vmatprep.subr.bf16.mxu0 0
        %6126 = vmatpush1.bf16.msra.mxu0 %v5559
        %6127 = vmatprep.subr.bf16.mxu0 0
        %6128 = vmatpush1.bf16.msra.mxu0 %v5560
        %6129 = vmatprep.subr.bf16.mxu0 0
        %6130 = vmatpush1.bf16.msra.mxu0 %v5561
        %6131 = vmatprep.subr.bf16.mxu0 0
        %6132 = vmatpush1.bf16.msra.mxu0 %v5562
        %6133 = vmatprep.subr.bf16.mxu0 0
        %6134 = vmatpush1.bf16.msra.mxu0 %v5563
        %6135 = vmatprep.subr.bf16.mxu0 0
        %6136 = vmatpush1.bf16.msra.mxu0 %v5564
        %6137 = vmatprep.subr.bf16.mxu0 0
        %6138 = vmatpush1.bf16.msra.mxu0 %v5565
        %6139 = vmatprep.subr.bf16.mxu0 0
        %6140 = vmatpush1.bf16.msra.mxu0 %v5566
        %6141 = vmatprep.subr.bf16.mxu0 0
        %6142 = vmatpush1.bf16.msra.mxu0 %v5567
        %6143 = vmatprep.subr.bf16.mxu0 0
        %6144 = vmatpush1.bf16.msra.mxu0 %v5568
        %6145 = vmatprep.subr.bf16.mxu0 0
        %6146 = vmatpush1.bf16.msra.mxu0 %v5569
        %6147 = vmatprep.subr.bf16.mxu0 0
        %6148 = vmatpush1.bf16.msra.mxu0 %v5570
        %6149 = vmatprep.subr.bf16.mxu0 0
        %6150 = vmatpush1.bf16.msra.mxu0 %v5571
        %6151 = vmatprep.mubr.bf16.mxu0 %v4257
        %6152 = vmatmul.mubr.bf16.gmra.mrb[0].mxu0 %v4256
        %v6153 = vpop.f32.mrb[0].mxu0
        %v6154 = vadd.f32 %v6114, %v6153
        %v6155 = vpop.f32.mrb[0].mxu0
        %v6156 = vpop.f32.mrb[0].mxu0
        %v6157 = vpop.f32.mrb[0].mxu0
        %6158 = vdwg.mxu0
        %6159 = vmatprep.subr.bf16.mxu0 0
        %6160 = vmatpush1.bf16.msra.mxu0 %v5572
        %6161 = vmatprep.subr.bf16.mxu0 0
        %6162 = vmatpush1.bf16.msra.mxu0 %v5573
        %6163 = vmatprep.subr.bf16.mxu0 0
        %6164 = vmatpush1.bf16.msra.mxu0 %v5574
        %6165 = vmatprep.subr.bf16.mxu0 0
        %6166 = vmatpush1.bf16.msra.mxu0 %v5575
        %6167 = vmatprep.subr.bf16.mxu0 0
        %6168 = vmatpush1.bf16.msra.mxu0 %v5576
        %6169 = vmatprep.subr.bf16.mxu0 0
        %6170 = vmatpush1.bf16.msra.mxu0 %v5577
        %6171 = vmatprep.subr.bf16.mxu0 0
        %6172 = vmatpush1.bf16.msra.mxu0 %v5578
        %6173 = vmatprep.subr.bf16.mxu0 0
        %6174 = vmatpush1.bf16.msra.mxu0 %v5579
        %6175 = vmatprep.subr.bf16.mxu0 0
        %6176 = vmatpush1.bf16.msra.mxu0 %v5580
        %6177 = vmatprep.subr.bf16.mxu0 0
        %6178 = vmatpush1.bf16.msra.mxu0 %v5581
        %6179 = vmatprep.subr.bf16.mxu0 0
        %6180 = vmatpush1.bf16.msra.mxu0 %v5582
        %6181 = vmatprep.subr.bf16.mxu0 0
        %6182 = vmatpush1.bf16.msra.mxu0 %v5583
        %6183 = vmatprep.subr.bf16.mxu0 0
        %6184 = vmatpush1.bf16.msra.mxu0 %v5584
        %6185 = vmatprep.subr.bf16.mxu0 0
        %6186 = vmatpush1.bf16.msra.mxu0 %v5585
        %6187 = vmatprep.subr.bf16.mxu0 0
        %6188 = vmatpush1.bf16.msra.mxu0 %v5586
        %6189 = vmatprep.subr.bf16.mxu0 0
        %6190 = vmatpush1.bf16.msra.mxu0 %v5587
        %6191 = vmatprep.mubr.bf16.mxu0 %v4259
        %6192 = vmatmul.mubr.bf16.gmra.mrb[0].mxu0 %v4258
        %v6193 = vpop.f32.mrb[0].mxu0
        %v6194 = vadd.f32 %v6154, %v6193
        %v6195 = vpop.f32.mrb[0].mxu0
        %v6196 = vpop.f32.mrb[0].mxu0
        %v6197 = vpop.f32.mrb[0].mxu0
        %6198 = vdwg.mxu0
        %6199 = vmatprep.subr.bf16.mxu0 0
        %6200 = vmatpush1.bf16.msra.mxu0 %v5588
        %6201 = vmatprep.subr.bf16.mxu0 0
        %6202 = vmatpush1.bf16.msra.mxu0 %v5589
        %6203 = vmatprep.subr.bf16.mxu0 0
        %6204 = vmatpush1.bf16.msra.mxu0 %v5590
        %6205 = vmatprep.subr.bf16.mxu0 0
        %6206 = vmatpush1.bf16.msra.mxu0 %v5591
        %6207 = vmatprep.subr.bf16.mxu0 0
        %6208 = vmatpush1.bf16.msra.mxu0 %v5592
        %6209 = vmatprep.subr.bf16.mxu0 0
        %6210 = vmatpush1.bf16.msra.mxu0 %v5593
        %6211 = vmatprep.subr.bf16.mxu0 0
        %6212 = vmatpush1.bf16.msra.mxu0 %v5594
        %6213 = vmatprep.subr.bf16.mxu0 0
        %6214 = vmatpush1.bf16.msra.mxu0 %v5595
        %6215 = vmatprep.subr.bf16.mxu0 0
        %6216 = vmatpush1.bf16.msra.mxu0 %v5596
        %6217 = vmatprep.subr.bf16.mxu0 0
        %6218 = vmatpush1.bf16.msra.mxu0 %v5597
        %6219 = vmatprep.subr.bf16.mxu0 0
        %6220 = vmatpush1.bf16.msra.mxu0 %v5598
        %6221 = vmatprep.subr.bf16.mxu0 0
        %6222 = vmatpush1.bf16.msra.mxu0 %v5599
        %6223 = vmatprep.subr.bf16.mxu0 0
        %6224 = vmatpush1.bf16.msra.mxu0 %v5600
        %6225 = vmatprep.subr.bf16.mxu0 0
        %6226 = vmatpush1.bf16.msra.mxu0 %v5601
        %6227 = vmatprep.subr.bf16.mxu0 0
        %6228 = vmatpush1.bf16.msra.mxu0 %v5602
        %6229 = vmatprep.subr.bf16.mxu0 0
        %6230 = vmatpush1.bf16.msra.mxu0 %v5603
        %6231 = vmatprep.mubr.bf16.mxu0 %v4261
        %6232 = vmatmul.mubr.bf16.gmra.mrb[0].mxu0 %v4260
        %v6233 = vpop.f32.mrb[0].mxu0
        %v6234 = vadd.f32 %v6194, %v6233
        %v6235 = vpop.f32.mrb[0].mxu0
        %v6236 = vpop.f32.mrb[0].mxu0
        %v6237 = vpop.f32.mrb[0].mxu0
        %6238 = vdwg.mxu0
        %6239 = vmatprep.subr.bf16.mxu0 0
        %6240 = vmatpush1.bf16.msra.mxu0 %v5604
        %6241 = vmatprep.subr.bf16.mxu0 0
        %6242 = vmatpush1.bf16.msra.mxu0 %v5605
        %6243 = vmatprep.subr.bf16.mxu0 0
        %6244 = vmatpush1.bf16.msra.mxu0 %v5606
        %6245 = vmatprep.subr.bf16.mxu0 0
        %6246 = vmatpush1.bf16.msra.mxu0 %v5607
        %6247 = vmatprep.subr.bf16.mxu0 0
        %6248 = vmatpush1.bf16.msra.mxu0 %v5608
        %6249 = vmatprep.subr.bf16.mxu0 0
        %6250 = vmatpush1.bf16.msra.mxu0 %v5609
        %6251 = vmatprep.subr.bf16.mxu0 0
        %6252 = vmatpush1.bf16.msra.mxu0 %v5610
        %6253 = vmatprep.subr.bf16.mxu0 0
        %6254 = vmatpush1.bf16.msra.mxu0 %v5611
        %6255 = vmatprep.subr.bf16.mxu0 0
        %6256 = vmatpush1.bf16.msra.mxu0 %v5612
        %6257 = vmatprep.subr.bf16.mxu0 0
        %6258 = vmatpush1.bf16.msra.mxu0 %v5613
        %6259 = vmatprep.subr.bf16.mxu0 0
        %6260 = vmatpush1.bf16.msra.mxu0 %v5614
        %6261 = vmatprep.subr.bf16.mxu0 0
        %6262 = vmatpush1.bf16.msra.mxu0 %v5615
        %6263 = vmatprep.subr.bf16.mxu0 0
        %6264 = vmatpush1.bf16.msra.mxu0 %v5616
        %6265 = vmatprep.subr.bf16.mxu0 0
        %6266 = vmatpush1.bf16.msra.mxu0 %v5617
        %6267 = vmatprep.subr.bf16.mxu0 0
        %6268 = vmatpush1.bf16.msra.mxu0 %v5618
        %6269 = vmatprep.subr.bf16.mxu0 0
        %6270 = vmatpush1.bf16.msra.mxu0 %v5619
        %6271 = vmatprep.mubr.bf16.mxu0 %v4263
        %6272 = vmatmul.mubr.bf16.gmra.mrb[0].mxu0 %v4262
        %v6273 = vpop.f32.mrb[0].mxu0
        %v6274 = vadd.f32 %v6234, %v6273
        %v6275 = vpop.f32.mrb[0].mxu0
        %v6276 = vpop.f32.mrb[0].mxu0
        %v6277 = vpop.f32.mrb[0].mxu0
        %6278 = vdwg.mxu0
        %6279 = vmatprep.subr.bf16.mxu0 0
        %6280 = vmatpush1.bf16.msra.mxu0 %v5620
        %6281 = vmatprep.subr.bf16.mxu0 0
        %6282 = vmatpush1.bf16.msra.mxu0 %v5621
        %6283 = vmatprep.subr.bf16.mxu0 0
        %6284 = vmatpush1.bf16.msra.mxu0 %v5622
        %6285 = vmatprep.subr.bf16.mxu0 0
        %6286 = vmatpush1.bf16.msra.mxu0 %v5623
        %6287 = vmatprep.subr.bf16.mxu0 0
        %6288 = vmatpush1.bf16.msra.mxu0 %v5624
        %6289 = vmatprep.subr.bf16.mxu0 0
        %6290 = vmatpush1.bf16.msra.mxu0 %v5625
        %6291 = vmatprep.subr.bf16.mxu0 0
        %6292 = vmatpush1.bf16.msra.mxu0 %v5626
        %6293 = vmatprep.subr.bf16.mxu0 0
        %6294 = vmatpush1.bf16.msra.mxu0 %v5627
        %6295 = vmatprep.subr.bf16.mxu0 0
        %6296 = vmatpush1.bf16.msra.mxu0 %v5628
        %6297 = vmatprep.subr.bf16.mxu0 0
        %6298 = vmatpush1.bf16.msra.mxu0 %v5629
        %6299 = vmatprep.subr.bf16.mxu0 0
        %6300 = vmatpush1.bf16.msra.mxu0 %v5630
        %6301 = vmatprep.subr.bf16.mxu0 0
        %6302 = vmatpush1.bf16.msra.mxu0 %v5631
        %6303 = vmatprep.subr.bf16.mxu0 0
        %6304 = vmatpush1.bf16.msra.mxu0 %v5632
        %6305 = vmatprep.subr.bf16.mxu0 0
        %6306 = vmatpush1.bf16.msra.mxu0 %v5633
        %6307 = vmatprep.subr.bf16.mxu0 0
        %6308 = vmatpush1.bf16.msra.mxu0 %v5634
        %6309 = vmatprep.subr.bf16.mxu0 0
        %6310 = vmatpush1.bf16.msra.mxu0 %v5635
        %6311 = vmatprep.mubr.bf16.mxu0 %v4265
        %6312 = vmatmul.mubr.bf16.gmra.mrb[0].mxu0 %v4264
        %v6313 = vpop.f32.mrb[0].mxu0
        %v6314 = vadd.f32 %v6274, %v6313
        %v6315 = vpop.f32.mrb[0].mxu0
        %v6316 = vpop.f32.mrb[0].mxu0
        %v6317 = vpop.f32.mrb[0].mxu0
        %6318 = vdwg.mxu0
        %6319 = vmatprep.subr.bf16.mxu0 0
        %6320 = vmatpush1.bf16.msra.mxu0 %v5636
        %6321 = vmatprep.subr.bf16.mxu0 0
        %6322 = vmatpush1.bf16.msra.mxu0 %v5637
        %6323 = vmatprep.subr.bf16.mxu0 0
        %6324 = vmatpush1.bf16.msra.mxu0 %v5638
        %6325 = vmatprep.subr.bf16.mxu0 0
        %6326 = vmatpush1.bf16.msra.mxu0 %v5639
        %6327 = vmatprep.subr.bf16.mxu0 0
        %6328 = vmatpush1.bf16.msra.mxu0 0
        %6329 = vmatprep.subr.bf16.mxu0 0
        %6330 = vmatpush1.bf16.msra.mxu0 0
        %6331 = vmatprep.subr.bf16.mxu0 0
        %6332 = vmatpush1.bf16.msra.mxu0 0
        %6333 = vmatprep.subr.bf16.mxu0 0
        %6334 = vmatpush1.bf16.msra.mxu0 0
        %6335 = vmatprep.subr.bf16.mxu0 0
        %6336 = vmatpush1.bf16.msra.mxu0 0
        %6337 = vmatprep.subr.bf16.mxu0 0
        %6338 = vmatpush1.bf16.msra.mxu0 0
        %6339 = vmatprep.subr.bf16.mxu0 0
        %6340 = vmatpush1.bf16.msra.mxu0 0
        %6341 = vmatprep.subr.bf16.mxu0 0
        %6342 = vmatpush1.bf16.msra.mxu0 0
        %6343 = vmatprep.subr.bf16.mxu0 0
        %6344 = vmatpush1.bf16.msra.mxu0 0
        %6345 = vmatprep.subr.bf16.mxu0 0
        %6346 = vmatpush1.bf16.msra.mxu0 0
        %6347 = vmatprep.subr.bf16.mxu0 0
        %6348 = vmatpush1.bf16.msra.mxu0 0
        %6349 = vmatprep.subr.bf16.mxu0 0
        %6350 = vmatpush1.bf16.msra.mxu0 0
        %6351 = vmatprep.mubr.bf16.mxu0 0
        %6352 = vmatmul.mubr.bf16.gmra.mrb[0].mxu0 %v5837
        %v6353 = vpop.f32.mrb[0].mxu0
        %v6354 = vadd.f32 %v6314, %v6353
        %v6355 = vpop.f32.mrb[0].mxu0
        %v6356 = vpop.f32.mrb[0].mxu0
        %v6357 = vpop.f32.mrb[0].mxu0
        %6358 = vdwg.mxu0
        %v6359 = vmax.f32 %v6354, 0.0
        %v6360 = vpack.c.bf16 %v6359, %v6359
        %v6361 = vld [vmem:[%s8] sm:$0xf]
        %v6362 = vld [vmem:[%s8 + $0x4] sm:$0xf]
        %v6363 = vld [vmem:[%s8 + $0x8] sm:$0xf]
        %v6364 = vld [vmem:[%s8 + $0xc] sm:$0xf]
        %v6365 = vld [vmem:[%s8 + $0x10] sm:$0xf]
        %v6366 = vld [vmem:[%s8 + $0x14] sm:$0xf]
        %v6367 = vld [vmem:[%s8 + $0x18] sm:$0xf]
        %v6368 = vld [vmem:[%s8 + $0x1c] sm:$0xf]
        %v6369 = vld [vmem:[%s8 + $0x20] sm:$0xf]
        %v6370 = vld [vmem:[%s8 + $0x24] sm:$0xf]
        %v6371 = vld [vmem:[%s8 + $0x28] sm:$0xf]
        %v6372 = vld [vmem:[%s8 + $0x2c] sm:$0xf]
        %v6373 = vld [vmem:[%s8 + $0x30] sm:$0xf]
        %v6374 = vld [vmem:[%s8 + $0x34] sm:$0xf]
        %v6375 = vld [vmem:[%s8 + $0x38] sm:$0xf]
        %v6376 = vld [vmem:[%s8 + $0x3c] sm:$0xf]
        %v6377 = vld [vmem:[%s9] sm:$0x1]
        %v6394 = vunpack.c.l.b16 %v6361
        %v6395 = vunpack.c.l.b16 %v6362
        %v6396 = vunpack.c.l.b16 %v6363
        %v6397 = vunpack.c.l.b16 %v6364
        %v6398 = vunpack.c.l.b16 %v6365
        %v6399 = vunpack.c.l.b16 %v6366
        %v6400 = vunpack.c.l.b16 %v6367
        %v6401 = vunpack.c.l.b16 %v6368
        %v6402 = vunpack.c.l.b16 %v6369
        %v6403 = vunpack.c.l.b16 %v6370
        %v6404 = vunpack.c.l.b16 %v6371
        %v6405 = vunpack.c.l.b16 %v6372
        %v6406 = vunpack.c.l.b16 %v6373
        %v6407 = vunpack.c.l.b16 %v6374
        %v6408 = vunpack.c.l.b16 %v6375
        %v6409 = vunpack.c.l.b16 %v6376
        %v6410 = vpack.c.b16 %v6395, %v6394
        %v6411 = vpack.c.b16 %v6397, %v6396
        %v6412 = vpack.c.b16 %v6399, %v6398
        %v6413 = vpack.c.b16 %v6401, %v6400
        %v6414 = vpack.c.b16 %v6403, %v6402
        %v6415 = vpack.c.b16 %v6405, %v6404
        %v6416 = vpack.c.b16 %v6407, %v6406
        %v6417 = vpack.c.b16 %v6409, %v6408
        %6426 = vmatprep.subr.bf16.mxu0 0
        %6427 = vmatpush1.bf16.msra.mxu0 %v6410
        %6428 = vmatprep.subr.bf16.mxu0 0
        %6429 = vmatpush1.bf16.msra.mxu0 %v6411
        %6430 = vmatprep.subr.bf16.mxu0 0
        %6431 = vmatpush1.bf16.msra.mxu0 %v6412
        %6432 = vmatprep.subr.bf16.mxu0 0
        %6433 = vmatpush1.bf16.msra.mxu0 %v6413
        %6434 = vmatprep.subr.bf16.mxu0 0
        %6435 = vmatpush1.bf16.msra.mxu0 %v6414
        %6436 = vmatprep.subr.bf16.mxu0 0
        %6437 = vmatpush1.bf16.msra.mxu0 %v6415
        %6438 = vmatprep.subr.bf16.mxu0 0
        %6439 = vmatpush1.bf16.msra.mxu0 %v6416
        %6440 = vmatprep.subr.bf16.mxu0 0
        %6441 = vmatpush1.bf16.msra.mxu0 %v6417
        %6442 = vmatprep.subr.bf16.mxu0 0
        %6443 = vmatpush1.bf16.msra.mxu0 0
        %6444 = vmatprep.subr.bf16.mxu0 0
        %6445 = vmatpush1.bf16.msra.mxu0 0
        %6446 = vmatprep.subr.bf16.mxu0 0
        %6447 = vmatpush1.bf16.msra.mxu0 0
        %6448 = vmatprep.subr.bf16.mxu0 0
        %6449 = vmatpush1.bf16.msra.mxu0 0
        %6450 = vmatprep.subr.bf16.mxu0 0
        %6451 = vmatpush1.bf16.msra.mxu0 0
        %6452 = vmatprep.subr.bf16.mxu0 0
        %6453 = vmatpush1.bf16.msra.mxu0 0
        %6454 = vmatprep.subr.bf16.mxu0 0
        %6455 = vmatpush1.bf16.msra.mxu0 0
        %6456 = vmatprep.subr.bf16.mxu0 0
        %6457 = vmatpush1.bf16.msra.mxu0 0
        %6458 = vmatprep.mubr.bf16.mxu0 0
        %6459 = vmatmul.mubr.bf16.gmra.mrb[0].mxu0 %v6360
        %v6460 = vpop.f32.mrb[0].mxu0
        %v6461 = vadd.f32 %v6377, %v6460
        %v6462 = vpop.f32.mrb[0].mxu0
        %v6463 = vpop.f32.mrb[0].mxu0
        %v6464 = vpop.f32.mrb[0].mxu0
        %6465 = vdwg.mxu0
        %vm6466 = vcmask 122880
        %6467 = vst.msk [vmem:[%s351] sm:$0x1] %vm6466, %v6461
        %s6468 = sand.u32 %s247, 1
        %s6469 = scalar_lea.sflag [#allocation3], %s6468
        %s6470 = sand.u32 %s247, 1
        %s6471 = scalar_lea.vmem [#allocation2], %s6470
        // Predicated region
        $region61: #{handwritten_math_cnn_forward.1} parent=59 // pred_check
          %p6472 = pneg %p257
        $region62: #{handwritten_math_cnn_forward.1} parent=59 // pred_check_branch
          %6474 = sbr.rel (%p6472) target = $region64
        $region63: #{handwritten_math_cnn_forward.1} parent=59 // pred_region
          %s6476 = ssub.s32 16, 16
          %6477 = vsyncadd %s6469, %s6476
          %s6478 = smul.addr %s24, 16
          %s6479 = scalar_lea.hbm %s10, %s6478
          %s6481 = sshll.u32 %s6471, 4
          %s6482 = int_to_ptr.vmem [resolvable:$true] %s6481
          %6484 = dma.vmem_to_hbm [thread:$0]  %s6482, 16, %s6479, %s6469
        $region64: #{handwritten_math_cnn_forward.1} parent=59 // pred_fallthru
          _
      $region60: #{handwritten_math_cnn_forward.1} parent=5 // pred_fallthru
        _
      %p6485 = scmp.le.s32.totalorder 2, %s19
      // Predicated region
      $region65: #{handwritten_math_cnn_forward.1} parent=5 // pred_check
        %p6486 = pneg %p6485
      $region66: #{handwritten_math_cnn_forward.1} parent=5 // pred_check_branch
        %6488 = sbr.rel (%p6486) target = $region68
      $region67: #{handwritten_math_cnn_forward.1} parent=5 // pred_region
        %s6489 = ssub.s32 %s19, 2
        // Predicated region
        $region69: #{handwritten_math_cnn_forward.1} parent=67 // pred_check
          %p6490 = pneg %p263
        $region70: #{handwritten_math_cnn_forward.1} parent=67 // pred_check_branch
          %6492 = sbr.rel (%p6490) target = $region72
        $region71: #{handwritten_math_cnn_forward.1} parent=67 // pred_region
          %s6493 = sand.u32 %s248, 1
          %s6494 = scalar_lea.sflag [#allocation3], %s6493
          %s6495 = sand.u32 %s248, 1
          %s6496 = scalar_lea.vmem [#allocation2], %s6495
          %6497 = dma.done %s6494, 16
        $region72: #{handwritten_math_cnn_forward.1} parent=67 // pred_fallthru
          _
      $region68: #{handwritten_math_cnn_forward.1} parent=5 // pred_fallthru
        _
    $region6: #{handwritten_math_cnn_forward.1} parent=1 // loop_footer
      %s23 = sadd.s32 1, %s19
    $region7: #{handwritten_math_cnn_forward.1} parent=1 // loop_footer_branch
      %18 = sbr.rel target = $region3
    $region8: #{handwritten_math_cnn_forward.1} parent=1 // loop_exit
      _
    %6498 = vsyncpa [#allocation3], 1
    %s6499 = scalar_lea.sflag [#allocation3], 1
    %6500 = vsyncpa %s6499, 1

</llo_original>
